<compile_context>
chip_gen: v6e
topology: v6e:2x2x1
jax: 0.10.0
libtpu: 0.0.40
codegen_flags: <defaults>
</compile_context>

<pallas_src>
import math
import functools

import jax
import jax.numpy as jnp
from jax import lax
from jax.experimental import pallas as pl
from jax.experimental.pallas import tpu as pltpu


_VMEM_LIMIT = 64 * 1024 * 1024   # v5e/v6e have 128 MiB physical, v7x 64 MiB
_LAYER_LN_EPS = 1e-5             # torch nn.LayerNorm default (DecoderLayer norms)
_AFTER_LN_EPS = 1e-12            # after_norm eps per the reference module


# ----------------------------------------------------------------------------
# Linear kernel: [LN] -> x @ W + b -> [ReLU] -> [+ residual]
# ----------------------------------------------------------------------------
def _linear_kernel(*refs, activation, fuse_ln, fuse_residual, eps):
    idx = 0
    x_ref = refs[idx]; idx += 1          # (tile_m, K)  f32 or bf16
    w_ref = refs[idx]; idx += 1          # (K, tile_n)  bf16 (pre-transposed)
    b_ref = refs[idx]; idx += 1          # (1, tile_n)  f32
    if fuse_ln:
        g_ref = refs[idx]; idx += 1      # (1, K) f32
        be_ref = refs[idx]; idx += 1     # (1, K) f32
    if fuse_residual:
        r_ref = refs[idx]; idx += 1      # (tile_m, tile_n) f32
    o_ref = refs[idx]

    if fuse_ln:
        # LayerNorm statistics in f32, then cast to bf16 for the MXU.
        x = x_ref[...].astype(jnp.float32)
        mean = jnp.mean(x, axis=-1, keepdims=True)
        xc = x - mean
        var = jnp.mean(xc * xc, axis=-1, keepdims=True)
        x = xc * lax.rsqrt(var + eps) * g_ref[...] + be_ref[...]
        x = x.astype(jnp.bfloat16)
        # TODO(synk): LN is recomputed per N-tile; hoist for huge-vocab layers
        #             if the bundle ever shows VALU/EUP saturation.
    else:
        x = x_ref[...].astype(jnp.bfloat16)

    # bf16 x bf16 -> f32 accumulation on the MXU; weight already (K, N).
    y = jnp.dot(x, w_ref[...], preferred_element_type=jnp.float32)
    y = y + b_ref[...].astype(jnp.float32)
    if activation == "relu":
        y = jnp.maximum(y, 0.0)
    if fuse_residual:
        y = y + r_ref[...].astype(jnp.float32)
    o_ref[...] = y.astype(o_ref.dtype)


def linear_pallas(x2d, w, b, *, activation=None, residual=None,
                  ln_gamma=None, ln_beta=None, ln_eps=_LAYER_LN_EPS,
                  out_dtype=None, tile_m_target=256, tile_n_target=512):
    """y = [LN(x2d)] @ w + b (+ relu) (+ residual);  w is (in, out) bf16."""
    M, K = x2d.shape
    K2, N = w.shape
    assert K == K2
    out_dtype = out_dtype or x2d.dtype

    # Row tiles 8/16-aligned, column tiles in 256 multiples (v6e/v7x MXU).
    tile_m = M if M <= tile_m_target else (tile_m_target // 32) * 32
    tile_n = N if N <= tile_n_target else (tile_n_target // 256) * 256
    gm, gn = pl.cdiv(M, tile_m), pl.cdiv(N, tile_n)

    # The operand indexed by the OUTER grid axis is streamed from HBM exactly
    # once; the inner-axis operand is restreamed.  Put the bigger one outside
    # (vocab projection: N >> M -> stream the (K, vocab) weight once).
    n_major = N >= M
    if n_major:
        grid = (gn, gm)
        x_map = lambda j, i: (i, 0)
        w_map = lambda j, i: (0, j)
        b_map = lambda j, i: (0, j)
        o_map = lambda j, i: (i, j)
        c_map = lambda j, i: (0, 0)
    else:
        grid = (gm, gn)
        x_map = lambda i, j: (i, 0)
        w_map = lambda i, j: (0, j)
        b_map = lambda i, j: (0, j)
        o_map = lambda i, j: (i, j)
        c_map = lambda i, j: (0, 0)

    fuse_ln = ln_gamma is not None
    fuse_res = residual is not None

    in_specs = [
        pl.BlockSpec((tile_m, K), x_map),
        pl.BlockSpec((K, tile_n), w_map),
        pl.BlockSpec((1, tile_n), b_map),
    ]
    args = [x2d, w, b.reshape(1, N)]
    if fuse_ln:
        in_specs += [pl.BlockSpec((1, K), c_map), pl.BlockSpec((1, K), c_map)]
        args += [ln_gamma.reshape(1, K), ln_beta.reshape(1, K)]
    if fuse_res:
        in_specs += [pl.BlockSpec((tile_m, tile_n), o_map)]
        args += [residual]

    kernel = functools.partial(_linear_kernel, activation=activation,
                               fuse_ln=fuse_ln, fuse_residual=fuse_res,
                               eps=ln_eps)
    return pl.pallas_call(
        kernel,
        out_shape=jax.ShapeDtypeStruct((M, N), out_dtype),
        grid=grid,
        in_specs=in_specs,
        out_specs=pl.BlockSpec((tile_m, tile_n), o_map),
        compiler_params=pltpu.CompilerParams(
            dimension_semantics=("parallel", "parallel"),
            vmem_limit_bytes=_VMEM_LIMIT),
    )(*args)


# ----------------------------------------------------------------------------
# Attention kernels (head split/merge + mask construction done in-kernel)
# ----------------------------------------------------------------------------
def _mha_core(q, k, v, bias, row_ok, H, dk, out_dtype):
    """q:(T,H*dk) k,v:(S,H*dk) bf16; bias:(Tm,S) additive f32 (0 / -1e30);
    row_ok:(Tm,1) f32 zeroing fully-masked query rows.  Returns (T, H*dk)."""
    outs = []
    for h in range(H):
        qh = q[:, h * dk:(h + 1) * dk]
        kh = k[:, h * dk:(h + 1) * dk]
        vh = v[:, h * dk:(h + 1) * dk]
        # scores (T,S); 1/sqrt(dk) already folded into the Q projection.
        s = lax.dot_general(qh, kh, (((1,), (1,)), ((), ())),
                            preferred_element_type=jnp.float32)
        s = s + bias
        s = s - jnp.max(s, axis=-1, keepdims=True)
        e = jnp.exp(s)
        denom = jnp.sum(e, axis=-1, keepdims=True)
        p = e * pl.reciprocal(denom, approx=True)       # EUP slot, ~free
        oh = jnp.dot(p.astype(vh.dtype), vh, preferred_element_type=jnp.float32)
        outs.append(oh * row_ok)                        # torch: masked rows -> 0
    return jnp.concatenate(outs, axis=-1).astype(out_dtype)


def _self_attn_kernel(lens_ref, qkv_ref, o_ref, *, H, dk):
    D = H * dk
    T = o_ref.shape[1]
    b = pl.program_id(0)
    length = lens_ref[b]                                # scalar from SMEM

    x = qkv_ref[0]                                      # (T, 3D) bf16
    q, k, v = x[:, :D], x[:, D:2 * D], x[:, 2 * D:]

    # tgt mask built in-kernel: valid iff (kpos < len_b) & (kpos <= qpos)
    qpos = lax.broadcasted_iota(jnp.int32, (T, T), 0)
    kpos = lax.broadcasted_iota(jnp.int32, (T, T), 1)
    valid = (kpos < length) & (kpos <= qpos)
    bias = jnp.where(valid, 0.0, -1e30)
    row_ok = jnp.where(
        jnp.sum(valid.astype(jnp.float32), axis=-1, keepdims=True) > 0.0,
        1.0, 0.0)
    o_ref[0] = _mha_core(q, k, v, bias, row_ok, H, dk, o_ref.dtype)


def self_attention_pallas(qkv3, lens, H, out_dtype):
    """qkv3: (B, T, 3D) fused QKV slab; lens: (B,) int32 (scalar prefetch)."""
    B, T, D3 = qkv3.shape
    D = D3 // 3
    dk = D // H
    return pl.pallas_call(
        functools.partial(_self_attn_kernel, H=H, dk=dk),
        out_shape=jax.ShapeDtypeStruct((B, T, D), out_dtype),
        grid_spec=pltpu.PrefetchScalarGridSpec(
            num_scalar_prefetch=1,
            grid=(B,),
            in_specs=[pl.BlockSpec((1, T, D3), lambda b, lens_ref: (b, 0, 0))],
            out_specs=pl.BlockSpec((1, T, D), lambda b, lens_ref: (b, 0, 0))),
        compiler_params=pltpu.CompilerParams(
            dimension_semantics=("parallel",),
            vmem_limit_bytes=_VMEM_LIMIT),
    )(lens, qkv3)


def _cross_attn_kernel(q_ref, kv_ref, m_ref, o_ref, *, H, dk):
    D = H * dk
    q = q_ref[0]                                        # (T, D) bf16
    kv = kv_ref[0]                                      # (S, 2D) bf16
    k, v = kv[:, :D], kv[:, D:]
    m = m_ref[0]                                        # (1, S) int32
    valid = m > 0
    bias = jnp.where(valid, 0.0, -1e30)                 # (1, S) additive bias
    row_ok = jnp.where(
        jnp.sum(valid.astype(jnp.float32), axis=-1, keepdims=True) > 0.0,
        1.0, 0.0)                                       # (1, 1)
    o_ref[0] = _mha_core(q, k, v, bias, row_ok, H, dk, o_ref.dtype)


def cross_attention_pallas(q3, kv3, mem_mask_i, H, out_dtype):
    """q3: (B,T,D); kv3: (B,S,2D) fused KV slab; mem_mask_i: (B,1,S) int32."""
    B, T, D = q3.shape
    S = kv3.shape[1]
    dk = D // H
    return pl.pallas_call(
        functools.partial(_cross_attn_kernel, H=H, dk=dk),
        out_shape=jax.ShapeDtypeStruct((B, T, D), out_dtype),
        grid=(B,),
        in_specs=[
            pl.BlockSpec((1, T, D), lambda b: (b, 0, 0)),
            pl.BlockSpec((1, S, 2 * D), lambda b: (b, 0, 0)),
            pl.BlockSpec((1, 1, S), lambda b: (b, 0, 0)),
        ],
        out_specs=pl.BlockSpec((1, T, D), lambda b: (b, 0, 0)),
        compiler_params=pltpu.CompilerParams(
            dimension_semantics=("parallel",),
            vmem_limit_bytes=_VMEM_LIMIT),
    )(q3, kv3, mem_mask_i)


# ----------------------------------------------------------------------------
# Model glue (embedding, pos-enc) in plain JAX
# ----------------------------------------------------------------------------
def positional_encoding_table(T, D):
    pos = jnp.arange(T, dtype=jnp.float32)[:, None]
    div = jnp.exp(jnp.arange(0, D, 2, dtype=jnp.float32) * -(math.log(10000.0) / D))
    pe = jnp.zeros((T, D), jnp.float32)
    pe = pe.at[:, 0::2].set(jnp.sin(pos * div))
    pe = pe.at[:, 1::2].set(jnp.cos(pos * div))
    return pe


def decoder_layer(x2d, lens, mem2d, mem_mask_i, p, B, T, S, D, H):
    bf = jnp.bfloat16

    # --- self-attention: norm1 fused into the single QKV projection ---
    qkv = linear_pallas(x2d, p["sa_wqkv"], p["sa_bqkv"],
                        ln_gamma=p["n1_g"], ln_beta=p["n1_b"],
                        ln_eps=_LAYER_LN_EPS, out_dtype=bf)
    attn = self_attention_pallas(qkv.reshape(B, T, 3 * D), lens, H, bf)
    x2d = linear_pallas(attn.reshape(B * T, D), p["sa_wo"], p["sa_bo"],
                        residual=x2d, out_dtype=jnp.float32)

    # --- cross-attention: norm2 fused into Q projection; fused KV on memory ---
    qc = linear_pallas(x2d, p["ca_wq"], p["ca_bq"],
                       ln_gamma=p["n2_g"], ln_beta=p["n2_b"],
                       ln_eps=_LAYER_LN_EPS, out_dtype=bf)
    kvc = linear_pallas(mem2d, p["ca_wkv"], p["ca_bkv"], out_dtype=bf)
    attn = cross_attention_pallas(qc.reshape(B, T, D), kvc.reshape(B, S, 2 * D),
                                  mem_mask_i, H, bf)
    x2d = linear_pallas(attn.reshape(B * T, D), p["ca_wo"], p["ca_bo"],
                        residual=x2d, out_dtype=jnp.float32)

    # --- FFN: norm3 + ReLU fused into w1, residual fused into w2 ---
    h = linear_pallas(x2d, p["ffn_w1"], p["ffn_b1"], activation="relu",
                      ln_gamma=p["n3_g"], ln_beta=p["n3_b"],
                      ln_eps=_LAYER_LN_EPS, out_dtype=bf)
    x2d = linear_pallas(h, p["ffn_w2"], p["ffn_b2"], residual=x2d,
                        out_dtype=jnp.float32)
    return x2d


def transformer_decoder_forward(params, memory, memory_mask, ys_in_pad,
                                ys_in_lens, heads):
    B, T = ys_in_pad.shape
    S = memory.shape[1]
    D = params["embed"].shape[1]

    lens = ys_in_lens.astype(jnp.int32)
    mem_mask_i = memory_mask.astype(jnp.int32).reshape(B, 1, S)  # tiny; no f32 mask

    # embedding + positional encoding (x * sqrt(D) + pe); dropout = identity
    x = jnp.take(params["embed"], ys_in_pad, axis=0)
    x = x * math.sqrt(D) + positional_encoding_table(T, D)[None]
    x2d = x.reshape(B * T, D).astype(jnp.float32)
    mem2d = memory.reshape(B * S, D).astype(jnp.float32)

    for layer_p in params["layers"]:
        x2d = decoder_layer(x2d, lens, mem2d, mem_mask_i, layer_p,
                            B, T, S, D, heads)

    # after_norm (eps=1e-12 per the spec) fused into the vocab output layer;
    # its (K, vocab) weight is streamed from HBM exactly once (n_major order).
    logits = linear_pallas(x2d, params["out_w"], params["out_b"],
                           ln_gamma=params["after_g"], ln_beta=params["after_b"],
                           ln_eps=_AFTER_LN_EPS, out_dtype=jnp.float32)

    # olens = tgt_mask.sum(dim=1) in closed form (no (B,T,T) mask materialized):
    # olens[b, k] = (T - k) if k < len_b else 0
    kpos = jnp.arange(T, dtype=jnp.int32)
    olens = jnp.where(kpos[None, :] < lens[:, None], T - kpos[None, :], 0)
    return logits.reshape(B, T, -1), olens


def bidecoder_forward(params, memory, memory_mask, ys_in_pad, ys_in_lens,
                      r_ys_in_pad, reverse_weight=0.0, *, heads):
    l_x, olens = transformer_decoder_forward(
        params["left"], memory, memory_mask, ys_in_pad, ys_in_lens, heads)
    r_x = jnp.array(0.0, jnp.float32)
    if params.get("right") is not None:
        r_x, olens = transformer_decoder_forward(
            params["right"], memory, memory_mask, r_ys_in_pad, ys_in_lens, heads)
    return l_x, olens, r_x


# ----------------------------------------------------------------------------
# Deterministic parameter construction.  All matmul weights are stored
# pre-transposed to (in, out) and cast to bf16 once, offline; QKV / KV are
# fused once; 1/sqrt(dk) is folded into the Q projections.  (When porting real
# torch weights: transpose nn.Linear.weight and scale W_q, b_q by 1/sqrt(dk).)
# ----------------------------------------------------------------------------
def _rand_linear(key, in_dim, out_dim):
    k1, k2 = jax.random.split(key)
    w = jax.random.normal(k1, (in_dim, out_dim), jnp.float32) * 0.05
    b = jax.random.normal(k2, (out_dim,), jnp.float32) * 0.01
    return w, b


def _make_layer(key, D, ff, H):
    dk = D // H
    scale = 1.0 / math.sqrt(dk)
    ks = jax.random.split(key, 10)
    wq, bq = _rand_linear(ks[0], D, D)
    wk, bk = _rand_linear(ks[1], D, D)
    wv, bv = _rand_linear(ks[2], D, D)
    wo, bo = _rand_linear(ks[3], D, D)
    cwq, cbq = _rand_linear(ks[4], D, D)
    cwk, cbk = _rand_linear(ks[5], D, D)
    cwv, cbv = _rand_linear(ks[6], D, D)
    cwo, cbo = _rand_linear(ks[7], D, D)
    w1, b1 = _rand_linear(ks[8], D, ff)
    w2, b2 = _rand_linear(ks[9], ff, D)
    ones, zeros = jnp.ones((D,), jnp.float32), jnp.zeros((D,), jnp.float32)
    bf = jnp.bfloat16
    return dict(
        n1_g=ones, n1_b=zeros, n2_g=ones, n2_b=zeros, n3_g=ones, n3_b=zeros,
        sa_wqkv=jnp.concatenate([wq * scale, wk, wv], axis=1).astype(bf),
        sa_bqkv=jnp.concatenate([bq * scale, bk, bv], axis=0),
        sa_wo=wo.astype(bf), sa_bo=bo,
        ca_wq=(cwq * scale).astype(bf), ca_bq=cbq * scale,
        ca_wkv=jnp.concatenate([cwk, cwv], axis=1).astype(bf),
        ca_bkv=jnp.concatenate([cbk, cbv], axis=0),
        ca_wo=cwo.astype(bf), ca_bo=cbo,
        ffn_w1=w1.astype(bf), ffn_b1=b1,
        ffn_w2=w2.astype(bf), ffn_b2=b2,
    )


def make_transformer_decoder_params(key, vocab, D, ff, heads, num_blocks):
    ks = jax.random.split(key, num_blocks + 2)
    embed = jax.random.normal(ks[0], (vocab, D), jnp.float32) * 0.1
    out_w, out_b = _rand_linear(ks[1], D, vocab)
    layers = [_make_layer(ks[2 + i], D, ff, heads) for i in range(num_blocks)]
    return dict(embed=embed, layers=layers,
                after_g=jnp.ones((D,), jnp.float32),
                after_b=jnp.zeros((D,), jnp.float32),
                out_w=out_w.astype(jnp.bfloat16), out_b=out_b)


def make_bidecoder_params(key, vocab, D, ff, heads, num_blocks, r_num_blocks):
    kl, kr = jax.random.split(key)
    params = {"left": make_transformer_decoder_params(kl, vocab, D, ff, heads,
                                                      num_blocks),
              "right": None}
    if r_num_blocks > 0:
        params["right"] = make_transformer_decoder_params(kr, vocab, D, ff,
                                                          heads, r_num_blocks)
    return params


# ----------------------------------------------------------------------------
# Main
# ----------------------------------------------------------------------------
if __name__ == "__main__":
    VOCAB = 50
    D = 32          # encoder_output_size / attention_dim
    HEADS = 4
    FF = 64         # linear_units
    NUM_BLOCKS = 2
    R_NUM_BLOCKS = 1
    B, T_OUT, T_IN = 2, 8, 16

    key = jax.random.PRNGKey(0)
    k_param, k_mem, k_tok, k_rtok = jax.random.split(key, 4)

    params = make_bidecoder_params(k_param, VOCAB, D, FF, HEADS,
                                   NUM_BLOCKS, R_NUM_BLOCKS)

    memory = jax.random.normal(k_mem, (B, T_IN, D), jnp.float32)
    mem_lens = jnp.array([T_IN, 12], jnp.int32)
    memory_mask = (jnp.arange(T_IN)[None, :] < mem_lens[:, None])[:, None, :]  # (B,1,T_IN)
    ys_in_pad = jax.random.randint(k_tok, (B, T_OUT), 0, VOCAB, jnp.int32)
    r_ys_in_pad = jax.random.randint(k_rtok, (B, T_OUT), 0, VOCAB, jnp.int32)
    ys_in_lens = jnp.array([T_OUT, 6], jnp.int32)

    fwd = jax.jit(functools.partial(bidecoder_forward, heads=HEADS))
    l_x, olens, r_x = fwd(params, memory, memory_mask, ys_in_pad, ys_in_lens,
                          r_ys_in_pad, 0.3)
    jax.block_until_ready((l_x, olens, r_x))

    assert l_x.shape == (B, T_OUT, VOCAB)
    assert r_x.shape == (B, T_OUT, VOCAB)
    assert olens.shape == (B, T_OUT)
    assert bool(jnp.isfinite(l_x).all()) and bool(jnp.isfinite(r_x).all())
    print("KERNEL_OK")
</pallas_src>

<mosaic_0001>
module attributes {stable_mosaic.version = 11 : i64} {
  func.func @_linear_kernel(%arg0: i32, %arg1: i32, %arg2: memref<16x32xf32, #tpu.memory_space<vmem>>, %arg3: memref<32x96xbf16, #tpu.memory_space<vmem>>, %arg4: memref<1x96xf32, #tpu.memory_space<vmem>>, %arg5: memref<1x32xf32, #tpu.memory_space<vmem>>, %arg6: memref<1x32xf32, #tpu.memory_space<vmem>>, %arg7: memref<16x96xbf16, #tpu.memory_space<vmem>>) attributes {dimension_semantics = [#tpu.dimension_semantics<parallel>, #tpu.dimension_semantics<parallel>], iteration_bounds = array<i64: 1, 1>, scalar_prefetch = 0 : i64, scratch_operands = 0 : i64, tpu.core_type = #tpu.core_type<tc>, window_params = [{transform_indices = @transform_0, window_bounds = array<i64: 16, 32>}, {transform_indices = @transform_1, window_bounds = array<i64: 32, 96>}, {transform_indices = @transform_2, window_bounds = array<i64: 1, 96>}, {pipeline_mode = #tpu.pipeline_mode<synchronous>, transform_indices = @transform_3, window_bounds = array<i64: 1, 32>}, {pipeline_mode = #tpu.pipeline_mode<synchronous>, transform_indices = @transform_4, window_bounds = array<i64: 1, 32>}, {transform_indices = @transform_5, window_bounds = array<i64: 16, 96>}]} {
    %c0 = arith.constant 0 : index
    %c0_0 = arith.constant 0 : index
    %0 = vector.load %arg2[%c0, %c0_0] : memref<16x32xf32, #tpu.memory_space<vmem>>, vector<16x32xf32>
    %cst = arith.constant dense<0.000000e+00> : vector<16xf32>
    %1 = vector.multi_reduction <add>, %0, %cst [1] : vector<16x32xf32> to vector<16xf32>
    %2 = vector.shape_cast %1 : vector<16xf32> to vector<16x1xf32>
    %cst_1 = arith.constant 3.200000e+01 : f32
    %3 = vector.broadcast %cst_1 : f32 to vector<16x1xf32>
    %4 = arith.divf %2, %3 : vector<16x1xf32>
    %5 = vector.broadcast %4 : vector<16x1xf32> to vector<16x32xf32>
    %6 = arith.subf %0, %5 : vector<16x32xf32>
    %7 = arith.mulf %6, %6 : vector<16x32xf32>
    %cst_2 = arith.constant dense<0.000000e+00> : vector<16xf32>
    %8 = vector.multi_reduction <add>, %7, %cst_2 [1] : vector<16x32xf32> to vector<16xf32>
    %9 = vector.shape_cast %8 : vector<16xf32> to vector<16x1xf32>
    %cst_3 = arith.constant 3.200000e+01 : f32
    %10 = vector.broadcast %cst_3 : f32 to vector<16x1xf32>
    %11 = arith.divf %9, %10 : vector<16x1xf32>
    %cst_4 = arith.constant 9.99999974E-6 : f32
    %12 = vector.broadcast %cst_4 : f32 to vector<16x1xf32>
    %13 = arith.addf %11, %12 : vector<16x1xf32>
    %14 = math.rsqrt %13 : vector<16x1xf32>
    %15 = vector.broadcast %14 : vector<16x1xf32> to vector<16x32xf32>
    %16 = arith.mulf %6, %15 : vector<16x32xf32>
    %c0_5 = arith.constant 0 : index
    %c0_6 = arith.constant 0 : index
    %17 = vector.load %arg5[%c0_5, %c0_6] : memref<1x32xf32, #tpu.memory_space<vmem>>, vector<1x32xf32>
    %18 = vector.broadcast %17 : vector<1x32xf32> to vector<16x32xf32>
    %19 = arith.mulf %16, %18 : vector<16x32xf32>
    %c0_7 = arith.constant 0 : index
    %c0_8 = arith.constant 0 : index
    %20 = vector.load %arg6[%c0_7, %c0_8] : memref<1x32xf32, #tpu.memory_space<vmem>>, vector<1x32xf32>
    %21 = vector.broadcast %20 : vector<1x32xf32> to vector<16x32xf32>
    %22 = arith.addf %19, %21 : vector<16x32xf32>
    %23 = arith.truncf %22 : vector<16x32xf32> to vector<16x32xbf16>
    %c0_9 = arith.constant 0 : index
    %c0_10 = arith.constant 0 : index
    %24 = vector.load %arg3[%c0_9, %c0_10] : memref<32x96xbf16, #tpu.memory_space<vmem>>, vector<32x96xbf16>
    %cst_11 = arith.constant dense<0.000000e+00> : vector<16x96xf32>
    %25 = tpu.matmul %23, %24, %cst_11 {dimension_numbers = #tpu.dot_dimension_numbers<[1], [0], [0], [1], [0, 0, 1, 1], [], []>} : vector<16x32xbf16>, vector<32x96xbf16>, vector<16x96xf32> -> vector<16x96xf32>
    %c0_12 = arith.constant 0 : index
    %c0_13 = arith.constant 0 : index
    %26 = vector.load %arg4[%c0_12, %c0_13] : memref<1x96xf32, #tpu.memory_space<vmem>>, vector<1x96xf32>
    %27 = vector.broadcast %26 : vector<1x96xf32> to vector<16x96xf32>
    %28 = arith.addf %25, %27 : vector<16x96xf32>
    %29 = arith.truncf %28 : vector<16x96xf32> to vector<16x96xbf16>
    %c0_14 = arith.constant 0 : index
    %c0_15 = arith.constant 0 : index
    %30 = vector.load %arg7[%c0_14, %c0_15] : memref<16x96xbf16, #tpu.memory_space<vmem>>, vector<16x96xbf16>
    tpu.vector_store %arg7[%c0_14, %c0_15], %29 {strides = array<i32>} : memref<16x96xbf16, #tpu.memory_space<vmem>>, vector<16x96xbf16>,
    return
  }
  func.func @transform_0(%arg0: i32, %arg1: i32) -> (i32, i32) {
    %c0_i32 = arith.constant 0 : i32
    %c0_i32_0 = arith.constant 0 : i32
    return %arg1, %c0_i32 : i32, i32
  }
  func.func @transform_1(%arg0: i32, %arg1: i32) -> (i32, i32) {
    %c0_i32 = arith.constant 0 : i32
    %c0_i32_0 = arith.constant 0 : i32
    return %c0_i32, %arg0 : i32, i32
  }
  func.func @transform_2(%arg0: i32, %arg1: i32) -> (i32, i32) {
    %c0_i32 = arith.constant 0 : i32
    %c0_i32_0 = arith.constant 0 : i32
    return %c0_i32, %arg0 : i32, i32
  }
  func.func @transform_3(%arg0: i32, %arg1: i32) -> (i32, i32) {
    %c0_i32 = arith.constant 0 : i32
    %c0_i32_0 = arith.constant 0 : i32
    %c0_i32_1 = arith.constant 0 : i32
    return %c0_i32, %c0_i32_0 : i32, i32
  }
  func.func @transform_4(%arg0: i32, %arg1: i32) -> (i32, i32) {
    %c0_i32 = arith.constant 0 : i32
    %c0_i32_0 = arith.constant 0 : i32
    %c0_i32_1 = arith.constant 0 : i32
    return %c0_i32, %c0_i32_0 : i32, i32
  }
  func.func @transform_5(%arg0: i32, %arg1: i32) -> (i32, i32) {
    %c0_i32 = arith.constant 0 : i32
    return %arg1, %arg0 : i32, i32
  }
}

module attributes {stable_mosaic.version = 11 : i64} {
  func.func @_linear_kernel(%arg0: i32, %arg1: i32, %arg2: memref<16x32xbf16, #tpu.memory_space<vmem>>, %arg3: memref<32x32xbf16, #tpu.memory_space<vmem>>, %arg4: memref<1x32xf32, #tpu.memory_space<vmem>>, %arg5: memref<16x32xf32, #tpu.memory_space<vmem>>, %arg6: memref<16x32xf32, #tpu.memory_space<vmem>>) attributes {dimension_semantics = [#tpu.dimension_semantics<parallel>, #tpu.dimension_semantics<parallel>], iteration_bounds = array<i64: 1, 1>, scalar_prefetch = 0 : i64, scratch_operands = 0 : i64, tpu.core_type = #tpu.core_type<tc>, window_params = [{transform_indices = @transform_0, window_bounds = array<i64: 16, 32>}, {transform_indices = @transform_1, window_bounds = array<i64: 32, 32>}, {transform_indices = @transform_2, window_bounds = array<i64: 1, 32>}, {transform_indices = @transform_3, window_bounds = array<i64: 16, 32>}, {transform_indices = @transform_4, window_bounds = array<i64: 16, 32>}]} {
    %c0 = arith.constant 0 : index
    %c0_0 = arith.constant 0 : index
    %0 = vector.load %arg2[%c0, %c0_0] : memref<16x32xbf16, #tpu.memory_space<vmem>>, vector<16x32xbf16>
    %c0_1 = arith.constant 0 : index
    %c0_2 = arith.constant 0 : index
    %1 = vector.load %arg3[%c0_1, %c0_2] : memref<32x32xbf16, #tpu.memory_space<vmem>>, vector<32x32xbf16>
    %cst = arith.constant dense<0.000000e+00> : vector<16x32xf32>
    %2 = tpu.matmul %0, %1, %cst {dimension_numbers = #tpu.dot_dimension_numbers<[1], [0], [0], [1], [0, 0, 1, 1], [], []>} : vector<16x32xbf16>, vector<32x32xbf16>, vector<16x32xf32> -> vector<16x32xf32>
    %c0_3 = arith.constant 0 : index
    %c0_4 = arith.constant 0 : index
    %3 = vector.load %arg4[%c0_3, %c0_4] : memref<1x32xf32, #tpu.memory_space<vmem>>, vector<1x32xf32>
    %4 = vector.broadcast %3 : vector<1x32xf32> to vector<16x32xf32>
    %5 = arith.addf %2, %4 : vector<16x32xf32>
    %c0_5 = arith.constant 0 : index
    %c0_6 = arith.constant 0 : index
    %6 = vector.load %arg5[%c0_5, %c0_6] : memref<16x32xf32, #tpu.memory_space<vmem>>, vector<16x32xf32>
    %7 = arith.addf %5, %6 : vector<16x32xf32>
    %c0_7 = arith.constant 0 : index
    %c0_8 = arith.constant 0 : index
    %8 = vector.load %arg6[%c0_7, %c0_8] : memref<16x32xf32, #tpu.memory_space<vmem>>, vector<16x32xf32>
    tpu.vector_store %arg6[%c0_7, %c0_8], %7 {strides = array<i32>} : memref<16x32xf32, #tpu.memory_space<vmem>>, vector<16x32xf32>,
    return
  }
  func.func @transform_0(%arg0: i32, %arg1: i32) -> (i32, i32) {
    %c0_i32 = arith.constant 0 : i32
    %c0_i32_0 = arith.constant 0 : i32
    return %arg1, %c0_i32 : i32, i32
  }
  func.func @transform_1(%arg0: i32, %arg1: i32) -> (i32, i32) {
    %c0_i32 = arith.constant 0 : i32
    %c0_i32_0 = arith.constant 0 : i32
    return %c0_i32, %arg0 : i32, i32
  }
  func.func @transform_2(%arg0: i32, %arg1: i32) -> (i32, i32) {
    %c0_i32 = arith.constant 0 : i32
    %c0_i32_0 = arith.constant 0 : i32
    return %c0_i32, %arg0 : i32, i32
  }
  func.func @transform_3(%arg0: i32, %arg1: i32) -> (i32, i32) {
    %c0_i32 = arith.constant 0 : i32
    return %arg1, %arg0 : i32, i32
  }
  func.func @transform_4(%arg0: i32, %arg1: i32) -> (i32, i32) {
    %c0_i32 = arith.constant 0 : i32
    return %arg1, %arg0 : i32, i32
  }
}

module attributes {stable_mosaic.version = 11 : i64} {
  func.func @_self_attn_kernel(%arg0: i32, %arg1: memref<2xi32, #tpu.memory_space<smem>>, %arg2: memref<1x8x96xbf16, #tpu.memory_space<vmem>>, %arg3: memref<1x8x32xbf16, #tpu.memory_space<vmem>>) attributes {dimension_semantics = [#tpu.dimension_semantics<parallel>], iteration_bounds = array<i64: 2>, scalar_prefetch = 1 : i64, scratch_operands = 0 : i64, tpu.core_type = #tpu.core_type<tc>, window_params = [{transform_indices = @transform_0, window_bounds = array<i64: 1, 8, 96>}, {transform_indices = @transform_1, window_bounds = array<i64: 1, 8, 32>}]} {
    %0 = arith.index_cast %arg0 : i32 to index
    %1 = memref.load %arg1[%0] : memref<2xi32, #tpu.memory_space<smem>>
    %c0 = arith.constant 0 : index
    %c0_0 = arith.constant 0 : index
    %c0_1 = arith.constant 0 : index
    %2 = vector.load %arg2[%c0, %c0_0, %c0_1] : memref<1x8x96xbf16, #tpu.memory_space<vmem>>, vector<1x8x96xbf16>
    %3 = vector.shape_cast %2 : vector<1x8x96xbf16> to vector<8x96xbf16>
    %4 = vector.extract_strided_slice %3 {offsets = [0, 0], sizes = [8, 32], strides = [1, 1]} : vector<8x96xbf16> to vector<8x32xbf16>
    %5 = vector.extract_strided_slice %3 {offsets = [0, 32], sizes = [8, 32], strides = [1, 1]} : vector<8x96xbf16> to vector<8x32xbf16>
    %6 = vector.extract_strided_slice %3 {offsets = [0, 64], sizes = [8, 32], strides = [1, 1]} : vector<8x96xbf16> to vector<8x32xbf16>
    %7 = tpu.iota {dimensions = array<i32: 0>} : vector<8x8xi32>
    %8 = tpu.iota {dimensions = array<i32: 1>} : vector<8x8xi32>
    %9 = vector.broadcast %1 : i32 to vector<8x8xi32>
    %10 = arith.cmpi slt, %8, %9 : vector<8x8xi32>
    %11 = arith.cmpi sle, %8, %7 : vector<8x8xi32>
    %12 = arith.andi %10, %11 : vector<8x8xi1>
    %cst = arith.constant 0.000000e+00 : f32
    %cst_2 = arith.constant -1.000000e+30 : f32
    %13 = vector.broadcast %cst : f32 to vector<8x8xf32>
    %14 = vector.broadcast %cst_2 : f32 to vector<8x8xf32>
    %15 = arith.select %12, %13, %14 : vector<8x8xi1>, vector<8x8xf32>
    %16 = arith.extui %12 : vector<8x8xi1> to vector<8x8xi32>
    %17 = arith.sitofp %16 : vector<8x8xi32> to vector<8x8xf32>
    %cst_3 = arith.constant dense<0.000000e+00> : vector<8xf32>
    %18 = vector.multi_reduction <add>, %17, %cst_3 [1] : vector<8x8xf32> to vector<8xf32>
    %19 = vector.shape_cast %18 : vector<8xf32> to vector<8x1xf32>
    %cst_4 = arith.constant 0.000000e+00 : f32
    %20 = vector.broadcast %cst_4 : f32 to vector<8x1xf32>
    %21 = arith.cmpf ogt, %19, %20 : vector<8x1xf32>
    %cst_5 = arith.constant 1.000000e+00 : f32
    %cst_6 = arith.constant 0.000000e+00 : f32
    %22 = vector.broadcast %cst_5 : f32 to vector<8x1xf32>
    %23 = vector.broadcast %cst_6 : f32 to vector<8x1xf32>
    %24 = arith.select %21, %22, %23 : vector<8x1xi1>, vector<8x1xf32>
    %25 = vector.extract_strided_slice %4 {offsets = [0, 0], sizes = [8, 8], strides = [1, 1]} : vector<8x32xbf16> to vector<8x8xbf16>
    %26 = vector.extract_strided_slice %5 {offsets = [0, 0], sizes = [8, 8], strides = [1, 1]} : vector<8x32xbf16> to vector<8x8xbf16>
    %27 = vector.extract_strided_slice %6 {offsets = [0, 0], sizes = [8, 8], strides = [1, 1]} : vector<8x32xbf16> to vector<8x8xbf16>
    %cst_7 = arith.constant dense<0.000000e+00> : vector<8x8xf32>
    %28 = tpu.matmul %25, %26, %cst_7 {dimension_numbers = #tpu.dot_dimension_numbers<[1], [1], [0], [0], [0, 0, 1, 0], [], []>} : vector<8x8xbf16>, vector<8x8xbf16>, vector<8x8xf32> -> vector<8x8xf32>
    %29 = arith.addf %28, %15 : vector<8x8xf32>
    %cst_8 = arith.constant dense<0xFF800000> : vector<8xf32>
    %30 = vector.multi_reduction <maximumf>, %29, %cst_8 [1] : vector<8x8xf32> to vector<8xf32>
    %31 = vector.shape_cast %30 : vector<8xf32> to vector<8x1xf32>
    %32 = vector.broadcast %31 : vector<8x1xf32> to vector<8x8xf32>
    %33 = arith.subf %29, %32 : vector<8x8xf32>
    %34 = math.exp %33 : vector<8x8xf32>
    %cst_9 = arith.constant dense<0.000000e+00> : vector<8xf32>
    %35 = vector.multi_reduction <add>, %34, %cst_9 [1] : vector<8x8xf32> to vector<8xf32>
    %36 = vector.shape_cast %35 : vector<8xf32> to vector<8x1xf32>
    %37 = tpu.reciprocal %36 {approx = true} : vector<8x1xf32> -> vector<8x1xf32>
    %38 = vector.broadcast %37 : vector<8x1xf32> to vector<8x8xf32>
    %39 = arith.mulf %34, %38 : vector<8x8xf32>
    %40 = arith.truncf %39 : vector<8x8xf32> to vector<8x8xbf16>
    %cst_10 = arith.constant dense<0.000000e+00> : vector<8x8xf32>
    %41 = tpu.matmul %40, %27, %cst_10 {dimension_numbers = #tpu.dot_dimension_numbers<[1], [0], [0], [1], [0, 0, 1, 1], [], []>} : vector<8x8xbf16>, vector<8x8xbf16>, vector<8x8xf32> -> vector<8x8xf32>
    %42 = vector.broadcast %24 : vector<8x1xf32> to vector<8x8xf32>
    %43 = arith.mulf %41, %42 : vector<8x8xf32>
    %44 = vector.extract_strided_slice %4 {offsets = [0, 8], sizes = [8, 8], strides = [1, 1]} : vector<8x32xbf16> to vector<8x8xbf16>
    %45 = vector.extract_strided_slice %5 {offsets = [0, 8], sizes = [8, 8], strides = [1, 1]} : vector<8x32xbf16> to vector<8x8xbf16>
    %46 = vector.extract_strided_slice %6 {offsets = [0, 8], sizes = [8, 8], strides = [1, 1]} : vector<8x32xbf16> to vector<8x8xbf16>
    %cst_11 = arith.constant dense<0.000000e+00> : vector<8x8xf32>
    %47 = tpu.matmul %44, %45, %cst_11 {dimension_numbers = #tpu.dot_dimension_numbers<[1], [1], [0], [0], [0, 0, 1, 0], [], []>} : vector<8x8xbf16>, vector<8x8xbf16>, vector<8x8xf32> -> vector<8x8xf32>
    %48 = arith.addf %47, %15 : vector<8x8xf32>
    %cst_12 = arith.constant dense<0xFF800000> : vector<8xf32>
    %49 = vector.multi_reduction <maximumf>, %48, %cst_12 [1] : vector<8x8xf32> to vector<8xf32>
    %50 = vector.shape_cast %49 : vector<8xf32> to vector<8x1xf32>
    %51 = vector.broadcast %50 : vector<8x1xf32> to vector<8x8xf32>
    %52 = arith.subf %48, %51 : vector<8x8xf32>
    %53 = math.exp %52 : vector<8x8xf32>
    %cst_13 = arith.constant dense<0.000000e+00> : vector<8xf32>
    %54 = vector.multi_reduction <add>, %53, %cst_13 [1] : vector<8x8xf32> to vector<8xf32>
    %55 = vector.shape_cast %54 : vector<8xf32> to vector<8x1xf32>
    %56 = tpu.reciprocal %55 {approx = true} : vector<8x1xf32> -> vector<8x1xf32>
    %57 = vector.broadcast %56 : vector<8x1xf32> to vector<8x8xf32>
    %58 = arith.mulf %53, %57 : vector<8x8xf32>
    %59 = arith.truncf %58 : vector<8x8xf32> to vector<8x8xbf16>
    %cst_14 = arith.constant dense<0.000000e+00> : vector<8x8xf32>
    %60 = tpu.matmul %59, %46, %cst_14 {dimension_numbers = #tpu.dot_dimension_numbers<[1], [0], [0], [1], [0, 0, 1, 1], [], []>} : vector<8x8xbf16>, vector<8x8xbf16>, vector<8x8xf32> -> vector<8x8xf32>
    %61 = vector.broadcast %24 : vector<8x1xf32> to vector<8x8xf32>
    %62 = arith.mulf %60, %61 : vector<8x8xf32>
    %63 = vector.extract_strided_slice %4 {offsets = [0, 16], sizes = [8, 8], strides = [1, 1]} : vector<8x32xbf16> to vector<8x8xbf16>
    %64 = vector.extract_strided_slice %5 {offsets = [0, 16], sizes = [8, 8], strides = [1, 1]} : vector<8x32xbf16> to vector<8x8xbf16>
    %65 = vector.extract_strided_slice %6 {offsets = [0, 16], sizes = [8, 8], strides = [1, 1]} : vector<8x32xbf16> to vector<8x8xbf16>
    %cst_15 = arith.constant dense<0.000000e+00> : vector<8x8xf32>
    %66 = tpu.matmul %63, %64, %cst_15 {dimension_numbers = #tpu.dot_dimension_numbers<[1], [1], [0], [0], [0, 0, 1, 0], [], []>} : vector<8x8xbf16>, vector<8x8xbf16>, vector<8x8xf32> -> vector<8x8xf32>
    %67 = arith.addf %66, %15 : vector<8x8xf32>
    %cst_16 = arith.constant dense<0xFF800000> : vector<8xf32>
    %68 = vector.multi_reduction <maximumf>, %67, %cst_16 [1] : vector<8x8xf32> to vector<8xf32>
    %69 = vector.shape_cast %68 : vector<8xf32> to vector<8x1xf32>
    %70 = vector.broadcast %69 : vector<8x1xf32> to vector<8x8xf32>
    %71 = arith.subf %67, %70 : vector<8x8xf32>
    %72 = math.exp %71 : vector<8x8xf32>
    %cst_17 = arith.constant dense<0.000000e+00> : vector<8xf32>
    %73 = vector.multi_reduction <add>, %72, %cst_17 [1] : vector<8x8xf32> to vector<8xf32>
    %74 = vector.shape_cast %73 : vector<8xf32> to vector<8x1xf32>
    %75 = tpu.reciprocal %74 {approx = true} : vector<8x1xf32> -> vector<8x1xf32>
    %76 = vector.broadcast %75 : vector<8x1xf32> to vector<8x8xf32>
    %77 = arith.mulf %72, %76 : vector<8x8xf32>
    %78 = arith.truncf %77 : vector<8x8xf32> to vector<8x8xbf16>
    %cst_18 = arith.constant dense<0.000000e+00> : vector<8x8xf32>
    %79 = tpu.matmul %78, %65, %cst_18 {dimension_numbers = #tpu.dot_dimension_numbers<[1], [0], [0], [1], [0, 0, 1, 1], [], []>} : vector<8x8xbf16>, vector<8x8xbf16>, vector<8x8xf32> -> vector<8x8xf32>
    %80 = vector.broadcast %24 : vector<8x1xf32> to vector<8x8xf32>
    %81 = arith.mulf %79, %80 : vector<8x8xf32>
    %82 = vector.extract_strided_slice %4 {offsets = [0, 24], sizes = [8, 8], strides = [1, 1]} : vector<8x32xbf16> to vector<8x8xbf16>
    %83 = vector.extract_strided_slice %5 {offsets = [0, 24], sizes = [8, 8], strides = [1, 1]} : vector<8x32xbf16> to vector<8x8xbf16>
    %84 = vector.extract_strided_slice %6 {offsets = [0, 24], sizes = [8, 8], strides = [1, 1]} : vector<8x32xbf16> to vector<8x8xbf16>
    %cst_19 = arith.constant dense<0.000000e+00> : vector<8x8xf32>
    %85 = tpu.matmul %82, %83, %cst_19 {dimension_numbers = #tpu.dot_dimension_numbers<[1], [1], [0], [0], [0, 0, 1, 0], [], []>} : vector<8x8xbf16>, vector<8x8xbf16>, vector<8x8xf32> -> vector<8x8xf32>
    %86 = arith.addf %85, %15 : vector<8x8xf32>
    %cst_20 = arith.constant dense<0xFF800000> : vector<8xf32>
    %87 = vector.multi_reduction <maximumf>, %86, %cst_20 [1] : vector<8x8xf32> to vector<8xf32>
    %88 = vector.shape_cast %87 : vector<8xf32> to vector<8x1xf32>
    %89 = vector.broadcast %88 : vector<8x1xf32> to vector<8x8xf32>
    %90 = arith.subf %86, %89 : vector<8x8xf32>
    %91 = math.exp %90 : vector<8x8xf32>
    %cst_21 = arith.constant dense<0.000000e+00> : vector<8xf32>
    %92 = vector.multi_reduction <add>, %91, %cst_21 [1] : vector<8x8xf32> to vector<8xf32>
    %93 = vector.shape_cast %92 : vector<8xf32> to vector<8x1xf32>
    %94 = tpu.reciprocal %93 {approx = true} : vector<8x1xf32> -> vector<8x1xf32>
    %95 = vector.broadcast %94 : vector<8x1xf32> to vector<8x8xf32>
    %96 = arith.mulf %91, %95 : vector<8x8xf32>
    %97 = arith.truncf %96 : vector<8x8xf32> to vector<8x8xbf16>
    %cst_22 = arith.constant dense<0.000000e+00> : vector<8x8xf32>
    %98 = tpu.matmul %97, %84, %cst_22 {dimension_numbers = #tpu.dot_dimension_numbers<[1], [0], [0], [1], [0, 0, 1, 1], [], []>} : vector<8x8xbf16>, vector<8x8xbf16>, vector<8x8xf32> -> vector<8x8xf32>
    %99 = vector.broadcast %24 : vector<8x1xf32> to vector<8x8xf32>
    %100 = arith.mulf %98, %99 : vector<8x8xf32>
    %101 = tpu.concatenate %43, %62, %81, %100 in 1 : vector<8x8xf32>, vector<8x8xf32>, vector<8x8xf32>, vector<8x8xf32> -> vector<8x32xf32>
    %102 = arith.truncf %101 : vector<8x32xf32> to vector<8x32xbf16>
    %c0_23 = arith.constant 0 : index
    %c0_24 = arith.constant 0 : index
    %c0_25 = arith.constant 0 : index
    %103 = vector.load %arg3[%c0_23, %c0_24, %c0_25] : memref<1x8x32xbf16, #tpu.memory_space<vmem>>, vector<1x8x32xbf16>
    %104 = vector.shape_cast %103 : vector<1x8x32xbf16> to vector<8x32xbf16>
    %105 = vector.shape_cast %102 : vector<8x32xbf16> to vector<1x8x32xbf16>
    tpu.vector_store %arg3[%c0_23, %c0_24, %c0_25], %105 {strides = array<i32>} : memref<1x8x32xbf16, #tpu.memory_space<vmem>>, vector<1x8x32xbf16>,
    return
  }
  func.func @transform_0(%arg0: i32, %arg1: memref<2xi32, #tpu.memory_space<smem>>) -> (i32, i32, i32) {
    %c0_i32 = arith.constant 0 : i32
    %c0_i32_0 = arith.constant 0 : i32
    %c0_i32_1 = arith.constant 0 : i32
    return %arg0, %c0_i32, %c0_i32_0 : i32, i32, i32
  }
  func.func @transform_1(%arg0: i32, %arg1: memref<2xi32, #tpu.memory_space<smem>>) -> (i32, i32, i32) {
    %c0_i32 = arith.constant 0 : i32
    %c0_i32_0 = arith.constant 0 : i32
    %c0_i32_1 = arith.constant 0 : i32
    return %arg0, %c0_i32, %c0_i32_0 : i32, i32, i32
  }
}

module attributes {stable_mosaic.version = 11 : i64} {
  func.func @_linear_kernel(%arg0: i32, %arg1: i32, %arg2: memref<16x32xf32, #tpu.memory_space<vmem>>, %arg3: memref<32x32xbf16, #tpu.memory_space<vmem>>, %arg4: memref<1x32xf32, #tpu.memory_space<vmem>>, %arg5: memref<1x32xf32, #tpu.memory_space<vmem>>, %arg6: memref<1x32xf32, #tpu.memory_space<vmem>>, %arg7: memref<16x32xbf16, #tpu.memory_space<vmem>>) attributes {dimension_semantics = [#tpu.dimension_semantics<parallel>, #tpu.dimension_semantics<parallel>], iteration_bounds = array<i64: 1, 1>, scalar_prefetch = 0 : i64, scratch_operands = 0 : i64, tpu.core_type = #tpu.core_type<tc>, window_params = [{transform_indices = @transform_0, window_bounds = array<i64: 16, 32>}, {transform_indices = @transform_1, window_bounds = array<i64: 32, 32>}, {transform_indices = @transform_2, window_bounds = array<i64: 1, 32>}, {pipeline_mode = #tpu.pipeline_mode<synchronous>, transform_indices = @transform_3, window_bounds = array<i64: 1, 32>}, {pipeline_mode = #tpu.pipeline_mode<synchronous>, transform_indices = @transform_4, window_bounds = array<i64: 1, 32>}, {transform_indices = @transform_5, window_bounds = array<i64: 16, 32>}]} {
    %c0 = arith.constant 0 : index
    %c0_0 = arith.constant 0 : index
    %0 = vector.load %arg2[%c0, %c0_0] : memref<16x32xf32, #tpu.memory_space<vmem>>, vector<16x32xf32>
    %cst = arith.constant dense<0.000000e+00> : vector<16xf32>
    %1 = vector.multi_reduction <add>, %0, %cst [1] : vector<16x32xf32> to vector<16xf32>
    %2 = vector.shape_cast %1 : vector<16xf32> to vector<16x1xf32>
    %cst_1 = arith.constant 3.200000e+01 : f32
    %3 = vector.broadcast %cst_1 : f32 to vector<16x1xf32>
    %4 = arith.divf %2, %3 : vector<16x1xf32>
    %5 = vector.broadcast %4 : vector<16x1xf32> to vector<16x32xf32>
    %6 = arith.subf %0, %5 : vector<16x32xf32>
    %7 = arith.mulf %6, %6 : vector<16x32xf32>
    %cst_2 = arith.constant dense<0.000000e+00> : vector<16xf32>
    %8 = vector.multi_reduction <add>, %7, %cst_2 [1] : vector<16x32xf32> to vector<16xf32>
    %9 = vector.shape_cast %8 : vector<16xf32> to vector<16x1xf32>
    %cst_3 = arith.constant 3.200000e+01 : f32
    %10 = vector.broadcast %cst_3 : f32 to vector<16x1xf32>
    %11 = arith.divf %9, %10 : vector<16x1xf32>
    %cst_4 = arith.constant 9.99999974E-6 : f32
    %12 = vector.broadcast %cst_4 : f32 to vector<16x1xf32>
    %13 = arith.addf %11, %12 : vector<16x1xf32>
    %14 = math.rsqrt %13 : vector<16x1xf32>
    %15 = vector.broadcast %14 : vector<16x1xf32> to vector<16x32xf32>
    %16 = arith.mulf %6, %15 : vector<16x32xf32>
    %c0_5 = arith.constant 0 : index
    %c0_6 = arith.constant 0 : index
    %17 = vector.load %arg5[%c0_5, %c0_6] : memref<1x32xf32, #tpu.memory_space<vmem>>, vector<1x32xf32>
    %18 = vector.broadcast %17 : vector<1x32xf32> to vector<16x32xf32>
    %19 = arith.mulf %16, %18 : vector<16x32xf32>
    %c0_7 = arith.constant 0 : index
    %c0_8 = arith.constant 0 : index
    %20 = vector.load %arg6[%c0_7, %c0_8] : memref<1x32xf32, #tpu.memory_space<vmem>>, vector<1x32xf32>
    %21 = vector.broadcast %20 : vector<1x32xf32> to vector<16x32xf32>
    %22 = arith.addf %19, %21 : vector<16x32xf32>
    %23 = arith.truncf %22 : vector<16x32xf32> to vector<16x32xbf16>
    %c0_9 = arith.constant 0 : index
    %c0_10 = arith.constant 0 : index
    %24 = vector.load %arg3[%c0_9, %c0_10] : memref<32x32xbf16, #tpu.memory_space<vmem>>, vector<32x32xbf16>
    %cst_11 = arith.constant dense<0.000000e+00> : vector<16x32xf32>
    %25 = tpu.matmul %23, %24, %cst_11 {dimension_numbers = #tpu.dot_dimension_numbers<[1], [0], [0], [1], [0, 0, 1, 1], [], []>} : vector<16x32xbf16>, vector<32x32xbf16>, vector<16x32xf32> -> vector<16x32xf32>
    %c0_12 = arith.constant 0 : index
    %c0_13 = arith.constant 0 : index
    %26 = vector.load %arg4[%c0_12, %c0_13] : memref<1x32xf32, #tpu.memory_space<vmem>>, vector<1x32xf32>
    %27 = vector.broadcast %26 : vector<1x32xf32> to vector<16x32xf32>
    %28 = arith.addf %25, %27 : vector<16x32xf32>
    %29 = arith.truncf %28 : vector<16x32xf32> to vector<16x32xbf16>
    %c0_14 = arith.constant 0 : index
    %c0_15 = arith.constant 0 : index
    %30 = vector.load %arg7[%c0_14, %c0_15] : memref<16x32xbf16, #tpu.memory_space<vmem>>, vector<16x32xbf16>
    tpu.vector_store %arg7[%c0_14, %c0_15], %29 {strides = array<i32>} : memref<16x32xbf16, #tpu.memory_space<vmem>>, vector<16x32xbf16>,
    return
  }
  func.func @transform_0(%arg0: i32, %arg1: i32) -> (i32, i32) {
    %c0_i32 = arith.constant 0 : i32
    %c0_i32_0 = arith.constant 0 : i32
    return %arg1, %c0_i32 : i32, i32
  }
  func.func @transform_1(%arg0: i32, %arg1: i32) -> (i32, i32) {
    %c0_i32 = arith.constant 0 : i32
    %c0_i32_0 = arith.constant 0 : i32
    return %c0_i32, %arg0 : i32, i32
  }
  func.func @transform_2(%arg0: i32, %arg1: i32) -> (i32, i32) {
    %c0_i32 = arith.constant 0 : i32
    %c0_i32_0 = arith.constant 0 : i32
    return %c0_i32, %arg0 : i32, i32
  }
  func.func @transform_3(%arg0: i32, %arg1: i32) -> (i32, i32) {
    %c0_i32 = arith.constant 0 : i32
    %c0_i32_0 = arith.constant 0 : i32
    %c0_i32_1 = arith.constant 0 : i32
    return %c0_i32, %c0_i32_0 : i32, i32
  }
  func.func @transform_4(%arg0: i32, %arg1: i32) -> (i32, i32) {
    %c0_i32 = arith.constant 0 : i32
    %c0_i32_0 = arith.constant 0 : i32
    %c0_i32_1 = arith.constant 0 : i32
    return %c0_i32, %c0_i32_0 : i32, i32
  }
  func.func @transform_5(%arg0: i32, %arg1: i32) -> (i32, i32) {
    %c0_i32 = arith.constant 0 : i32
    return %arg1, %arg0 : i32, i32
  }
}

module attributes {stable_mosaic.version = 11 : i64} {
  func.func @_linear_kernel(%arg0: i32, %arg1: i32, %arg2: memref<32x32xf32, #tpu.memory_space<vmem>>, %arg3: memref<32x64xbf16, #tpu.memory_space<vmem>>, %arg4: memref<1x64xf32, #tpu.memory_space<vmem>>, %arg5: memref<32x64xbf16, #tpu.memory_space<vmem>>) attributes {dimension_semantics = [#tpu.dimension_semantics<parallel>, #tpu.dimension_semantics<parallel>], iteration_bounds = array<i64: 1, 1>, scalar_prefetch = 0 : i64, scratch_operands = 0 : i64, tpu.core_type = #tpu.core_type<tc>, window_params = [{transform_indices = @transform_0, window_bounds = array<i64: 32, 32>}, {transform_indices = @transform_1, window_bounds = array<i64: 32, 64>}, {transform_indices = @transform_2, window_bounds = array<i64: 1, 64>}, {transform_indices = @transform_3, window_bounds = array<i64: 32, 64>}]} {
    %c0 = arith.constant 0 : index
    %c0_0 = arith.constant 0 : index
    %0 = vector.load %arg2[%c0, %c0_0] : memref<32x32xf32, #tpu.memory_space<vmem>>, vector<32x32xf32>
    %1 = arith.truncf %0 : vector<32x32xf32> to vector<32x32xbf16>
    %c0_1 = arith.constant 0 : index
    %c0_2 = arith.constant 0 : index
    %2 = vector.load %arg3[%c0_1, %c0_2] : memref<32x64xbf16, #tpu.memory_space<vmem>>, vector<32x64xbf16>
    %cst = arith.constant dense<0.000000e+00> : vector<32x64xf32>
    %3 = tpu.matmul %1, %2, %cst {dimension_numbers = #tpu.dot_dimension_numbers<[1], [0], [0], [1], [0, 0, 1, 1], [], []>} : vector<32x32xbf16>, vector<32x64xbf16>, vector<32x64xf32> -> vector<32x64xf32>
    %c0_3 = arith.constant 0 : index
    %c0_4 = arith.constant 0 : index
    %4 = vector.load %arg4[%c0_3, %c0_4] : memref<1x64xf32, #tpu.memory_space<vmem>>, vector<1x64xf32>
    %5 = vector.broadcast %4 : vector<1x64xf32> to vector<32x64xf32>
    %6 = arith.addf %3, %5 : vector<32x64xf32>
    %7 = arith.truncf %6 : vector<32x64xf32> to vector<32x64xbf16>
    %c0_5 = arith.constant 0 : index
    %c0_6 = arith.constant 0 : index
    %8 = vector.load %arg5[%c0_5, %c0_6] : memref<32x64xbf16, #tpu.memory_space<vmem>>, vector<32x64xbf16>
    tpu.vector_store %arg5[%c0_5, %c0_6], %7 {strides = array<i32>} : memref<32x64xbf16, #tpu.memory_space<vmem>>, vector<32x64xbf16>,
    return
  }
  func.func @transform_0(%arg0: i32, %arg1: i32) -> (i32, i32) {
    %c0_i32 = arith.constant 0 : i32
    %c0_i32_0 = arith.constant 0 : i32
    return %arg1, %c0_i32 : i32, i32
  }
  func.func @transform_1(%arg0: i32, %arg1: i32) -> (i32, i32) {
    %c0_i32 = arith.constant 0 : i32
    %c0_i32_0 = arith.constant 0 : i32
    return %c0_i32, %arg0 : i32, i32
  }
  func.func @transform_2(%arg0: i32, %arg1: i32) -> (i32, i32) {
    %c0_i32 = arith.constant 0 : i32
    %c0_i32_0 = arith.constant 0 : i32
    return %c0_i32, %arg0 : i32, i32
  }
  func.func @transform_3(%arg0: i32, %arg1: i32) -> (i32, i32) {
    %c0_i32 = arith.constant 0 : i32
    return %arg1, %arg0 : i32, i32
  }
}

module attributes {stable_mosaic.version = 11 : i64} {
  func.func @_cross_attn_kernel(%arg0: i32, %arg1: memref<1x8x32xbf16, #tpu.memory_space<vmem>>, %arg2: memref<1x16x64xbf16, #tpu.memory_space<vmem>>, %arg3: memref<1x1x16xi32, #tpu.memory_space<vmem>>, %arg4: memref<1x8x32xbf16, #tpu.memory_space<vmem>>) attributes {dimension_semantics = [#tpu.dimension_semantics<parallel>], iteration_bounds = array<i64: 2>, scalar_prefetch = 0 : i64, scratch_operands = 0 : i64, tpu.core_type = #tpu.core_type<tc>, window_params = [{transform_indices = @transform_0, window_bounds = array<i64: 1, 8, 32>}, {transform_indices = @transform_1, window_bounds = array<i64: 1, 16, 64>}, {transform_indices = @transform_2, window_bounds = array<i64: 1, 1, 16>}, {transform_indices = @transform_3, window_bounds = array<i64: 1, 8, 32>}]} {
    %c0 = arith.constant 0 : index
    %c0_0 = arith.constant 0 : index
    %c0_1 = arith.constant 0 : index
    %0 = vector.load %arg1[%c0, %c0_0, %c0_1] : memref<1x8x32xbf16, #tpu.memory_space<vmem>>, vector<1x8x32xbf16>
    %1 = vector.shape_cast %0 : vector<1x8x32xbf16> to vector<8x32xbf16>
    %c0_2 = arith.constant 0 : index
    %c0_3 = arith.constant 0 : index
    %c0_4 = arith.constant 0 : index
    %2 = vector.load %arg2[%c0_2, %c0_3, %c0_4] : memref<1x16x64xbf16, #tpu.memory_space<vmem>>, vector<1x16x64xbf16>
    %3 = vector.shape_cast %2 : vector<1x16x64xbf16> to vector<16x64xbf16>
    %4 = vector.extract_strided_slice %3 {offsets = [0, 0], sizes = [16, 32], strides = [1, 1]} : vector<16x64xbf16> to vector<16x32xbf16>
    %5 = vector.extract_strided_slice %3 {offsets = [0, 32], sizes = [16, 32], strides = [1, 1]} : vector<16x64xbf16> to vector<16x32xbf16>
    %c0_5 = arith.constant 0 : index
    %c0_6 = arith.constant 0 : index
    %c0_7 = arith.constant 0 : index
    %6 = vector.load %arg3[%c0_5, %c0_6, %c0_7] : memref<1x1x16xi32, #tpu.memory_space<vmem>>, vector<1x1x16xi32>
    %7 = vector.shape_cast %6 : vector<1x1x16xi32> to vector<1x16xi32>
    %c0_i32 = arith.constant 0 : i32
    %8 = vector.broadcast %c0_i32 : i32 to vector<1x16xi32>
    %9 = arith.cmpi sgt, %7, %8 : vector<1x16xi32>
    %cst = arith.constant 0.000000e+00 : f32
    %cst_8 = arith.constant -1.000000e+30 : f32
    %10 = vector.broadcast %cst : f32 to vector<1x16xf32>
    %11 = vector.broadcast %cst_8 : f32 to vector<1x16xf32>
    %12 = arith.select %9, %10, %11 : vector<1x16xi1>, vector<1x16xf32>
    %13 = arith.extui %9 : vector<1x16xi1> to vector<1x16xi32>
    %14 = arith.sitofp %13 : vector<1x16xi32> to vector<1x16xf32>
    %cst_9 = arith.constant dense<0.000000e+00> : vector<1xf32>
    %15 = vector.multi_reduction <add>, %14, %cst_9 [1] : vector<1x16xf32> to vector<1xf32>
    %16 = vector.shape_cast %15 : vector<1xf32> to vector<1x1xf32>
    %cst_10 = arith.constant 0.000000e+00 : f32
    %17 = vector.broadcast %cst_10 : f32 to vector<1x1xf32>
    %18 = arith.cmpf ogt, %16, %17 : vector<1x1xf32>
    %cst_11 = arith.constant 1.000000e+00 : f32
    %cst_12 = arith.constant 0.000000e+00 : f32
    %19 = vector.broadcast %cst_11 : f32 to vector<1x1xf32>
    %20 = vector.broadcast %cst_12 : f32 to vector<1x1xf32>
    %21 = arith.select %18, %19, %20 : vector<1x1xi1>, vector<1x1xf32>
    %22 = vector.extract_strided_slice %1 {offsets = [0, 0], sizes = [8, 8], strides = [1, 1]} : vector<8x32xbf16> to vector<8x8xbf16>
    %23 = vector.extract_strided_slice %4 {offsets = [0, 0], sizes = [16, 8], strides = [1, 1]} : vector<16x32xbf16> to vector<16x8xbf16>
    %24 = vector.extract_strided_slice %5 {offsets = [0, 0], sizes = [16, 8], strides = [1, 1]} : vector<16x32xbf16> to vector<16x8xbf16>
    %cst_13 = arith.constant dense<0.000000e+00> : vector<8x16xf32>
    %25 = tpu.matmul %22, %23, %cst_13 {dimension_numbers = #tpu.dot_dimension_numbers<[1], [1], [0], [0], [0, 0, 1, 0], [], []>} : vector<8x8xbf16>, vector<16x8xbf16>, vector<8x16xf32> -> vector<8x16xf32>
    %26 = vector.broadcast %12 : vector<1x16xf32> to vector<8x16xf32>
    %27 = arith.addf %25, %26 : vector<8x16xf32>
    %cst_14 = arith.constant dense<0xFF800000> : vector<8xf32>
    %28 = vector.multi_reduction <maximumf>, %27, %cst_14 [1] : vector<8x16xf32> to vector<8xf32>
    %29 = vector.shape_cast %28 : vector<8xf32> to vector<8x1xf32>
    %30 = vector.broadcast %29 : vector<8x1xf32> to vector<8x16xf32>
    %31 = arith.subf %27, %30 : vector<8x16xf32>
    %32 = math.exp %31 : vector<8x16xf32>
    %cst_15 = arith.constant dense<0.000000e+00> : vector<8xf32>
    %33 = vector.multi_reduction <add>, %32, %cst_15 [1] : vector<8x16xf32> to vector<8xf32>
    %34 = vector.shape_cast %33 : vector<8xf32> to vector<8x1xf32>
    %35 = tpu.reciprocal %34 {approx = true} : vector<8x1xf32> -> vector<8x1xf32>
    %36 = vector.broadcast %35 : vector<8x1xf32> to vector<8x16xf32>
    %37 = arith.mulf %32, %36 : vector<8x16xf32>
    %38 = arith.truncf %37 : vector<8x16xf32> to vector<8x16xbf16>
    %cst_16 = arith.constant dense<0.000000e+00> : vector<8x8xf32>
    %39 = tpu.matmul %38, %24, %cst_16 {dimension_numbers = #tpu.dot_dimension_numbers<[1], [0], [0], [1], [0, 0, 1, 1], [], []>} : vector<8x16xbf16>, vector<16x8xbf16>, vector<8x8xf32> -> vector<8x8xf32>
    %40 = vector.broadcast %21 : vector<1x1xf32> to vector<8x8xf32>
    %41 = arith.mulf %39, %40 : vector<8x8xf32>
    %42 = vector.extract_strided_slice %1 {offsets = [0, 8], sizes = [8, 8], strides = [1, 1]} : vector<8x32xbf16> to vector<8x8xbf16>
    %43 = vector.extract_strided_slice %4 {offsets = [0, 8], sizes = [16, 8], strides = [1, 1]} : vector<16x32xbf16> to vector<16x8xbf16>
    %44 = vector.extract_strided_slice %5 {offsets = [0, 8], sizes = [16, 8], strides = [1, 1]} : vector<16x32xbf16> to vector<16x8xbf16>
    %cst_17 = arith.constant dense<0.000000e+00> : vector<8x16xf32>
    %45 = tpu.matmul %42, %43, %cst_17 {dimension_numbers = #tpu.dot_dimension_numbers<[1], [1], [0], [0], [0, 0, 1, 0], [], []>} : vector<8x8xbf16>, vector<16x8xbf16>, vector<8x16xf32> -> vector<8x16xf32>
    %46 = vector.broadcast %12 : vector<1x16xf32> to vector<8x16xf32>
    %47 = arith.addf %45, %46 : vector<8x16xf32>
    %cst_18 = arith.constant dense<0xFF800000> : vector<8xf32>
    %48 = vector.multi_reduction <maximumf>, %47, %cst_18 [1] : vector<8x16xf32> to vector<8xf32>
    %49 = vector.shape_cast %48 : vector<8xf32> to vector<8x1xf32>
    %50 = vector.broadcast %49 : vector<8x1xf32> to vector<8x16xf32>
    %51 = arith.subf %47, %50 : vector<8x16xf32>
    %52 = math.exp %51 : vector<8x16xf32>
    %cst_19 = arith.constant dense<0.000000e+00> : vector<8xf32>
    %53 = vector.multi_reduction <add>, %52, %cst_19 [1] : vector<8x16xf32> to vector<8xf32>
    %54 = vector.shape_cast %53 : vector<8xf32> to vector<8x1xf32>
    %55 = tpu.reciprocal %54 {approx = true} : vector<8x1xf32> -> vector<8x1xf32>
    %56 = vector.broadcast %55 : vector<8x1xf32> to vector<8x16xf32>
    %57 = arith.mulf %52, %56 : vector<8x16xf32>
    %58 = arith.truncf %57 : vector<8x16xf32> to vector<8x16xbf16>
    %cst_20 = arith.constant dense<0.000000e+00> : vector<8x8xf32>
    %59 = tpu.matmul %58, %44, %cst_20 {dimension_numbers = #tpu.dot_dimension_numbers<[1], [0], [0], [1], [0, 0, 1, 1], [], []>} : vector<8x16xbf16>, vector<16x8xbf16>, vector<8x8xf32> -> vector<8x8xf32>
    %60 = vector.broadcast %21 : vector<1x1xf32> to vector<8x8xf32>
    %61 = arith.mulf %59, %60 : vector<8x8xf32>
    %62 = vector.extract_strided_slice %1 {offsets = [0, 16], sizes = [8, 8], strides = [1, 1]} : vector<8x32xbf16> to vector<8x8xbf16>
    %63 = vector.extract_strided_slice %4 {offsets = [0, 16], sizes = [16, 8], strides = [1, 1]} : vector<16x32xbf16> to vector<16x8xbf16>
    %64 = vector.extract_strided_slice %5 {offsets = [0, 16], sizes = [16, 8], strides = [1, 1]} : vector<16x32xbf16> to vector<16x8xbf16>
    %cst_21 = arith.constant dense<0.000000e+00> : vector<8x16xf32>
    %65 = tpu.matmul %62, %63, %cst_21 {dimension_numbers = #tpu.dot_dimension_numbers<[1], [1], [0], [0], [0, 0, 1, 0], [], []>} : vector<8x8xbf16>, vector<16x8xbf16>, vector<8x16xf32> -> vector<8x16xf32>
    %66 = vector.broadcast %12 : vector<1x16xf32> to vector<8x16xf32>
    %67 = arith.addf %65, %66 : vector<8x16xf32>
    %cst_22 = arith.constant dense<0xFF800000> : vector<8xf32>
    %68 = vector.multi_reduction <maximumf>, %67, %cst_22 [1] : vector<8x16xf32> to vector<8xf32>
    %69 = vector.shape_cast %68 : vector<8xf32> to vector<8x1xf32>
    %70 = vector.broadcast %69 : vector<8x1xf32> to vector<8x16xf32>
    %71 = arith.subf %67, %70 : vector<8x16xf32>
    %72 = math.exp %71 : vector<8x16xf32>
    %cst_23 = arith.constant dense<0.000000e+00> : vector<8xf32>
    %73 = vector.multi_reduction <add>, %72, %cst_23 [1] : vector<8x16xf32> to vector<8xf32>
    %74 = vector.shape_cast %73 : vector<8xf32> to vector<8x1xf32>
    %75 = tpu.reciprocal %74 {approx = true} : vector<8x1xf32> -> vector<8x1xf32>
    %76 = vector.broadcast %75 : vector<8x1xf32> to vector<8x16xf32>
    %77 = arith.mulf %72, %76 : vector<8x16xf32>
    %78 = arith.truncf %77 : vector<8x16xf32> to vector<8x16xbf16>
    %cst_24 = arith.constant dense<0.000000e+00> : vector<8x8xf32>
    %79 = tpu.matmul %78, %64, %cst_24 {dimension_numbers = #tpu.dot_dimension_numbers<[1], [0], [0], [1], [0, 0, 1, 1], [], []>} : vector<8x16xbf16>, vector<16x8xbf16>, vector<8x8xf32> -> vector<8x8xf32>
    %80 = vector.broadcast %21 : vector<1x1xf32> to vector<8x8xf32>
    %81 = arith.mulf %79, %80 : vector<8x8xf32>
    %82 = vector.extract_strided_slice %1 {offsets = [0, 24], sizes = [8, 8], strides = [1, 1]} : vector<8x32xbf16> to vector<8x8xbf16>
    %83 = vector.extract_strided_slice %4 {offsets = [0, 24], sizes = [16, 8], strides = [1, 1]} : vector<16x32xbf16> to vector<16x8xbf16>
    %84 = vector.extract_strided_slice %5 {offsets = [0, 24], sizes = [16, 8], strides = [1, 1]} : vector<16x32xbf16> to vector<16x8xbf16>
    %cst_25 = arith.constant dense<0.000000e+00> : vector<8x16xf32>
    %85 = tpu.matmul %82, %83, %cst_25 {dimension_numbers = #tpu.dot_dimension_numbers<[1], [1], [0], [0], [0, 0, 1, 0], [], []>} : vector<8x8xbf16>, vector<16x8xbf16>, vector<8x16xf32> -> vector<8x16xf32>
    %86 = vector.broadcast %12 : vector<1x16xf32> to vector<8x16xf32>
    %87 = arith.addf %85, %86 : vector<8x16xf32>
    %cst_26 = arith.constant dense<0xFF800000> : vector<8xf32>
    %88 = vector.multi_reduction <maximumf>, %87, %cst_26 [1] : vector<8x16xf32> to vector<8xf32>
    %89 = vector.shape_cast %88 : vector<8xf32> to vector<8x1xf32>
    %90 = vector.broadcast %89 : vector<8x1xf32> to vector<8x16xf32>
    %91 = arith.subf %87, %90 : vector<8x16xf32>
    %92 = math.exp %91 : vector<8x16xf32>
    %cst_27 = arith.constant dense<0.000000e+00> : vector<8xf32>
    %93 = vector.multi_reduction <add>, %92, %cst_27 [1] : vector<8x16xf32> to vector<8xf32>
    %94 = vector.shape_cast %93 : vector<8xf32> to vector<8x1xf32>
    %95 = tpu.reciprocal %94 {approx = true} : vector<8x1xf32> -> vector<8x1xf32>
    %96 = vector.broadcast %95 : vector<8x1xf32> to vector<8x16xf32>
    %97 = arith.mulf %92, %96 : vector<8x16xf32>
    %98 = arith.truncf %97 : vector<8x16xf32> to vector<8x16xbf16>
    %cst_28 = arith.constant dense<0.000000e+00> : vector<8x8xf32>
    %99 = tpu.matmul %98, %84, %cst_28 {dimension_numbers = #tpu.dot_dimension_numbers<[1], [0], [0], [1], [0, 0, 1, 1], [], []>} : vector<8x16xbf16>, vector<16x8xbf16>, vector<8x8xf32> -> vector<8x8xf32>
    %100 = vector.broadcast %21 : vector<1x1xf32> to vector<8x8xf32>
    %101 = arith.mulf %99, %100 : vector<8x8xf32>
    %102 = tpu.concatenate %41, %61, %81, %101 in 1 : vector<8x8xf32>, vector<8x8xf32>, vector<8x8xf32>, vector<8x8xf32> -> vector<8x32xf32>
    %103 = arith.truncf %102 : vector<8x32xf32> to vector<8x32xbf16>
    %c0_29 = arith.constant 0 : index
    %c0_30 = arith.constant 0 : index
    %c0_31 = arith.constant 0 : index
    %104 = vector.load %arg4[%c0_29, %c0_30, %c0_31] : memref<1x8x32xbf16, #tpu.memory_space<vmem>>, vector<1x8x32xbf16>
    %105 = vector.shape_cast %104 : vector<1x8x32xbf16> to vector<8x32xbf16>
    %106 = vector.shape_cast %103 : vector<8x32xbf16> to vector<1x8x32xbf16>
    tpu.vector_store %arg4[%c0_29, %c0_30, %c0_31], %106 {strides = array<i32>} : memref<1x8x32xbf16, #tpu.memory_space<vmem>>, vector<1x8x32xbf16>,
    return
  }
  func.func @transform_0(%arg0: i32) -> (i32, i32, i32) {
    %c0_i32 = arith.constant 0 : i32
    %c0_i32_0 = arith.constant 0 : i32
    %c0_i32_1 = arith.constant 0 : i32
    return %arg0, %c0_i32, %c0_i32_0 : i32, i32, i32
  }
  func.func @transform_1(%arg0: i32) -> (i32, i32, i32) {
    %c0_i32 = arith.constant 0 : i32
    %c0_i32_0 = arith.constant 0 : i32
    %c0_i32_1 = arith.constant 0 : i32
    return %arg0, %c0_i32, %c0_i32_0 : i32, i32, i32
  }
  func.func @transform_2(%arg0: i32) -> (i32, i32, i32) {
    %c0_i32 = arith.constant 0 : i32
    %c0_i32_0 = arith.constant 0 : i32
    %c0_i32_1 = arith.constant 0 : i32
    return %arg0, %c0_i32, %c0_i32_0 : i32, i32, i32
  }
  func.func @transform_3(%arg0: i32) -> (i32, i32, i32) {
    %c0_i32 = arith.constant 0 : i32
    %c0_i32_0 = arith.constant 0 : i32
    %c0_i32_1 = arith.constant 0 : i32
    return %arg0, %c0_i32, %c0_i32_0 : i32, i32, i32
  }
}

module attributes {stable_mosaic.version = 11 : i64} {
  func.func @_linear_kernel(%arg0: i32, %arg1: i32, %arg2: memref<16x32xf32, #tpu.memory_space<vmem>>, %arg3: memref<32x64xbf16, #tpu.memory_space<vmem>>, %arg4: memref<1x64xf32, #tpu.memory_space<vmem>>, %arg5: memref<1x32xf32, #tpu.memory_space<vmem>>, %arg6: memref<1x32xf32, #tpu.memory_space<vmem>>, %arg7: memref<16x64xbf16, #tpu.memory_space<vmem>>) attributes {dimension_semantics = [#tpu.dimension_semantics<parallel>, #tpu.dimension_semantics<parallel>], iteration_bounds = array<i64: 1, 1>, scalar_prefetch = 0 : i64, scratch_operands = 0 : i64, tpu.core_type = #tpu.core_type<tc>, window_params = [{transform_indices = @transform_0, window_bounds = array<i64: 16, 32>}, {transform_indices = @transform_1, window_bounds = array<i64: 32, 64>}, {transform_indices = @transform_2, window_bounds = array<i64: 1, 64>}, {pipeline_mode = #tpu.pipeline_mode<synchronous>, transform_indices = @transform_3, window_bounds = array<i64: 1, 32>}, {pipeline_mode = #tpu.pipeline_mode<synchronous>, transform_indices = @transform_4, window_bounds = array<i64: 1, 32>}, {transform_indices = @transform_5, window_bounds = array<i64: 16, 64>}]} {
    %c0 = arith.constant 0 : index
    %c0_0 = arith.constant 0 : index
    %0 = vector.load %arg2[%c0, %c0_0] : memref<16x32xf32, #tpu.memory_space<vmem>>, vector<16x32xf32>
    %cst = arith.constant dense<0.000000e+00> : vector<16xf32>
    %1 = vector.multi_reduction <add>, %0, %cst [1] : vector<16x32xf32> to vector<16xf32>
    %2 = vector.shape_cast %1 : vector<16xf32> to vector<16x1xf32>
    %cst_1 = arith.constant 3.200000e+01 : f32
    %3 = vector.broadcast %cst_1 : f32 to vector<16x1xf32>
    %4 = arith.divf %2, %3 : vector<16x1xf32>
    %5 = vector.broadcast %4 : vector<16x1xf32> to vector<16x32xf32>
    %6 = arith.subf %0, %5 : vector<16x32xf32>
    %7 = arith.mulf %6, %6 : vector<16x32xf32>
    %cst_2 = arith.constant dense<0.000000e+00> : vector<16xf32>
    %8 = vector.multi_reduction <add>, %7, %cst_2 [1] : vector<16x32xf32> to vector<16xf32>
    %9 = vector.shape_cast %8 : vector<16xf32> to vector<16x1xf32>
    %cst_3 = arith.constant 3.200000e+01 : f32
    %10 = vector.broadcast %cst_3 : f32 to vector<16x1xf32>
    %11 = arith.divf %9, %10 : vector<16x1xf32>
    %cst_4 = arith.constant 9.99999974E-6 : f32
    %12 = vector.broadcast %cst_4 : f32 to vector<16x1xf32>
    %13 = arith.addf %11, %12 : vector<16x1xf32>
    %14 = math.rsqrt %13 : vector<16x1xf32>
    %15 = vector.broadcast %14 : vector<16x1xf32> to vector<16x32xf32>
    %16 = arith.mulf %6, %15 : vector<16x32xf32>
    %c0_5 = arith.constant 0 : index
    %c0_6 = arith.constant 0 : index
    %17 = vector.load %arg5[%c0_5, %c0_6] : memref<1x32xf32, #tpu.memory_space<vmem>>, vector<1x32xf32>
    %18 = vector.broadcast %17 : vector<1x32xf32> to vector<16x32xf32>
    %19 = arith.mulf %16, %18 : vector<16x32xf32>
    %c0_7 = arith.constant 0 : index
    %c0_8 = arith.constant 0 : index
    %20 = vector.load %arg6[%c0_7, %c0_8] : memref<1x32xf32, #tpu.memory_space<vmem>>, vector<1x32xf32>
    %21 = vector.broadcast %20 : vector<1x32xf32> to vector<16x32xf32>
    %22 = arith.addf %19, %21 : vector<16x32xf32>
    %23 = arith.truncf %22 : vector<16x32xf32> to vector<16x32xbf16>
    %c0_9 = arith.constant 0 : index
    %c0_10 = arith.constant 0 : index
    %24 = vector.load %arg3[%c0_9, %c0_10] : memref<32x64xbf16, #tpu.memory_space<vmem>>, vector<32x64xbf16>
    %cst_11 = arith.constant dense<0.000000e+00> : vector<16x64xf32>
    %25 = tpu.matmul %23, %24, %cst_11 {dimension_numbers = #tpu.dot_dimension_numbers<[1], [0], [0], [1], [0, 0, 1, 1], [], []>} : vector<16x32xbf16>, vector<32x64xbf16>, vector<16x64xf32> -> vector<16x64xf32>
    %c0_12 = arith.constant 0 : index
    %c0_13 = arith.constant 0 : index
    %26 = vector.load %arg4[%c0_12, %c0_13] : memref<1x64xf32, #tpu.memory_space<vmem>>, vector<1x64xf32>
    %27 = vector.broadcast %26 : vector<1x64xf32> to vector<16x64xf32>
    %28 = arith.addf %25, %27 : vector<16x64xf32>
    %cst_14 = arith.constant 0.000000e+00 : f32
    %29 = vector.broadcast %cst_14 : f32 to vector<16x64xf32>
    %30 = arith.maximumf %28, %29 : vector<16x64xf32>
    %31 = arith.truncf %30 : vector<16x64xf32> to vector<16x64xbf16>
    %c0_15 = arith.constant 0 : index
    %c0_16 = arith.constant 0 : index
    %32 = vector.load %arg7[%c0_15, %c0_16] : memref<16x64xbf16, #tpu.memory_space<vmem>>, vector<16x64xbf16>
    tpu.vector_store %arg7[%c0_15, %c0_16], %31 {strides = array<i32>} : memref<16x64xbf16, #tpu.memory_space<vmem>>, vector<16x64xbf16>,
    return
  }
  func.func @transform_0(%arg0: i32, %arg1: i32) -> (i32, i32) {
    %c0_i32 = arith.constant 0 : i32
    %c0_i32_0 = arith.constant 0 : i32
    return %arg1, %c0_i32 : i32, i32
  }
  func.func @transform_1(%arg0: i32, %arg1: i32) -> (i32, i32) {
    %c0_i32 = arith.constant 0 : i32
    %c0_i32_0 = arith.constant 0 : i32
    return %c0_i32, %arg0 : i32, i32
  }
  func.func @transform_2(%arg0: i32, %arg1: i32) -> (i32, i32) {
    %c0_i32 = arith.constant 0 : i32
    %c0_i32_0 = arith.constant 0 : i32
    return %c0_i32, %arg0 : i32, i32
  }
  func.func @transform_3(%arg0: i32, %arg1: i32) -> (i32, i32) {
    %c0_i32 = arith.constant 0 : i32
    %c0_i32_0 = arith.constant 0 : i32
    %c0_i32_1 = arith.constant 0 : i32
    return %c0_i32, %c0_i32_0 : i32, i32
  }
  func.func @transform_4(%arg0: i32, %arg1: i32) -> (i32, i32) {
    %c0_i32 = arith.constant 0 : i32
    %c0_i32_0 = arith.constant 0 : i32
    %c0_i32_1 = arith.constant 0 : i32
    return %c0_i32, %c0_i32_0 : i32, i32
  }
  func.func @transform_5(%arg0: i32, %arg1: i32) -> (i32, i32) {
    %c0_i32 = arith.constant 0 : i32
    return %arg1, %arg0 : i32, i32
  }
}

module attributes {stable_mosaic.version = 11 : i64} {
  func.func @_linear_kernel(%arg0: i32, %arg1: i32, %arg2: memref<16x64xbf16, #tpu.memory_space<vmem>>, %arg3: memref<64x32xbf16, #tpu.memory_space<vmem>>, %arg4: memref<1x32xf32, #tpu.memory_space<vmem>>, %arg5: memref<16x32xf32, #tpu.memory_space<vmem>>, %arg6: memref<16x32xf32, #tpu.memory_space<vmem>>) attributes {dimension_semantics = [#tpu.dimension_semantics<parallel>, #tpu.dimension_semantics<parallel>], iteration_bounds = array<i64: 1, 1>, scalar_prefetch = 0 : i64, scratch_operands = 0 : i64, tpu.core_type = #tpu.core_type<tc>, window_params = [{transform_indices = @transform_0, window_bounds = array<i64: 16, 64>}, {transform_indices = @transform_1, window_bounds = array<i64: 64, 32>}, {transform_indices = @transform_2, window_bounds = array<i64: 1, 32>}, {transform_indices = @transform_3, window_bounds = array<i64: 16, 32>}, {transform_indices = @transform_4, window_bounds = array<i64: 16, 32>}]} {
    %c0 = arith.constant 0 : index
    %c0_0 = arith.constant 0 : index
    %0 = vector.load %arg2[%c0, %c0_0] : memref<16x64xbf16, #tpu.memory_space<vmem>>, vector<16x64xbf16>
    %c0_1 = arith.constant 0 : index
    %c0_2 = arith.constant 0 : index
    %1 = vector.load %arg3[%c0_1, %c0_2] : memref<64x32xbf16, #tpu.memory_space<vmem>>, vector<64x32xbf16>
    %cst = arith.constant dense<0.000000e+00> : vector<16x32xf32>
    %2 = tpu.matmul %0, %1, %cst {dimension_numbers = #tpu.dot_dimension_numbers<[1], [0], [0], [1], [0, 0, 1, 1], [], []>} : vector<16x64xbf16>, vector<64x32xbf16>, vector<16x32xf32> -> vector<16x32xf32>
    %c0_3 = arith.constant 0 : index
    %c0_4 = arith.constant 0 : index
    %3 = vector.load %arg4[%c0_3, %c0_4] : memref<1x32xf32, #tpu.memory_space<vmem>>, vector<1x32xf32>
    %4 = vector.broadcast %3 : vector<1x32xf32> to vector<16x32xf32>
    %5 = arith.addf %2, %4 : vector<16x32xf32>
    %c0_5 = arith.constant 0 : index
    %c0_6 = arith.constant 0 : index
    %6 = vector.load %arg5[%c0_5, %c0_6] : memref<16x32xf32, #tpu.memory_space<vmem>>, vector<16x32xf32>
    %7 = arith.addf %5, %6 : vector<16x32xf32>
    %c0_7 = arith.constant 0 : index
    %c0_8 = arith.constant 0 : index
    %8 = vector.load %arg6[%c0_7, %c0_8] : memref<16x32xf32, #tpu.memory_space<vmem>>, vector<16x32xf32>
    tpu.vector_store %arg6[%c0_7, %c0_8], %7 {strides = array<i32>} : memref<16x32xf32, #tpu.memory_space<vmem>>, vector<16x32xf32>,
    return
  }
  func.func @transform_0(%arg0: i32, %arg1: i32) -> (i32, i32) {
    %c0_i32 = arith.constant 0 : i32
    %c0_i32_0 = arith.constant 0 : i32
    return %arg1, %c0_i32 : i32, i32
  }
  func.func @transform_1(%arg0: i32, %arg1: i32) -> (i32, i32) {
    %c0_i32 = arith.constant 0 : i32
    %c0_i32_0 = arith.constant 0 : i32
    return %c0_i32, %arg0 : i32, i32
  }
  func.func @transform_2(%arg0: i32, %arg1: i32) -> (i32, i32) {
    %c0_i32 = arith.constant 0 : i32
    %c0_i32_0 = arith.constant 0 : i32
    return %c0_i32, %arg0 : i32, i32
  }
  func.func @transform_3(%arg0: i32, %arg1: i32) -> (i32, i32) {
    %c0_i32 = arith.constant 0 : i32
    return %arg1, %arg0 : i32, i32
  }
  func.func @transform_4(%arg0: i32, %arg1: i32) -> (i32, i32) {
    %c0_i32 = arith.constant 0 : i32
    return %arg1, %arg0 : i32, i32
  }
}

module attributes {stable_mosaic.version = 11 : i64} {
  func.func @_linear_kernel(%arg0: i32, %arg1: i32, %arg2: memref<16x32xf32, #tpu.memory_space<vmem>>, %arg3: memref<32x50xbf16, #tpu.memory_space<vmem>>, %arg4: memref<1x50xf32, #tpu.memory_space<vmem>>, %arg5: memref<1x32xf32, #tpu.memory_space<vmem>>, %arg6: memref<1x32xf32, #tpu.memory_space<vmem>>, %arg7: memref<16x50xf32, #tpu.memory_space<vmem>>) attributes {dimension_semantics = [#tpu.dimension_semantics<parallel>, #tpu.dimension_semantics<parallel>], iteration_bounds = array<i64: 1, 1>, scalar_prefetch = 0 : i64, scratch_operands = 0 : i64, tpu.core_type = #tpu.core_type<tc>, window_params = [{transform_indices = @transform_0, window_bounds = array<i64: 16, 32>}, {transform_indices = @transform_1, window_bounds = array<i64: 32, 50>}, {transform_indices = @transform_2, window_bounds = array<i64: 1, 50>}, {pipeline_mode = #tpu.pipeline_mode<synchronous>, transform_indices = @transform_3, window_bounds = array<i64: 1, 32>}, {pipeline_mode = #tpu.pipeline_mode<synchronous>, transform_indices = @transform_4, window_bounds = array<i64: 1, 32>}, {transform_indices = @transform_5, window_bounds = array<i64: 16, 50>}]} {
    %c0 = arith.constant 0 : index
    %c0_0 = arith.constant 0 : index
    %0 = vector.load %arg2[%c0, %c0_0] : memref<16x32xf32, #tpu.memory_space<vmem>>, vector<16x32xf32>
    %cst = arith.constant dense<0.000000e+00> : vector<16xf32>
    %1 = vector.multi_reduction <add>, %0, %cst [1] : vector<16x32xf32> to vector<16xf32>
    %2 = vector.shape_cast %1 : vector<16xf32> to vector<16x1xf32>
    %cst_1 = arith.constant 3.200000e+01 : f32
    %3 = vector.broadcast %cst_1 : f32 to vector<16x1xf32>
    %4 = arith.divf %2, %3 : vector<16x1xf32>
    %5 = vector.broadcast %4 : vector<16x1xf32> to vector<16x32xf32>
    %6 = arith.subf %0, %5 : vector<16x32xf32>
    %7 = arith.mulf %6, %6 : vector<16x32xf32>
    %cst_2 = arith.constant dense<0.000000e+00> : vector<16xf32>
    %8 = vector.multi_reduction <add>, %7, %cst_2 [1] : vector<16x32xf32> to vector<16xf32>
    %9 = vector.shape_cast %8 : vector<16xf32> to vector<16x1xf32>
    %cst_3 = arith.constant 3.200000e+01 : f32
    %10 = vector.broadcast %cst_3 : f32 to vector<16x1xf32>
    %11 = arith.divf %9, %10 : vector<16x1xf32>
    %cst_4 = arith.constant 9.99999996E-13 : f32
    %12 = vector.broadcast %cst_4 : f32 to vector<16x1xf32>
    %13 = arith.addf %11, %12 : vector<16x1xf32>
    %14 = math.rsqrt %13 : vector<16x1xf32>
    %15 = vector.broadcast %14 : vector<16x1xf32> to vector<16x32xf32>
    %16 = arith.mulf %6, %15 : vector<16x32xf32>
    %c0_5 = arith.constant 0 : index
    %c0_6 = arith.constant 0 : index
    %17 = vector.load %arg5[%c0_5, %c0_6] : memref<1x32xf32, #tpu.memory_space<vmem>>, vector<1x32xf32>
    %18 = vector.broadcast %17 : vector<1x32xf32> to vector<16x32xf32>
    %19 = arith.mulf %16, %18 : vector<16x32xf32>
    %c0_7 = arith.constant 0 : index
    %c0_8 = arith.constant 0 : index
    %20 = vector.load %arg6[%c0_7, %c0_8] : memref<1x32xf32, #tpu.memory_space<vmem>>, vector<1x32xf32>
    %21 = vector.broadcast %20 : vector<1x32xf32> to vector<16x32xf32>
    %22 = arith.addf %19, %21 : vector<16x32xf32>
    %23 = arith.truncf %22 : vector<16x32xf32> to vector<16x32xbf16>
    %c0_9 = arith.constant 0 : index
    %c0_10 = arith.constant 0 : index
    %24 = vector.load %arg3[%c0_9, %c0_10] : memref<32x50xbf16, #tpu.memory_space<vmem>>, vector<32x50xbf16>
    %cst_11 = arith.constant dense<0.000000e+00> : vector<16x50xf32>
    %25 = tpu.matmul %23, %24, %cst_11 {dimension_numbers = #tpu.dot_dimension_numbers<[1], [0], [0], [1], [0, 0, 1, 1], [], []>} : vector<16x32xbf16>, vector<32x50xbf16>, vector<16x50xf32> -> vector<16x50xf32>
    %c0_12 = arith.constant 0 : index
    %c0_13 = arith.constant 0 : index
    %26 = vector.load %arg4[%c0_12, %c0_13] : memref<1x50xf32, #tpu.memory_space<vmem>>, vector<1x50xf32>
    %27 = vector.broadcast %26 : vector<1x50xf32> to vector<16x50xf32>
    %28 = arith.addf %25, %27 : vector<16x50xf32>
    %c0_14 = arith.constant 0 : index
    %c0_15 = arith.constant 0 : index
    %29 = vector.load %arg7[%c0_14, %c0_15] : memref<16x50xf32, #tpu.memory_space<vmem>>, vector<16x50xf32>
    tpu.vector_store %arg7[%c0_14, %c0_15], %28 {strides = array<i32>} : memref<16x50xf32, #tpu.memory_space<vmem>>, vector<16x50xf32>,
    return
  }
  func.func @transform_0(%arg0: i32, %arg1: i32) -> (i32, i32) {
    %c0_i32 = arith.constant 0 : i32
    %c0_i32_0 = arith.constant 0 : i32
    return %arg1, %c0_i32 : i32, i32
  }
  func.func @transform_1(%arg0: i32, %arg1: i32) -> (i32, i32) {
    %c0_i32 = arith.constant 0 : i32
    %c0_i32_0 = arith.constant 0 : i32
    return %c0_i32, %arg0 : i32, i32
  }
  func.func @transform_2(%arg0: i32, %arg1: i32) -> (i32, i32) {
    %c0_i32 = arith.constant 0 : i32
    %c0_i32_0 = arith.constant 0 : i32
    return %c0_i32, %arg0 : i32, i32
  }
  func.func @transform_3(%arg0: i32, %arg1: i32) -> (i32, i32) {
    %c0_i32 = arith.constant 0 : i32
    %c0_i32_0 = arith.constant 0 : i32
    %c0_i32_1 = arith.constant 0 : i32
    return %c0_i32, %c0_i32_0 : i32, i32
  }
  func.func @transform_4(%arg0: i32, %arg1: i32) -> (i32, i32) {
    %c0_i32 = arith.constant 0 : i32
    %c0_i32_0 = arith.constant 0 : i32
    %c0_i32_1 = arith.constant 0 : i32
    return %c0_i32, %c0_i32_0 : i32, i32
  }
  func.func @transform_5(%arg0: i32, %arg1: i32) -> (i32, i32) {
    %c0_i32 = arith.constant 0 : i32
    return %arg1, %arg0 : i32, i32
  }
}

</mosaic_0001>

<llo_original>
// kernel: bidecoder_forward.29
$region0: #{bidecoder_forward.29}
  #allocation0 [shape = 'u32[]', space=smem, size = 0x4, offset = 0x4, fixed_abs, tag = 'smem constant byte address 0x4 - core index']
  #allocation1 [shape = 'u32[144,128]{1,0:T(1,128)}', space=vmem, size = 0x12000, scoped, tag = 'internal scratch']
  %s0 = inlined_call_operand.vmem [shape: f32[16,32], index: 0, kind: input, shape index: {}]
  %s1 = inlined_call_operand.vmem [shape: bf16[32,96], index: 1, kind: input, shape index: {}]
  %s2 = inlined_call_operand.vmem [shape: f32[1,96], index: 2, kind: input, shape index: {}]
  %s3 = inlined_call_operand.vmem [shape: f32[1,32], index: 3, kind: input, shape index: {}]
  %s4 = inlined_call_operand.vmem [shape: f32[1,32], index: 4, kind: input, shape index: {}]
  %s5 = inlined_call_operand.vmem [shape: bf16[16,96], index: 5, kind: output, shape index: {}]
  %s6 = sld [smem:[#allocation0]]
  $region30: #{bidecoder_forward.29} parent=0
    _
  %s8 = ssub.s32 1, %s6
  %s9 = scalar_select 0, %s8, %s6
  // Predicated region
  $region2: #{bidecoder_forward.29} parent=0 // pred_check
    _
  $region3: #{bidecoder_forward.29} parent=0 // pred_check_branch
    %11 = sbr.rel (0) target = $region5
  $region4: #{bidecoder_forward.29} parent=0 // pred_region
    _
  $region5: #{bidecoder_forward.29} parent=0 // pred_fallthru
    _
  // Predicated region
  $region6: #{bidecoder_forward.29} parent=0 // pred_check
    _
  $region7: #{bidecoder_forward.29} parent=0 // pred_check_branch
    %13 = sbr.rel (0) target = $region9
  $region8: #{bidecoder_forward.29} parent=0 // pred_region
    _
  $region9: #{bidecoder_forward.29} parent=0 // pred_fallthru
    _
  // Predicated region
  $region10: #{bidecoder_forward.29} parent=0 // pred_check
    _
  $region11: #{bidecoder_forward.29} parent=0 // pred_check_branch
    %15 = sbr.rel (0) target = $region13
  $region12: #{bidecoder_forward.29} parent=0 // pred_region
    _
  $region13: #{bidecoder_forward.29} parent=0 // pred_fallthru
    _
  // Predicated region
  $region14: #{bidecoder_forward.29} parent=0 // pred_check
    _
  $region15: #{bidecoder_forward.29} parent=0 // pred_check_branch
    %17 = sbr.rel (0) target = $region17
  $region16: #{bidecoder_forward.29} parent=0 // pred_region
    _
  $region17: #{bidecoder_forward.29} parent=0 // pred_fallthru
    _
  // Predicated region
  $region18: #{bidecoder_forward.29} parent=0 // pred_check
    _
  $region19: #{bidecoder_forward.29} parent=0 // pred_check_branch
    %19 = sbr.rel (0) target = $region21
  $region20: #{bidecoder_forward.29} parent=0 // pred_region
    _
  $region21: #{bidecoder_forward.29} parent=0 // pred_fallthru
    _
  %v21 = vld [vmem:[%s0] sm:$0xff]
  %v22 = vld [vmem:[%s0 + $0x8] sm:$0xff]
  %vm23 = vcmask 261120
  %v24 = vsel %vm23, %v21, 0.0
  %25 = vadd.xlane.f32.xlu0 %v24
  %v26 = vpop.xlane.xlu0 %25
  %v27 = vsel %vm23, %v22, 0.0
  %28 = vadd.xlane.f32.xlu0 %v27
  %v29 = vpop.xlane.xlu0 %28
  %v30 = vrcp.pop 32.0
  %v31 = vmul.f32 %v26, %v30
  %v32 = vmul.f32 %v29, %v30
  %v33 = vsub.f32 %v21, %v31
  %v34 = vsub.f32 %v22, %v32
  %v35 = vmul.f32 %v33, %v33
  %v36 = vmul.f32 %v34, %v34
  %v37 = vsel %vm23, %v35, 0.0
  %38 = vadd.xlane.f32.xlu0 %v37
  %v39 = vpop.xlane.xlu0 %38
  %v40 = vsel %vm23, %v36, 0.0
  %41 = vadd.xlane.f32.xlu0 %v40
  %v42 = vpop.xlane.xlu0 %41
  %v43 = vmul.f32 %v39, %v30
  %v44 = vmul.f32 %v42, %v30
  %v45 = vadd.f32 %v43, 1e-05
  %v46 = vadd.f32 %v44, 1e-05
  %v47 = vrsqrt.pop %v45
  %v48 = vrsqrt.pop %v46
  %v49 = vmul.f32 %v33, %v47
  %v50 = vmul.f32 %v34, %v48
  %v51 = vld [vmem:[%s3] sm:$0x1]
  %v53 = vlaneseq
  %v54 = vshrl.u32 %v53, 7
  %v55 = vsub.s32 0, %v54
  %v56 = vrot.slane %v51, %v55
  %v58 = vmul.f32 %v49, %v56
  %v59 = vmul.f32 %v50, %v56
  %v60 = vld [vmem:[%s4] sm:$0x1]
  %v62 = vlaneseq
  %v63 = vshrl.u32 %v62, 7
  %v64 = vsub.s32 0, %v63
  %v65 = vrot.slane %v60, %v64
  %v67 = vadd.f32 %v58, %v65
  %v68 = vadd.f32 %v59, %v65
  %v69 = vpack.c.bf16 %v68, %v67
  %v70 = vld [vmem:[%s1] sm:$0xf]
  %v71 = vld [vmem:[%s1 + $0x4] sm:$0xf]
  %v72 = vld [vmem:[%s1 + $0x8] sm:$0xf]
  %v73 = vld [vmem:[%s1 + $0xc] sm:$0xf]
  %v74 = vld [vmem:[%s2] sm:$0x1]
  %v76 = vlaneseq
  %v77 = vshrl.u32 %v76, 7
  %v78 = vsub.s32 0, %v77
  %v79 = vrot.slane %v74, %v78
  %v85 = vunpack.c.l.b16 %v70
  %v86 = vunpack.c.l.b16 %v71
  %v87 = vunpack.c.l.b16 %v72
  %v88 = vunpack.c.l.b16 %v73
  %v89 = vpack.c.b16 %v86, %v85
  %v90 = vpack.c.b16 %v88, %v87
  %v94 = vsel %vm23, %v69, 0
  %96 = vmatprep.subr.bf16.mxu0 0
  %97 = vmatpush1.bf16.msra.mxu0 0
  %98 = vmatprep.subr.bf16.mxu0 0
  %99 = vmatpush1.bf16.msra.mxu0 0
  %100 = vmatprep.subr.bf16.mxu0 0
  %101 = vmatpush1.bf16.msra.mxu0 0
  %102 = vmatprep.subr.bf16.mxu0 0
  %103 = vmatpush1.bf16.msra.mxu0 0
  %104 = vmatprep.subr.bf16.mxu0 0
  %105 = vmatpush1.bf16.msra.mxu0 0
  %106 = vmatprep.subr.bf16.mxu0 0
  %107 = vmatpush1.bf16.msra.mxu0 0
  %108 = vmatprep.subr.bf16.mxu0 0
  %109 = vmatpush1.bf16.msra.mxu0 %v90
  %110 = vmatprep.subr.bf16.mxu0 0
  %111 = vmatpush1.bf16.msra.mxu0 %v89
  %112 = vmatprep.subr.bf16.mxu0 0
  %113 = vmatpush2.bf16.msra.mxu0 0
  %114 = vmatprep.subr.bf16.mxu0 0
  %115 = vmatpush2.bf16.msra.mxu0 0
  %116 = vmatprep.subr.bf16.mxu0 0
  %117 = vmatpush2.bf16.msra.mxu0 0
  %118 = vmatprep.subr.bf16.mxu0 0
  %119 = vmatpush2.bf16.msra.mxu0 0
  %120 = vmatprep.subr.bf16.mxu0 0
  %121 = vmatpush2.bf16.msra.mxu0 0
  %122 = vmatprep.subr.bf16.mxu0 0
  %123 = vmatpush2.bf16.msra.mxu0 0
  %124 = vmatprep.subr.bf16.mxu0 0
  %125 = vmatpush2.bf16.msra.mxu0 0
  %126 = vmatprep.subr.bf16.mxu0 0
  %127 = vmatpush2.bf16.msra.mxu0 0
  %128 = vmatprep.mubr.bf16.mxu0 0
  %129 = vmatmul.mubr.bf16.gmra.mxu0 %v94
  %v130 = vpop.f32.mrf.mxu0
  %v131 = vadd.f32 %v79, %v130
  %v132 = vpop.f32.mrf.mxu0
  %v133 = vpop.f32.mrf.mxu0
  %v134 = vadd.f32 %v79, %v133
  %v135 = vpop.f32.mrf.mxu0
  %136 = vdwg.mxu0
  %v137 = vpack.c.bf16 %v134, %v131
  %v139 = vunpack.c.l.b16 %v137
  %v140 = vunpack.c.h.b16 %v137
  %v141 = vpack.c.b16 %v139, %v139
  %v142 = vpack.c.b16 %v140, %v140
  %vm145 = vcmask 781312
  %146 = vst.msk [vmem:[%s5] sm:$0xf] %vm145, %v141
  %147 = vst.msk [vmem:[%s5 + $0x4] sm:$0xf] %vm145, %v142
  // Predicated region
  $region22: #{bidecoder_forward.29} parent=0 // pred_check
    _
  $region23: #{bidecoder_forward.29} parent=0 // pred_check_branch
    %149 = sbr.rel (0) target = $region25
  $region24: #{bidecoder_forward.29} parent=0 // pred_region
    _
  $region25: #{bidecoder_forward.29} parent=0 // pred_fallthru
    _
  // Predicated region
  $region26: #{bidecoder_forward.29} parent=0 // pred_check
    _
  $region27: #{bidecoder_forward.29} parent=0 // pred_check_branch
    %151 = sbr.rel (0) target = $region29
  $region28: #{bidecoder_forward.29} parent=0 // pred_region
    _
  $region29: #{bidecoder_forward.29} parent=0 // pred_fallthru
    _

// kernel: bidecoder_forward.31
$region0: #{bidecoder_forward.31}
  #allocation0 [shape = 'u32[]', space=smem, size = 0x4, offset = 0x4, fixed_abs, tag = 'smem constant byte address 0x4 - core index']
  #allocation1 [shape = 'u32[144,128]{1,0:T(1,128)}', space=vmem, size = 0x12000, scoped, tag = 'internal scratch']
  %s0 = inlined_call_operand.vmem [shape: bf16[16,32], index: 0, kind: input, shape index: {}]
  %s1 = inlined_call_operand.vmem [shape: bf16[32,32], index: 1, kind: input, shape index: {}]
  %s2 = inlined_call_operand.vmem [shape: f32[1,32], index: 2, kind: input, shape index: {}]
  %s3 = inlined_call_operand.vmem [shape: f32[16,32], index: 3, kind: input, shape index: {}]
  %s4 = inlined_call_operand.vmem [shape: f32[16,32], index: 4, kind: output, shape index: {}]
  %s5 = sld [smem:[#allocation0]]
  $region26: #{bidecoder_forward.31} parent=0
    _
  %s7 = ssub.s32 1, %s5
  %s8 = scalar_select 0, %s7, %s5
  // Predicated region
  $region2: #{bidecoder_forward.31} parent=0 // pred_check
    _
  $region3: #{bidecoder_forward.31} parent=0 // pred_check_branch
    %10 = sbr.rel (0) target = $region5
  $region4: #{bidecoder_forward.31} parent=0 // pred_region
    _
  $region5: #{bidecoder_forward.31} parent=0 // pred_fallthru
    _
  // Predicated region
  $region6: #{bidecoder_forward.31} parent=0 // pred_check
    _
  $region7: #{bidecoder_forward.31} parent=0 // pred_check_branch
    %12 = sbr.rel (0) target = $region9
  $region8: #{bidecoder_forward.31} parent=0 // pred_region
    _
  $region9: #{bidecoder_forward.31} parent=0 // pred_fallthru
    _
  // Predicated region
  $region10: #{bidecoder_forward.31} parent=0 // pred_check
    _
  $region11: #{bidecoder_forward.31} parent=0 // pred_check_branch
    %14 = sbr.rel (0) target = $region13
  $region12: #{bidecoder_forward.31} parent=0 // pred_region
    _
  $region13: #{bidecoder_forward.31} parent=0 // pred_fallthru
    _
  // Predicated region
  $region14: #{bidecoder_forward.31} parent=0 // pred_check
    _
  $region15: #{bidecoder_forward.31} parent=0 // pred_check_branch
    %16 = sbr.rel (0) target = $region17
  $region16: #{bidecoder_forward.31} parent=0 // pred_region
    _
  $region17: #{bidecoder_forward.31} parent=0 // pred_fallthru
    _
  %v18 = vld [vmem:[%s0] sm:$0xf]
  %v19 = vld [vmem:[%s0 + $0x4] sm:$0xf]
  %v20 = vld [vmem:[%s1] sm:$0xf]
  %v21 = vld [vmem:[%s1 + $0x4] sm:$0xf]
  %v22 = vld [vmem:[%s1 + $0x8] sm:$0xf]
  %v23 = vld [vmem:[%s1 + $0xc] sm:$0xf]
  %v24 = vld [vmem:[%s2] sm:$0x1]
  %v26 = vlaneseq
  %v27 = vshrl.u32 %v26, 7
  %v28 = vsub.s32 0, %v27
  %v29 = vrot.slane %v24, %v28
  %v33 = vunpack.c.l.b16 %v18
  %v34 = vunpack.c.l.b16 %v19
  %v35 = vpack.c.b16 %v34, %v33
  %v40 = vunpack.c.l.b16 %v20
  %v41 = vunpack.c.l.b16 %v21
  %v42 = vunpack.c.l.b16 %v22
  %v43 = vunpack.c.l.b16 %v23
  %v44 = vpack.c.b16 %v41, %v40
  %v45 = vpack.c.b16 %v43, %v42
  %vm48 = vcmask 261120
  %v50 = vsel %vm48, %v35, 0
  %52 = vmatprep.subr.bf16.mxu0 0
  %53 = vmatpush1.bf16.msra.mxu0 0
  %54 = vmatprep.subr.bf16.mxu0 0
  %55 = vmatpush1.bf16.msra.mxu0 0
  %56 = vmatprep.subr.bf16.mxu0 0
  %57 = vmatpush1.bf16.msra.mxu0 0
  %58 = vmatprep.subr.bf16.mxu0 0
  %59 = vmatpush1.bf16.msra.mxu0 0
  %60 = vmatprep.subr.bf16.mxu0 0
  %61 = vmatpush1.bf16.msra.mxu0 0
  %62 = vmatprep.subr.bf16.mxu0 0
  %63 = vmatpush1.bf16.msra.mxu0 0
  %64 = vmatprep.subr.bf16.mxu0 0
  %65 = vmatpush1.bf16.msra.mxu0 %v45
  %66 = vmatprep.subr.bf16.mxu0 0
  %67 = vmatpush1.bf16.msra.mxu0 %v44
  %68 = vmatprep.subr.bf16.mxu0 0
  %69 = vmatpush2.bf16.msra.mxu0 0
  %70 = vmatprep.subr.bf16.mxu0 0
  %71 = vmatpush2.bf16.msra.mxu0 0
  %72 = vmatprep.subr.bf16.mxu0 0
  %73 = vmatpush2.bf16.msra.mxu0 0
  %74 = vmatprep.subr.bf16.mxu0 0
  %75 = vmatpush2.bf16.msra.mxu0 0
  %76 = vmatprep.subr.bf16.mxu0 0
  %77 = vmatpush2.bf16.msra.mxu0 0
  %78 = vmatprep.subr.bf16.mxu0 0
  %79 = vmatpush2.bf16.msra.mxu0 0
  %80 = vmatprep.subr.bf16.mxu0 0
  %81 = vmatpush2.bf16.msra.mxu0 0
  %82 = vmatprep.subr.bf16.mxu0 0
  %83 = vmatpush2.bf16.msra.mxu0 0
  %84 = vmatprep.mubr.bf16.mxu0 0
  %85 = vmatmul.mubr.bf16.gmra.mxu0 %v50
  %v86 = vpop.f32.mrf.mxu0
  %v87 = vadd.f32 %v29, %v86
  %v88 = vpop.f32.mrf.mxu0
  %v89 = vpop.f32.mrf.mxu0
  %v90 = vadd.f32 %v29, %v89
  %v91 = vpop.f32.mrf.mxu0
  %92 = vdwg.mxu0
  %v93 = vld [vmem:[%s3] sm:$0xff]
  %v94 = vld [vmem:[%s3 + $0x8] sm:$0xff]
  %v95 = vadd.f32 %v87, %v93
  %v96 = vadd.f32 %v90, %v94
  %97 = vst.msk [vmem:[%s4] sm:$0xff] %vm48, %v95
  %98 = vst.msk [vmem:[%s4 + $0x8] sm:$0xff] %vm48, %v96
  // Predicated region
  $region18: #{bidecoder_forward.31} parent=0 // pred_check
    _
  $region19: #{bidecoder_forward.31} parent=0 // pred_check_branch
    %100 = sbr.rel (0) target = $region21
  $region20: #{bidecoder_forward.31} parent=0 // pred_region
    _
  $region21: #{bidecoder_forward.31} parent=0 // pred_fallthru
    _
  // Predicated region
  $region22: #{bidecoder_forward.31} parent=0 // pred_check
    _
  $region23: #{bidecoder_forward.31} parent=0 // pred_check_branch
    %102 = sbr.rel (0) target = $region25
  $region24: #{bidecoder_forward.31} parent=0 // pred_region
    _
  $region25: #{bidecoder_forward.31} parent=0 // pred_fallthru
    _

// kernel: bidecoder_forward.32
$region0: #{bidecoder_forward.32}
  #allocation0 [shape = 'u32[]', space=smem, size = 0x4, offset = 0x4, fixed_abs, tag = 'smem constant byte address 0x4 - core index']
  #allocation1 [shape = 'u32[144,128]{1,0:T(1,128)}', space=vmem, size = 0x12000, scoped, tag = 'internal scratch']
  %s0 = inlined_call_operand.vmem [shape: f32[16,32], index: 0, kind: input, shape index: {}]
  %s1 = inlined_call_operand.vmem [shape: bf16[32,32], index: 1, kind: input, shape index: {}]
  %s2 = inlined_call_operand.vmem [shape: f32[1,32], index: 2, kind: input, shape index: {}]
  %s3 = inlined_call_operand.vmem [shape: f32[1,32], index: 3, kind: input, shape index: {}]
  %s4 = inlined_call_operand.vmem [shape: f32[1,32], index: 4, kind: input, shape index: {}]
  %s5 = inlined_call_operand.vmem [shape: bf16[16,32], index: 5, kind: output, shape index: {}]
  %s6 = sld [smem:[#allocation0]]
  $region30: #{bidecoder_forward.32} parent=0
    _
  %s8 = ssub.s32 1, %s6
  %s9 = scalar_select 0, %s8, %s6
  // Predicated region
  $region2: #{bidecoder_forward.32} parent=0 // pred_check
    _
  $region3: #{bidecoder_forward.32} parent=0 // pred_check_branch
    %11 = sbr.rel (0) target = $region5
  $region4: #{bidecoder_forward.32} parent=0 // pred_region
    _
  $region5: #{bidecoder_forward.32} parent=0 // pred_fallthru
    _
  // Predicated region
  $region6: #{bidecoder_forward.32} parent=0 // pred_check
    _
  $region7: #{bidecoder_forward.32} parent=0 // pred_check_branch
    %13 = sbr.rel (0) target = $region9
  $region8: #{bidecoder_forward.32} parent=0 // pred_region
    _
  $region9: #{bidecoder_forward.32} parent=0 // pred_fallthru
    _
  // Predicated region
  $region10: #{bidecoder_forward.32} parent=0 // pred_check
    _
  $region11: #{bidecoder_forward.32} parent=0 // pred_check_branch
    %15 = sbr.rel (0) target = $region13
  $region12: #{bidecoder_forward.32} parent=0 // pred_region
    _
  $region13: #{bidecoder_forward.32} parent=0 // pred_fallthru
    _
  // Predicated region
  $region14: #{bidecoder_forward.32} parent=0 // pred_check
    _
  $region15: #{bidecoder_forward.32} parent=0 // pred_check_branch
    %17 = sbr.rel (0) target = $region17
  $region16: #{bidecoder_forward.32} parent=0 // pred_region
    _
  $region17: #{bidecoder_forward.32} parent=0 // pred_fallthru
    _
  // Predicated region
  $region18: #{bidecoder_forward.32} parent=0 // pred_check
    _
  $region19: #{bidecoder_forward.32} parent=0 // pred_check_branch
    %19 = sbr.rel (0) target = $region21
  $region20: #{bidecoder_forward.32} parent=0 // pred_region
    _
  $region21: #{bidecoder_forward.32} parent=0 // pred_fallthru
    _
  %v21 = vld [vmem:[%s0] sm:$0xff]
  %v22 = vld [vmem:[%s0 + $0x8] sm:$0xff]
  %vm23 = vcmask 261120
  %v24 = vsel %vm23, %v21, 0.0
  %25 = vadd.xlane.f32.xlu0 %v24
  %v26 = vpop.xlane.xlu0 %25
  %v27 = vsel %vm23, %v22, 0.0
  %28 = vadd.xlane.f32.xlu0 %v27
  %v29 = vpop.xlane.xlu0 %28
  %v30 = vrcp.pop 32.0
  %v31 = vmul.f32 %v26, %v30
  %v32 = vmul.f32 %v29, %v30
  %v33 = vsub.f32 %v21, %v31
  %v34 = vsub.f32 %v22, %v32
  %v35 = vmul.f32 %v33, %v33
  %v36 = vmul.f32 %v34, %v34
  %v37 = vsel %vm23, %v35, 0.0
  %38 = vadd.xlane.f32.xlu0 %v37
  %v39 = vpop.xlane.xlu0 %38
  %v40 = vsel %vm23, %v36, 0.0
  %41 = vadd.xlane.f32.xlu0 %v40
  %v42 = vpop.xlane.xlu0 %41
  %v43 = vmul.f32 %v39, %v30
  %v44 = vmul.f32 %v42, %v30
  %v45 = vadd.f32 %v43, 1e-05
  %v46 = vadd.f32 %v44, 1e-05
  %v47 = vrsqrt.pop %v45
  %v48 = vrsqrt.pop %v46
  %v49 = vmul.f32 %v33, %v47
  %v50 = vmul.f32 %v34, %v48
  %v51 = vld [vmem:[%s3] sm:$0x1]
  %v53 = vlaneseq
  %v54 = vshrl.u32 %v53, 7
  %v55 = vsub.s32 0, %v54
  %v56 = vrot.slane %v51, %v55
  %v58 = vmul.f32 %v49, %v56
  %v59 = vmul.f32 %v50, %v56
  %v60 = vld [vmem:[%s4] sm:$0x1]
  %v62 = vlaneseq
  %v63 = vshrl.u32 %v62, 7
  %v64 = vsub.s32 0, %v63
  %v65 = vrot.slane %v60, %v64
  %v67 = vadd.f32 %v58, %v65
  %v68 = vadd.f32 %v59, %v65
  %v69 = vpack.c.bf16 %v68, %v67
  %v70 = vld [vmem:[%s1] sm:$0xf]
  %v71 = vld [vmem:[%s1 + $0x4] sm:$0xf]
  %v72 = vld [vmem:[%s1 + $0x8] sm:$0xf]
  %v73 = vld [vmem:[%s1 + $0xc] sm:$0xf]
  %v74 = vld [vmem:[%s2] sm:$0x1]
  %v76 = vlaneseq
  %v77 = vshrl.u32 %v76, 7
  %v78 = vsub.s32 0, %v77
  %v79 = vrot.slane %v74, %v78
  %v85 = vunpack.c.l.b16 %v70
  %v86 = vunpack.c.l.b16 %v71
  %v87 = vunpack.c.l.b16 %v72
  %v88 = vunpack.c.l.b16 %v73
  %v89 = vpack.c.b16 %v86, %v85
  %v90 = vpack.c.b16 %v88, %v87
  %v94 = vsel %vm23, %v69, 0
  %96 = vmatprep.subr.bf16.mxu0 0
  %97 = vmatpush1.bf16.msra.mxu0 0
  %98 = vmatprep.subr.bf16.mxu0 0
  %99 = vmatpush1.bf16.msra.mxu0 0
  %100 = vmatprep.subr.bf16.mxu0 0
  %101 = vmatpush1.bf16.msra.mxu0 0
  %102 = vmatprep.subr.bf16.mxu0 0
  %103 = vmatpush1.bf16.msra.mxu0 0
  %104 = vmatprep.subr.bf16.mxu0 0
  %105 = vmatpush1.bf16.msra.mxu0 0
  %106 = vmatprep.subr.bf16.mxu0 0
  %107 = vmatpush1.bf16.msra.mxu0 0
  %108 = vmatprep.subr.bf16.mxu0 0
  %109 = vmatpush1.bf16.msra.mxu0 %v90
  %110 = vmatprep.subr.bf16.mxu0 0
  %111 = vmatpush1.bf16.msra.mxu0 %v89
  %112 = vmatprep.subr.bf16.mxu0 0
  %113 = vmatpush2.bf16.msra.mxu0 0
  %114 = vmatprep.subr.bf16.mxu0 0
  %115 = vmatpush2.bf16.msra.mxu0 0
  %116 = vmatprep.subr.bf16.mxu0 0
  %117 = vmatpush2.bf16.msra.mxu0 0
  %118 = vmatprep.subr.bf16.mxu0 0
  %119 = vmatpush2.bf16.msra.mxu0 0
  %120 = vmatprep.subr.bf16.mxu0 0
  %121 = vmatpush2.bf16.msra.mxu0 0
  %122 = vmatprep.subr.bf16.mxu0 0
  %123 = vmatpush2.bf16.msra.mxu0 0
  %124 = vmatprep.subr.bf16.mxu0 0
  %125 = vmatpush2.bf16.msra.mxu0 0
  %126 = vmatprep.subr.bf16.mxu0 0
  %127 = vmatpush2.bf16.msra.mxu0 0
  %128 = vmatprep.mubr.bf16.mxu0 0
  %129 = vmatmul.mubr.bf16.gmra.mxu0 %v94
  %v130 = vpop.f32.mrf.mxu0
  %v131 = vadd.f32 %v79, %v130
  %v132 = vpop.f32.mrf.mxu0
  %v133 = vpop.f32.mrf.mxu0
  %v134 = vadd.f32 %v79, %v133
  %v135 = vpop.f32.mrf.mxu0
  %136 = vdwg.mxu0
  %v137 = vpack.c.bf16 %v134, %v131
  %v139 = vunpack.c.l.b16 %v137
  %v140 = vunpack.c.h.b16 %v137
  %v141 = vpack.c.b16 %v139, %v139
  %v142 = vpack.c.b16 %v140, %v140
  %vm145 = vcmask 257024
  %146 = vst.msk [vmem:[%s5] sm:$0xf] %vm145, %v141
  %147 = vst.msk [vmem:[%s5 + $0x4] sm:$0xf] %vm145, %v142
  // Predicated region
  $region22: #{bidecoder_forward.32} parent=0 // pred_check
    _
  $region23: #{bidecoder_forward.32} parent=0 // pred_check_branch
    %149 = sbr.rel (0) target = $region25
  $region24: #{bidecoder_forward.32} parent=0 // pred_region
    _
  $region25: #{bidecoder_forward.32} parent=0 // pred_fallthru
    _
  // Predicated region
  $region26: #{bidecoder_forward.32} parent=0 // pred_check
    _
  $region27: #{bidecoder_forward.32} parent=0 // pred_check_branch
    %151 = sbr.rel (0) target = $region29
  $region28: #{bidecoder_forward.32} parent=0 // pred_region
    _
  $region29: #{bidecoder_forward.32} parent=0 // pred_fallthru
    _

// kernel: bidecoder_forward.30
$region0: #{bidecoder_forward.30}
  #allocation0 [shape = 'u32[]', space=smem, size = 0x4, offset = 0x4, fixed_abs, tag = 'smem constant byte address 0x4 - core index']
  #allocation1 [shape = 'u32[144,128]{1,0:T(1,128)}', space=vmem, size = 0x12000, scoped, tag = 'internal scratch']
  #allocation2 [shape = 's32[1]{0}', space=sflag, size = 0x4, scoped, tag = 'scoped memory for bidecoder_forward.30']
  #allocation3 [shape = 'u8[512]{0}', space=smem, size = 0x200, scoped, tag = 'prefetched SMEM operand 0']
  %s0 = inlined_call_operand.vmem [shape: s32[2], index: 0, kind: input, shape index: {}]
  %s1 = inlined_call_operand.vmem [shape: bf16[2,8,96], index: 1, kind: input, shape index: {}]
  %s2 = inlined_call_operand.vmem [shape: bf16[2,8,32], index: 2, kind: output, shape index: {}]
  %s3 = sld [smem:[#allocation0]]
  $region37: #{bidecoder_forward.30} parent=0
    _
  %s5 = ssub.s32 1, %s3
  %s6 = scalar_select 0, %s5, %s3
  %s7 = sshll.u32 %s0, 4
  %s8 = int_to_ptr.vmem [resolvable:$true] %s7
  %10 = dma.vmem_to_smem %s8, 16, [#allocation3], [#allocation2]
  %11 = dma.done [#allocation2], 16
  %12 = sfence
  loop: start=0, step=1, limit=4
  $region2: #{bidecoder_forward.30} parent=0 // loop_pre_header
    _
  $region3: #{bidecoder_forward.30} parent=0 // loop_header
    %s14 = sphi 0, %s18
    %p15 = scmp.ge.s32.totalorder %s14, 4
    %s24 = sphi 0, %s26
    %s27 = sphi 0, %s24
    %s28 = sphi 0, %s27
    %s44 = sphi 0, %s28
    %s50 = sphi 0, %s52
    %s53 = sphi 0, %s50
    %s54 = sphi 0, %s53
    %s70 = sphi 0, %s54
  $region4: #{bidecoder_forward.30} parent=0 // loop_header_branch
    %17 = sbr.rel (%p15) target = $region8
  $region5: #{bidecoder_forward.30} parent=0 // loop_body
    %s19 = ssub.s32 %s14, 1
    %s20 = ssub.s32 %s14, 2
    %s21 = sadd.s32 %s14, 1
    %s22 = ssub.s32 %s14, %s21
    %p23 = scmp.eq.s32.totalorder %s22, 0
    %s25 = sadd.s32 %s24, 1
    %s26 = scalar_select %p23, %s24, %s25
    %p29 = pneg %p23
    %p30 = scmp.eq.s32.totalorder %s14, 1
    %p31 = por %p29, %p30
    %p32 = scmp.ne.s32.totalorder %s24, %s27
    %p33 = scmp.eq.s32.totalorder %s14, 0
    %p34 = por %p32, %p33
    %p35 = scmp.ne.s32.totalorder %s24, %s27
    %p36 = scmp.eq.s32.totalorder %s19, 1
    %p37 = por %p35, %p36
    %p38 = scmp.ne.s32.totalorder %s27, %s28
    %p39 = scmp.eq.s32.totalorder %s19, 0
    %p40 = por %p38, %p39
    %p41 = scmp.ne.s32.totalorder %s27, %s28
    %p42 = scmp.eq.s32.totalorder %s20, 1
    %p43 = por %p41, %p42
    %p45 = scmp.ne.s32.totalorder %s28, %s44
    %p46 = scmp.eq.s32.totalorder %s20, 0
    %p47 = por %p45, %p46
    %s48 = ssub.s32 %s14, %s21
    %p49 = scmp.eq.s32.totalorder %s48, 0
    %s51 = sadd.s32 %s50, 1
    %s52 = scalar_select %p49, %s50, %s51
    %p55 = pneg %p49
    %p56 = scmp.eq.s32.totalorder %s14, 1
    %p57 = por %p55, %p56
    %p58 = scmp.ne.s32.totalorder %s50, %s53
    %p59 = scmp.eq.s32.totalorder %s14, 0
    %p60 = por %p58, %p59
    %p61 = scmp.ne.s32.totalorder %s50, %s53
    %p62 = scmp.eq.s32.totalorder %s19, 1
    %p63 = por %p61, %p62
    %p64 = scmp.ne.s32.totalorder %s53, %s54
    %p65 = scmp.eq.s32.totalorder %s19, 0
    %p66 = por %p64, %p65
    %p67 = scmp.ne.s32.totalorder %s53, %s54
    %p68 = scmp.eq.s32.totalorder %s20, 1
    %p69 = por %p67, %p68
    %p71 = scmp.ne.s32.totalorder %s54, %s70
    %p72 = scmp.eq.s32.totalorder %s20, 0
    %p73 = por %p71, %p72
    %p74 = scmp.le.s32.totalorder 1, %s14
    %p75 = scmp.lt.s32.totalorder %s14, 3
    %p76 = pnand %p74, %p75
    %p77 = pneg %p76
    // Predicated region
    $region9: #{bidecoder_forward.30} parent=5 // pred_check
      _
    $region10: #{bidecoder_forward.30} parent=5 // pred_check_branch
      %79 = sbr.rel (%p76) target = $region12
    $region11: #{bidecoder_forward.30} parent=5 // pred_region
      %s80 = ssub.s32 %s14, 1
    $region12: #{bidecoder_forward.30} parent=5 // pred_fallthru
      _
    %p81 = scmp.lt.s32.totalorder %s14, 2
    // Predicated region
    $region13: #{bidecoder_forward.30} parent=5 // pred_check
      %p82 = pneg %p81
    $region14: #{bidecoder_forward.30} parent=5 // pred_check_branch
      %84 = sbr.rel (%p82) target = $region16
    $region15: #{bidecoder_forward.30} parent=5 // pred_region
      // Predicated region
      $region17: #{bidecoder_forward.30} parent=15 // pred_check
        %p85 = pneg %p34
      $region18: #{bidecoder_forward.30} parent=15 // pred_check_branch
        %87 = sbr.rel (%p85) target = $region20
      $region19: #{bidecoder_forward.30} parent=15 // pred_region
        %p88 = scmp.lt.s32.totalorder %s14, 1
        %s89 = scalar_select %p88, %s14, 1
        %s90 = smul.addr %s89, 4
        %s91 = scalar_lea.vmem %s1, %s90
      $region20: #{bidecoder_forward.30} parent=15 // pred_fallthru
        _
    $region16: #{bidecoder_forward.30} parent=5 // pred_fallthru
      _
    %p92 = scmp.le.s32.totalorder 1, %s14
    %p93 = scmp.lt.s32.totalorder %s14, 3
    %p94 = pnand %p92, %p93
    %p95 = pneg %p94
    // Predicated region
    $region21: #{bidecoder_forward.30} parent=5 // pred_check
      _
    $region22: #{bidecoder_forward.30} parent=5 // pred_check_branch
      %97 = sbr.rel (%p94) target = $region24
    $region23: #{bidecoder_forward.30} parent=5 // pred_region
      %s98 = ssub.s32 %s14, 1
      %p99 = scmp.lt.s32.totalorder %s19, 1
      %s100 = scalar_select %p99, %s19, 1
      %s101 = smul.addr %s100, 4
      %s102 = scalar_lea.vmem %s1, %s101
      %p103 = pneg %p40
      %p104 = pneg %p37
      %p105 = pneg %p66
      %p106 = pneg %p63
      %p107 = scmp.lt.s32.totalorder %s19, 1
      %s108 = scalar_select %p107, %s19, 1
      %s109 = smul.addr %s108, 4
      %s110 = scalar_lea.vmem %s2, %s109
      %p111 = scmp.lt.s32.totalorder %s19, 1
      %s112 = scalar_select %p111, %s19, 1
      %s113 = smul.addr %s112, 4
      %s114 = scalar_lea.vmem %s1, %s113
      %p115 = scmp.lt.s32.totalorder %s19, 1
      %s116 = scalar_select %p115, %s19, 1
      %s117 = smul.addr %s116, 4
      %s118 = scalar_lea.vmem %s2, %s117
      %s120 = sld [smem:[#allocation3 + %s19]]
      %v121 = vld [vmem:[%s114] sm:$0xf]
      %v122 = vlaneseq
      %v123 = vshrl.u32 %v122, 7
      %v124 = vlaneseq
      %v125 = vand.u32 %v124, 127
      %v126 = vstv %s120
      %vm127 = vcmp.lt.s32.totalorder %v125, %v126
      %vm128 = vcmp.le.s32.totalorder %v125, %v123
      %vm129 = vmand %vm127, %vm128
      %v130 = vsel %vm129, 0.0, -1e+30
      %v131 = vsel %vm129, 1, 0
      %v132 = vcvt.s32.f32 %v131
      %vm133 = vcmask 64512
      %v134 = vsel %vm133, %v132, 0.0
      %135 = vadd.xlane.f32.xlu0 %v134
      %v136 = vpop.xlane.xlu0 %135
      %vm137 = vcmp.gt.f32.partialorder %v136, 0.0
      %v138 = vsel %vm137, 1.0, 0.0
      %v140 = vunpack.c.l.b16 %v121
      %v141 = vpack.c.b16 %v140, %v140
      %142 = vrot.lane.b32.xlu0 %v141, 96
      %v143 = vpop.permute.xlu0 %142
      %v145 = vsel %vm133, %v121, 0
      %v148 = vsel %vm133, %v143, 0
      %150 = vmatprep.subr.bf16.mxu0 0
      %151 = vmatpush1.bf16.xpose.msra.mxu0 0
      %152 = vmatprep.subr.bf16.mxu0 0
      %153 = vmatpush1.bf16.xpose.msra.mxu0 0
      %154 = vmatprep.subr.bf16.mxu0 0
      %155 = vmatpush1.bf16.xpose.msra.mxu0 0
      %156 = vmatprep.subr.bf16.mxu0 0
      %157 = vmatpush1.bf16.xpose.msra.mxu0 0
      %158 = vmatprep.subr.bf16.mxu0 0
      %159 = vmatpush1.bf16.xpose.msra.mxu0 0
      %160 = vmatprep.subr.bf16.mxu0 0
      %161 = vmatpush1.bf16.xpose.msra.mxu0 0
      %162 = vmatprep.subr.bf16.mxu0 0
      %163 = vmatpush1.bf16.xpose.msra.mxu0 0
      %164 = vmatprep.subr.bf16.mxu0 0
      %165 = vmatpush1.bf16.xpose.msra.mxu0 %v148
      %166 = vmatprep.subr.bf16.mxu0 0
      %167 = vmatpush2.bf16.xpose.msra.mxu0 0
      %168 = vmatprep.subr.bf16.mxu0 0
      %169 = vmatpush2.bf16.xpose.msra.mxu0 0
      %170 = vmatprep.subr.bf16.mxu0 0
      %171 = vmatpush2.bf16.xpose.msra.mxu0 0
      %172 = vmatprep.subr.bf16.mxu0 0
      %173 = vmatpush2.bf16.xpose.msra.mxu0 0
      %174 = vmatprep.subr.bf16.mxu0 0
      %175 = vmatpush2.bf16.xpose.msra.mxu0 0
      %176 = vmatprep.subr.bf16.mxu0 0
      %177 = vmatpush2.bf16.xpose.msra.mxu0 0
      %178 = vmatprep.subr.bf16.mxu0 0
      %179 = vmatpush2.bf16.xpose.msra.mxu0 0
      %180 = vmatprep.subr.bf16.mxu0 0
      %181 = vmatpush2.bf16.xpose.msra.mxu0 0
      %182 = vmatprep.mubr.bf16.mxu0 0
      %183 = vmatmul.mubr.bf16.gmra.mxu0 %v145
      %v184 = vpop.f32.mrf.mxu0
      %v185 = vadd.f32 %v130, %v184
      %v186 = vpop.f32.mrf.mxu0
      %v187 = vpop.f32.mrf.mxu0
      %v188 = vpop.f32.mrf.mxu0
      %189 = vdwg.mxu0
      %v190 = vsel %vm133, %v185, -inf
      %191 = vmax.xlane.f32.xlu0 %v190
      %v192 = vpop.xlane.xlu0 %191
      %v193 = vsub.f32 %v185, %v192
      %v194 = vmul.f32 %v193, 1.442695
      %v195 = vpow.pop %v194
      %v196 = vsel %vm133, %v195, 0.0
      %197 = vadd.xlane.f32.xlu0 %v196
      %v198 = vpop.xlane.xlu0 %197
      %v199 = vrcp.pop %v198
      %v200 = vmul.f32 %v195, %v199
      %v201 = vpack.c.bf16 %v200, %v200
      %202 = vrot.lane.b32.xlu0 %v141, 64
      %v203 = vpop.permute.xlu0 %202
      %v205 = vsel %vm133, %v201, 0
      %vm207 = vcmask 1043456
      %v209 = vsel %vm207, %v203, 0
      %211 = vmatprep.subr.bf16.mxu0 0
      %212 = vmatpush1.bf16.msra.mxu0 0
      %213 = vmatprep.subr.bf16.mxu0 0
      %214 = vmatpush1.bf16.msra.mxu0 0
      %215 = vmatprep.subr.bf16.mxu0 0
      %216 = vmatpush1.bf16.msra.mxu0 0
      %217 = vmatprep.subr.bf16.mxu0 0
      %218 = vmatpush1.bf16.msra.mxu0 0
      %219 = vmatprep.subr.bf16.mxu0 0
      %220 = vmatpush1.bf16.msra.mxu0 0
      %221 = vmatprep.subr.bf16.mxu0 0
      %222 = vmatpush1.bf16.msra.mxu0 0
      %223 = vmatprep.subr.bf16.mxu0 0
      %224 = vmatpush1.bf16.msra.mxu0 0
      %225 = vmatprep.subr.bf16.mxu0 0
      %226 = vmatpush1.bf16.msra.mxu0 %v209
      %227 = vmatprep.subr.bf16.mxu0 0
      %228 = vmatpush2.bf16.msra.mxu0 0
      %229 = vmatprep.subr.bf16.mxu0 0
      %230 = vmatpush2.bf16.msra.mxu0 0
      %231 = vmatprep.subr.bf16.mxu0 0
      %232 = vmatpush2.bf16.msra.mxu0 0
      %233 = vmatprep.subr.bf16.mxu0 0
      %234 = vmatpush2.bf16.msra.mxu0 0
      %235 = vmatprep.subr.bf16.mxu0 0
      %236 = vmatpush2.bf16.msra.mxu0 0
      %237 = vmatprep.subr.bf16.mxu0 0
      %238 = vmatpush2.bf16.msra.mxu0 0
      %239 = vmatprep.subr.bf16.mxu0 0
      %240 = vmatpush2.bf16.msra.mxu0 0
      %241 = vmatprep.subr.bf16.mxu0 0
      %242 = vmatpush2.bf16.msra.mxu0 0
      %243 = vmatprep.mubr.bf16.mxu0 0
      %244 = vmatmul.mubr.bf16.gmra.mxu0 %v205
      %v245 = vpop.f32.mrf.mxu0
      %v246 = vadd.f32 0.0, %v245
      %v247 = vpop.f32.mrf.mxu0
      %v248 = vpop.f32.mrf.mxu0
      %v249 = vpop.f32.mrf.mxu0
      %250 = vdwg.mxu0
      %v251 = vmul.f32 %v246, %v138
      %252 = vrot.lane.b32.xlu0 %v141, 120
      %v253 = vpop.permute.xlu0 %252
      %254 = vrot.lane.b32.xlu0 %v141, 88
      %v255 = vpop.permute.xlu0 %254
      %v257 = vsel %vm133, %v253, 0
      %v260 = vsel %vm133, %v255, 0
      %262 = vmatprep.subr.bf16.mxu0 0
      %263 = vmatpush1.bf16.xpose.msra.mxu0 0
      %264 = vmatprep.subr.bf16.mxu0 0
      %265 = vmatpush1.bf16.xpose.msra.mxu0 0
      %266 = vmatprep.subr.bf16.mxu0 0
      %267 = vmatpush1.bf16.xpose.msra.mxu0 0
      %268 = vmatprep.subr.bf16.mxu0 0
      %269 = vmatpush1.bf16.xpose.msra.mxu0 0
      %270 = vmatprep.subr.bf16.mxu0 0
      %271 = vmatpush1.bf16.xpose.msra.mxu0 0
      %272 = vmatprep.subr.bf16.mxu0 0
      %273 = vmatpush1.bf16.xpose.msra.mxu0 0
      %274 = vmatprep.subr.bf16.mxu0 0
      %275 = vmatpush1.bf16.xpose.msra.mxu0 0
      %276 = vmatprep.subr.bf16.mxu0 0
      %277 = vmatpush1.bf16.xpose.msra.mxu0 %v260
      %278 = vmatprep.subr.bf16.mxu0 0
      %279 = vmatpush2.bf16.xpose.msra.mxu0 0
      %280 = vmatprep.subr.bf16.mxu0 0
      %281 = vmatpush2.bf16.xpose.msra.mxu0 0
      %282 = vmatprep.subr.bf16.mxu0 0
      %283 = vmatpush2.bf16.xpose.msra.mxu0 0
      %284 = vmatprep.subr.bf16.mxu0 0
      %285 = vmatpush2.bf16.xpose.msra.mxu0 0
      %286 = vmatprep.subr.bf16.mxu0 0
      %287 = vmatpush2.bf16.xpose.msra.mxu0 0
      %288 = vmatprep.subr.bf16.mxu0 0
      %289 = vmatpush2.bf16.xpose.msra.mxu0 0
      %290 = vmatprep.subr.bf16.mxu0 0
      %291 = vmatpush2.bf16.xpose.msra.mxu0 0
      %292 = vmatprep.subr.bf16.mxu0 0
      %293 = vmatpush2.bf16.xpose.msra.mxu0 0
      %294 = vmatprep.mubr.bf16.mxu0 0
      %295 = vmatmul.mubr.bf16.gmra.mxu0 %v257
      %v296 = vpop.f32.mrf.mxu0
      %v297 = vadd.f32 %v130, %v296
      %v298 = vpop.f32.mrf.mxu0
      %v299 = vpop.f32.mrf.mxu0
      %v300 = vpop.f32.mrf.mxu0
      %301 = vdwg.mxu0
      %v302 = vsel %vm133, %v297, -inf
      %303 = vmax.xlane.f32.xlu0 %v302
      %v304 = vpop.xlane.xlu0 %303
      %v305 = vsub.f32 %v297, %v304
      %v306 = vmul.f32 %v305, 1.442695
      %v307 = vpow.pop %v306
      %v308 = vsel %vm133, %v307, 0.0
      %309 = vadd.xlane.f32.xlu0 %v308
      %v310 = vpop.xlane.xlu0 %309
      %v311 = vrcp.pop %v310
      %v312 = vmul.f32 %v307, %v311
      %v313 = vpack.c.bf16 %v312, %v312
      %314 = vrot.lane.b32.xlu0 %v141, 56
      %v315 = vpop.permute.xlu0 %314
      %v317 = vsel %vm133, %v313, 0
      %v320 = vsel %vm207, %v315, 0
      %322 = vmatprep.subr.bf16.mxu0 0
      %323 = vmatpush1.bf16.msra.mxu0 0
      %324 = vmatprep.subr.bf16.mxu0 0
      %325 = vmatpush1.bf16.msra.mxu0 0
      %326 = vmatprep.subr.bf16.mxu0 0
      %327 = vmatpush1.bf16.msra.mxu0 0
      %328 = vmatprep.subr.bf16.mxu0 0
      %329 = vmatpush1.bf16.msra.mxu0 0
      %330 = vmatprep.subr.bf16.mxu0 0
      %331 = vmatpush1.bf16.msra.mxu0 0
      %332 = vmatprep.subr.bf16.mxu0 0
      %333 = vmatpush1.bf16.msra.mxu0 0
      %334 = vmatprep.subr.bf16.mxu0 0
      %335 = vmatpush1.bf16.msra.mxu0 0
      %336 = vmatprep.subr.bf16.mxu0 0
      %337 = vmatpush1.bf16.msra.mxu0 %v320
      %338 = vmatprep.subr.bf16.mxu0 0
      %339 = vmatpush2.bf16.msra.mxu0 0
      %340 = vmatprep.subr.bf16.mxu0 0
      %341 = vmatpush2.bf16.msra.mxu0 0
      %342 = vmatprep.subr.bf16.mxu0 0
      %343 = vmatpush2.bf16.msra.mxu0 0
      %344 = vmatprep.subr.bf16.mxu0 0
      %345 = vmatpush2.bf16.msra.mxu0 0
      %346 = vmatprep.subr.bf16.mxu0 0
      %347 = vmatpush2.bf16.msra.mxu0 0
      %348 = vmatprep.subr.bf16.mxu0 0
      %349 = vmatpush2.bf16.msra.mxu0 0
      %350 = vmatprep.subr.bf16.mxu0 0
      %351 = vmatpush2.bf16.msra.mxu0 0
      %352 = vmatprep.subr.bf16.mxu0 0
      %353 = vmatpush2.bf16.msra.mxu0 0
      %354 = vmatprep.mubr.bf16.mxu0 0
      %355 = vmatmul.mubr.bf16.gmra.mxu0 %v317
      %v356 = vpop.f32.mrf.mxu0
      %v357 = vadd.f32 0.0, %v356
      %v358 = vpop.f32.mrf.mxu0
      %v359 = vpop.f32.mrf.mxu0
      %v360 = vpop.f32.mrf.mxu0
      %361 = vdwg.mxu0
      %v362 = vmul.f32 %v357, %v138
      %363 = vrot.lane.b32.xlu0 %v141, 112
      %v364 = vpop.permute.xlu0 %363
      %365 = vrot.lane.b32.xlu0 %v141, 80
      %v366 = vpop.permute.xlu0 %365
      %v368 = vsel %vm133, %v364, 0
      %v371 = vsel %vm133, %v366, 0
      %373 = vmatprep.subr.bf16.mxu0 0
      %374 = vmatpush1.bf16.xpose.msra.mxu0 0
      %375 = vmatprep.subr.bf16.mxu0 0
      %376 = vmatpush1.bf16.xpose.msra.mxu0 0
      %377 = vmatprep.subr.bf16.mxu0 0
      %378 = vmatpush1.bf16.xpose.msra.mxu0 0
      %379 = vmatprep.subr.bf16.mxu0 0
      %380 = vmatpush1.bf16.xpose.msra.mxu0 0
      %381 = vmatprep.subr.bf16.mxu0 0
      %382 = vmatpush1.bf16.xpose.msra.mxu0 0
      %383 = vmatprep.subr.bf16.mxu0 0
      %384 = vmatpush1.bf16.xpose.msra.mxu0 0
      %385 = vmatprep.subr.bf16.mxu0 0
      %386 = vmatpush1.bf16.xpose.msra.mxu0 0
      %387 = vmatprep.subr.bf16.mxu0 0
      %388 = vmatpush1.bf16.xpose.msra.mxu0 %v371
      %389 = vmatprep.subr.bf16.mxu0 0
      %390 = vmatpush2.bf16.xpose.msra.mxu0 0
      %391 = vmatprep.subr.bf16.mxu0 0
      %392 = vmatpush2.bf16.xpose.msra.mxu0 0
      %393 = vmatprep.subr.bf16.mxu0 0
      %394 = vmatpush2.bf16.xpose.msra.mxu0 0
      %395 = vmatprep.subr.bf16.mxu0 0
      %396 = vmatpush2.bf16.xpose.msra.mxu0 0
      %397 = vmatprep.subr.bf16.mxu0 0
      %398 = vmatpush2.bf16.xpose.msra.mxu0 0
      %399 = vmatprep.subr.bf16.mxu0 0
      %400 = vmatpush2.bf16.xpose.msra.mxu0 0
      %401 = vmatprep.subr.bf16.mxu0 0
      %402 = vmatpush2.bf16.xpose.msra.mxu0 0
      %403 = vmatprep.subr.bf16.mxu0 0
      %404 = vmatpush2.bf16.xpose.msra.mxu0 0
      %405 = vmatprep.mubr.bf16.mxu0 0
      %406 = vmatmul.mubr.bf16.gmra.mxu0 %v368
      %v407 = vpop.f32.mrf.mxu0
      %v408 = vadd.f32 %v130, %v407
      %v409 = vpop.f32.mrf.mxu0
      %v410 = vpop.f32.mrf.mxu0
      %v411 = vpop.f32.mrf.mxu0
      %412 = vdwg.mxu0
      %v413 = vsel %vm133, %v408, -inf
      %414 = vmax.xlane.f32.xlu0 %v413
      %v415 = vpop.xlane.xlu0 %414
      %v416 = vsub.f32 %v408, %v415
      %v417 = vmul.f32 %v416, 1.442695
      %v418 = vpow.pop %v417
      %v419 = vsel %vm133, %v418, 0.0
      %420 = vadd.xlane.f32.xlu0 %v419
      %v421 = vpop.xlane.xlu0 %420
      %v422 = vrcp.pop %v421
      %v423 = vmul.f32 %v418, %v422
      %v424 = vpack.c.bf16 %v423, %v423
      %425 = vrot.lane.b32.xlu0 %v141, 48
      %v426 = vpop.permute.xlu0 %425
      %v428 = vsel %vm133, %v424, 0
      %v431 = vsel %vm207, %v426, 0
      %433 = vmatprep.subr.bf16.mxu0 0
      %434 = vmatpush1.bf16.msra.mxu0 0
      %435 = vmatprep.subr.bf16.mxu0 0
      %436 = vmatpush1.bf16.msra.mxu0 0
      %437 = vmatprep.subr.bf16.mxu0 0
      %438 = vmatpush1.bf16.msra.mxu0 0
      %439 = vmatprep.subr.bf16.mxu0 0
      %440 = vmatpush1.bf16.msra.mxu0 0
      %441 = vmatprep.subr.bf16.mxu0 0
      %442 = vmatpush1.bf16.msra.mxu0 0
      %443 = vmatprep.subr.bf16.mxu0 0
      %444 = vmatpush1.bf16.msra.mxu0 0
      %445 = vmatprep.subr.bf16.mxu0 0
      %446 = vmatpush1.bf16.msra.mxu0 0
      %447 = vmatprep.subr.bf16.mxu0 0
      %448 = vmatpush1.bf16.msra.mxu0 %v431
      %449 = vmatprep.subr.bf16.mxu0 0
      %450 = vmatpush2.bf16.msra.mxu0 0
      %451 = vmatprep.subr.bf16.mxu0 0
      %452 = vmatpush2.bf16.msra.mxu0 0
      %453 = vmatprep.subr.bf16.mxu0 0
      %454 = vmatpush2.bf16.msra.mxu0 0
      %455 = vmatprep.subr.bf16.mxu0 0
      %456 = vmatpush2.bf16.msra.mxu0 0
      %457 = vmatprep.subr.bf16.mxu0 0
      %458 = vmatpush2.bf16.msra.mxu0 0
      %459 = vmatprep.subr.bf16.mxu0 0
      %460 = vmatpush2.bf16.msra.mxu0 0
      %461 = vmatprep.subr.bf16.mxu0 0
      %462 = vmatpush2.bf16.msra.mxu0 0
      %463 = vmatprep.subr.bf16.mxu0 0
      %464 = vmatpush2.bf16.msra.mxu0 0
      %465 = vmatprep.mubr.bf16.mxu0 0
      %466 = vmatmul.mubr.bf16.gmra.mxu0 %v428
      %v467 = vpop.f32.mrf.mxu0
      %v468 = vadd.f32 0.0, %v467
      %v469 = vpop.f32.mrf.mxu0
      %v470 = vpop.f32.mrf.mxu0
      %v471 = vpop.f32.mrf.mxu0
      %472 = vdwg.mxu0
      %v473 = vmul.f32 %v468, %v138
      %474 = vrot.lane.b32.xlu0 %v141, 104
      %v475 = vpop.permute.xlu0 %474
      %476 = vrot.lane.b32.xlu0 %v141, 72
      %v477 = vpop.permute.xlu0 %476
      %v479 = vsel %vm133, %v475, 0
      %v482 = vsel %vm133, %v477, 0
      %484 = vmatprep.subr.bf16.mxu0 0
      %485 = vmatpush1.bf16.xpose.msra.mxu0 0
      %486 = vmatprep.subr.bf16.mxu0 0
      %487 = vmatpush1.bf16.xpose.msra.mxu0 0
      %488 = vmatprep.subr.bf16.mxu0 0
      %489 = vmatpush1.bf16.xpose.msra.mxu0 0
      %490 = vmatprep.subr.bf16.mxu0 0
      %491 = vmatpush1.bf16.xpose.msra.mxu0 0
      %492 = vmatprep.subr.bf16.mxu0 0
      %493 = vmatpush1.bf16.xpose.msra.mxu0 0
      %494 = vmatprep.subr.bf16.mxu0 0
      %495 = vmatpush1.bf16.xpose.msra.mxu0 0
      %496 = vmatprep.subr.bf16.mxu0 0
      %497 = vmatpush1.bf16.xpose.msra.mxu0 0
      %498 = vmatprep.subr.bf16.mxu0 0
      %499 = vmatpush1.bf16.xpose.msra.mxu0 %v482
      %500 = vmatprep.subr.bf16.mxu0 0
      %501 = vmatpush2.bf16.xpose.msra.mxu0 0
      %502 = vmatprep.subr.bf16.mxu0 0
      %503 = vmatpush2.bf16.xpose.msra.mxu0 0
      %504 = vmatprep.subr.bf16.mxu0 0
      %505 = vmatpush2.bf16.xpose.msra.mxu0 0
      %506 = vmatprep.subr.bf16.mxu0 0
      %507 = vmatpush2.bf16.xpose.msra.mxu0 0
      %508 = vmatprep.subr.bf16.mxu0 0
      %509 = vmatpush2.bf16.xpose.msra.mxu0 0
      %510 = vmatprep.subr.bf16.mxu0 0
      %511 = vmatpush2.bf16.xpose.msra.mxu0 0
      %512 = vmatprep.subr.bf16.mxu0 0
      %513 = vmatpush2.bf16.xpose.msra.mxu0 0
      %514 = vmatprep.subr.bf16.mxu0 0
      %515 = vmatpush2.bf16.xpose.msra.mxu0 0
      %516 = vmatprep.mubr.bf16.mxu0 0
      %517 = vmatmul.mubr.bf16.gmra.mxu0 %v479
      %v518 = vpop.f32.mrf.mxu0
      %v519 = vadd.f32 %v130, %v518
      %v520 = vpop.f32.mrf.mxu0
      %v521 = vpop.f32.mrf.mxu0
      %v522 = vpop.f32.mrf.mxu0
      %523 = vdwg.mxu0
      %v524 = vsel %vm133, %v519, -inf
      %525 = vmax.xlane.f32.xlu0 %v524
      %v526 = vpop.xlane.xlu0 %525
      %v527 = vsub.f32 %v519, %v526
      %v528 = vmul.f32 %v527, 1.442695
      %v529 = vpow.pop %v528
      %v530 = vsel %vm133, %v529, 0.0
      %531 = vadd.xlane.f32.xlu0 %v530
      %v532 = vpop.xlane.xlu0 %531
      %v533 = vrcp.pop %v532
      %v534 = vmul.f32 %v529, %v533
      %v535 = vpack.c.bf16 %v534, %v534
      %536 = vrot.lane.b32.xlu0 %v141, 40
      %v537 = vpop.permute.xlu0 %536
      %v539 = vsel %vm133, %v535, 0
      %v542 = vsel %vm207, %v537, 0
      %544 = vmatprep.subr.bf16.mxu0 0
      %545 = vmatpush1.bf16.msra.mxu0 0
      %546 = vmatprep.subr.bf16.mxu0 0
      %547 = vmatpush1.bf16.msra.mxu0 0
      %548 = vmatprep.subr.bf16.mxu0 0
      %549 = vmatpush1.bf16.msra.mxu0 0
      %550 = vmatprep.subr.bf16.mxu0 0
      %551 = vmatpush1.bf16.msra.mxu0 0
      %552 = vmatprep.subr.bf16.mxu0 0
      %553 = vmatpush1.bf16.msra.mxu0 0
      %554 = vmatprep.subr.bf16.mxu0 0
      %555 = vmatpush1.bf16.msra.mxu0 0
      %556 = vmatprep.subr.bf16.mxu0 0
      %557 = vmatpush1.bf16.msra.mxu0 0
      %558 = vmatprep.subr.bf16.mxu0 0
      %559 = vmatpush1.bf16.msra.mxu0 %v542
      %560 = vmatprep.subr.bf16.mxu0 0
      %561 = vmatpush2.bf16.msra.mxu0 0
      %562 = vmatprep.subr.bf16.mxu0 0
      %563 = vmatpush2.bf16.msra.mxu0 0
      %564 = vmatprep.subr.bf16.mxu0 0
      %565 = vmatpush2.bf16.msra.mxu0 0
      %566 = vmatprep.subr.bf16.mxu0 0
      %567 = vmatpush2.bf16.msra.mxu0 0
      %568 = vmatprep.subr.bf16.mxu0 0
      %569 = vmatpush2.bf16.msra.mxu0 0
      %570 = vmatprep.subr.bf16.mxu0 0
      %571 = vmatpush2.bf16.msra.mxu0 0
      %572 = vmatprep.subr.bf16.mxu0 0
      %573 = vmatpush2.bf16.msra.mxu0 0
      %574 = vmatprep.subr.bf16.mxu0 0
      %575 = vmatpush2.bf16.msra.mxu0 0
      %576 = vmatprep.mubr.bf16.mxu0 0
      %577 = vmatmul.mubr.bf16.gmra.mxu0 %v539
      %v578 = vpop.f32.mrf.mxu0
      %v579 = vadd.f32 0.0, %v578
      %v580 = vpop.f32.mrf.mxu0
      %v581 = vpop.f32.mrf.mxu0
      %v582 = vpop.f32.mrf.mxu0
      %583 = vdwg.mxu0
      %v584 = vmul.f32 %v579, %v138
      %586 = vrot.lane.b32.xlu0 %v362, 8
      %v587 = vpop.permute.xlu0 %586
      %590 = vrot.lane.b32.xlu0 %v473, 16
      %v591 = vpop.permute.xlu0 %590
      %594 = vrot.lane.b32.xlu0 %v584, 24
      %v595 = vpop.permute.xlu0 %594
      %v597 = vsel %vm133, %v251, %v587
      %vm598 = vcmask 130048
      %v599 = vsel %vm598, %v597, %v591
      %vm600 = vcmask 195584
      %v601 = vsel %vm600, %v599, %v595
      %v602 = vpack.c.bf16 %v601, %v601
      %vm603 = vcmask 257024
      %604 = vst.msk [vmem:[%s118] sm:$0xf] %vm603, %v602
      %p605 = scmp.lt.s32.totalorder %s19, 1
      %s606 = scalar_select %p605, %s19, 1
      %s607 = smul.addr %s606, 4
      %s608 = scalar_lea.vmem %s2, %s607
      // Predicated region
      $region25: #{bidecoder_forward.30} parent=23 // pred_check
        %p609 = pneg %p63
      $region26: #{bidecoder_forward.30} parent=23 // pred_check_branch
        %611 = sbr.rel (%p609) target = $region28
      $region27: #{bidecoder_forward.30} parent=23 // pred_region
        _
      $region28: #{bidecoder_forward.30} parent=23 // pred_fallthru
        _
    $region24: #{bidecoder_forward.30} parent=5 // pred_fallthru
      _
    %p612 = scmp.le.s32.totalorder 2, %s14
    // Predicated region
    $region29: #{bidecoder_forward.30} parent=5 // pred_check
      %p613 = pneg %p612
    $region30: #{bidecoder_forward.30} parent=5 // pred_check_branch
      %615 = sbr.rel (%p613) target = $region32
    $region31: #{bidecoder_forward.30} parent=5 // pred_region
      %s616 = ssub.s32 %s14, 2
      // Predicated region
      $region33: #{bidecoder_forward.30} parent=31 // pred_check
        %p617 = pneg %p69
      $region34: #{bidecoder_forward.30} parent=31 // pred_check_branch
        %619 = sbr.rel (%p617) target = $region36
      $region35: #{bidecoder_forward.30} parent=31 // pred_region
        %p620 = scmp.lt.s32.totalorder %s20, 1
        %s621 = scalar_select %p620, %s20, 1
        %s622 = smul.addr %s621, 4
        %s623 = scalar_lea.vmem %s2, %s622
      $region36: #{bidecoder_forward.30} parent=31 // pred_fallthru
        _
    $region32: #{bidecoder_forward.30} parent=5 // pred_fallthru
      _
  $region6: #{bidecoder_forward.30} parent=0 // loop_footer
    %s18 = sadd.s32 1, %s14
  $region7: #{bidecoder_forward.30} parent=0 // loop_footer_branch
    %13 = sbr.rel target = $region3
  $region8: #{bidecoder_forward.30} parent=0 // loop_exit
    _

// kernel: bidecoder_forward.33
$region0: #{bidecoder_forward.33}
  #allocation0 [shape = 'u32[]', space=smem, size = 0x4, offset = 0x4, fixed_abs, tag = 'smem constant byte address 0x4 - core index']
  #allocation1 [shape = 'u32[144,128]{1,0:T(1,128)}', space=vmem, size = 0x12000, scoped, tag = 'internal scratch']
  %s0 = inlined_call_operand.vmem [shape: f32[32,32], index: 0, kind: input, shape index: {}]
  %s1 = inlined_call_operand.vmem [shape: bf16[32,64], index: 1, kind: input, shape index: {}]
  %s2 = inlined_call_operand.vmem [shape: f32[1,64], index: 2, kind: input, shape index: {}]
  %s3 = inlined_call_operand.vmem [shape: bf16[32,64], index: 3, kind: output, shape index: {}]
  %s4 = sld [smem:[#allocation0]]
  $region22: #{bidecoder_forward.33} parent=0
    _
  %s6 = ssub.s32 1, %s4
  %s7 = scalar_select 0, %s6, %s4
  // Predicated region
  $region2: #{bidecoder_forward.33} parent=0 // pred_check
    _
  $region3: #{bidecoder_forward.33} parent=0 // pred_check_branch
    %9 = sbr.rel (0) target = $region5
  $region4: #{bidecoder_forward.33} parent=0 // pred_region
    _
  $region5: #{bidecoder_forward.33} parent=0 // pred_fallthru
    _
  // Predicated region
  $region6: #{bidecoder_forward.33} parent=0 // pred_check
    _
  $region7: #{bidecoder_forward.33} parent=0 // pred_check_branch
    %11 = sbr.rel (0) target = $region9
  $region8: #{bidecoder_forward.33} parent=0 // pred_region
    _
  $region9: #{bidecoder_forward.33} parent=0 // pred_fallthru
    _
  // Predicated region
  $region10: #{bidecoder_forward.33} parent=0 // pred_check
    _
  $region11: #{bidecoder_forward.33} parent=0 // pred_check_branch
    %13 = sbr.rel (0) target = $region13
  $region12: #{bidecoder_forward.33} parent=0 // pred_region
    _
  $region13: #{bidecoder_forward.33} parent=0 // pred_fallthru
    _
  %v15 = vld [vmem:[%s0] sm:$0xff]
  %v16 = vld [vmem:[%s0 + $0x8] sm:$0xff]
  %v17 = vld [vmem:[%s0 + $0x10] sm:$0xff]
  %v18 = vld [vmem:[%s0 + $0x18] sm:$0xff]
  %v19 = vpack.c.bf16 %v16, %v15
  %v20 = vpack.c.bf16 %v18, %v17
  %v21 = vld [vmem:[%s1] sm:$0xf]
  %v22 = vld [vmem:[%s1 + $0x4] sm:$0xf]
  %v23 = vld [vmem:[%s1 + $0x8] sm:$0xf]
  %v24 = vld [vmem:[%s1 + $0xc] sm:$0xf]
  %v25 = vld [vmem:[%s2] sm:$0x1]
  %v27 = vlaneseq
  %v28 = vshrl.u32 %v27, 7
  %v29 = vsub.s32 0, %v28
  %v30 = vrot.slane %v25, %v29
  %v36 = vunpack.c.l.b16 %v21
  %v37 = vunpack.c.l.b16 %v22
  %v38 = vunpack.c.l.b16 %v23
  %v39 = vunpack.c.l.b16 %v24
  %v40 = vpack.c.b16 %v37, %v36
  %v41 = vpack.c.b16 %v39, %v38
  %vm44 = vcmask 261120
  %v46 = vsel %vm44, %v19, 0
  %v49 = vsel %vm44, %v20, 0
  %51 = vmatprep.subr.bf16.mxu0 0
  %52 = vmatpush1.bf16.msra.mxu0 0
  %53 = vmatprep.subr.bf16.mxu0 0
  %54 = vmatpush1.bf16.msra.mxu0 0
  %55 = vmatprep.subr.bf16.mxu0 0
  %56 = vmatpush1.bf16.msra.mxu0 0
  %57 = vmatprep.subr.bf16.mxu0 0
  %58 = vmatpush1.bf16.msra.mxu0 0
  %59 = vmatprep.subr.bf16.mxu0 0
  %60 = vmatpush1.bf16.msra.mxu0 0
  %61 = vmatprep.subr.bf16.mxu0 0
  %62 = vmatpush1.bf16.msra.mxu0 0
  %63 = vmatprep.subr.bf16.mxu0 0
  %64 = vmatpush1.bf16.msra.mxu0 %v41
  %65 = vmatprep.subr.bf16.mxu0 0
  %66 = vmatpush1.bf16.msra.mxu0 %v40
  %67 = vmatprep.subr.bf16.mxu0 0
  %68 = vmatpush2.bf16.msra.mxu0 0
  %69 = vmatprep.subr.bf16.mxu0 0
  %70 = vmatpush2.bf16.msra.mxu0 0
  %71 = vmatprep.subr.bf16.mxu0 0
  %72 = vmatpush2.bf16.msra.mxu0 0
  %73 = vmatprep.subr.bf16.mxu0 0
  %74 = vmatpush2.bf16.msra.mxu0 0
  %75 = vmatprep.subr.bf16.mxu0 0
  %76 = vmatpush2.bf16.msra.mxu0 0
  %77 = vmatprep.subr.bf16.mxu0 0
  %78 = vmatpush2.bf16.msra.mxu0 0
  %79 = vmatprep.subr.bf16.mxu0 0
  %80 = vmatpush2.bf16.msra.mxu0 0
  %81 = vmatprep.subr.bf16.mxu0 0
  %82 = vmatpush2.bf16.msra.mxu0 0
  %83 = vmatprep.mubr.bf16.mxu0 0
  %84 = vmatmul.mubr.bf16.gmra.mxu0 %v46
  %v85 = vpop.f32.mrf.mxu0
  %v86 = vadd.f32 %v30, %v85
  %v87 = vpop.f32.mrf.mxu0
  %v88 = vpop.f32.mrf.mxu0
  %v89 = vadd.f32 %v30, %v88
  %v90 = vpop.f32.mrf.mxu0
  %91 = vmatprep.mubr.bf16.mxu0 0
  %92 = vmatmul.mubr.bf16.gmra.mxu0 %v49
  %v93 = vpop.f32.mrf.mxu0
  %v94 = vadd.f32 %v30, %v93
  %v95 = vpop.f32.mrf.mxu0
  %v96 = vpop.f32.mrf.mxu0
  %v97 = vadd.f32 %v30, %v96
  %v98 = vpop.f32.mrf.mxu0
  %99 = vdwg.mxu0
  %v100 = vpack.c.bf16 %v89, %v86
  %v101 = vpack.c.bf16 %v97, %v94
  %v104 = vunpack.c.l.b16 %v100
  %v105 = vunpack.c.h.b16 %v100
  %v106 = vunpack.c.l.b16 %v101
  %v107 = vunpack.c.h.b16 %v101
  %v108 = vpack.c.b16 %v104, %v104
  %v109 = vpack.c.b16 %v105, %v105
  %v110 = vpack.c.b16 %v106, %v106
  %v111 = vpack.c.b16 %v107, %v107
  %vm116 = vcmask 519168
  %117 = vst.msk [vmem:[%s3] sm:$0xf] %vm116, %v108
  %118 = vst.msk [vmem:[%s3 + $0x4] sm:$0xf] %vm116, %v109
  %119 = vst.msk [vmem:[%s3 + $0x8] sm:$0xf] %vm116, %v110
  %120 = vst.msk [vmem:[%s3 + $0xc] sm:$0xf] %vm116, %v111
  // Predicated region
  $region14: #{bidecoder_forward.33} parent=0 // pred_check
    _
  $region15: #{bidecoder_forward.33} parent=0 // pred_check_branch
    %122 = sbr.rel (0) target = $region17
  $region16: #{bidecoder_forward.33} parent=0 // pred_region
    _
  $region17: #{bidecoder_forward.33} parent=0 // pred_fallthru
    _
  // Predicated region
  $region18: #{bidecoder_forward.33} parent=0 // pred_check
    _
  $region19: #{bidecoder_forward.33} parent=0 // pred_check_branch
    %124 = sbr.rel (0) target = $region21
  $region20: #{bidecoder_forward.33} parent=0 // pred_region
    _
  $region21: #{bidecoder_forward.33} parent=0 // pred_fallthru
    _

// kernel: bidecoder_forward.34
$region0: #{bidecoder_forward.34}
  #allocation0 [shape = 'u32[]', space=smem, size = 0x4, offset = 0x4, fixed_abs, tag = 'smem constant byte address 0x4 - core index']
  #allocation1 [shape = 'u32[144,128]{1,0:T(1,128)}', space=vmem, size = 0x12000, scoped, tag = 'internal scratch']
  %s0 = inlined_call_operand.vmem [shape: bf16[2,8,32], index: 0, kind: input, shape index: {}]
  %s1 = inlined_call_operand.vmem [shape: bf16[2,16,64], index: 1, kind: input, shape index: {}]
  %s2 = inlined_call_operand.vmem [shape: s32[2,1,16], index: 2, kind: input, shape index: {}]
  %s3 = inlined_call_operand.vmem [shape: bf16[2,8,32], index: 3, kind: output, shape index: {}]
  %s4 = sld [smem:[#allocation0]]
  $region45: #{bidecoder_forward.34} parent=0
    _
  %s6 = ssub.s32 1, %s4
  %s7 = scalar_select 0, %s6, %s4
  loop: start=0, step=1, limit=4
  $region2: #{bidecoder_forward.34} parent=0 // loop_pre_header
    _
  $region3: #{bidecoder_forward.34} parent=0 // loop_header
    %s9 = sphi 0, %s13
    %p10 = scmp.ge.s32.totalorder %s9, 4
    %s19 = sphi 0, %s21
    %s22 = sphi 0, %s19
    %s23 = sphi 0, %s22
    %s39 = sphi 0, %s23
    %s45 = sphi 0, %s47
    %s48 = sphi 0, %s45
    %s49 = sphi 0, %s48
    %s65 = sphi 0, %s49
    %s71 = sphi 0, %s73
    %s74 = sphi 0, %s71
    %s75 = sphi 0, %s74
    %s91 = sphi 0, %s75
    %s97 = sphi 0, %s99
    %s100 = sphi 0, %s97
    %s101 = sphi 0, %s100
    %s117 = sphi 0, %s101
  $region4: #{bidecoder_forward.34} parent=0 // loop_header_branch
    %12 = sbr.rel (%p10) target = $region8
  $region5: #{bidecoder_forward.34} parent=0 // loop_body
    %s14 = ssub.s32 %s9, 1
    %s15 = ssub.s32 %s9, 2
    %s16 = sadd.s32 %s9, 1
    %s17 = ssub.s32 %s9, %s16
    %p18 = scmp.eq.s32.totalorder %s17, 0
    %s20 = sadd.s32 %s19, 1
    %s21 = scalar_select %p18, %s19, %s20
    %p24 = pneg %p18
    %p25 = scmp.eq.s32.totalorder %s9, 1
    %p26 = por %p24, %p25
    %p27 = scmp.ne.s32.totalorder %s19, %s22
    %p28 = scmp.eq.s32.totalorder %s9, 0
    %p29 = por %p27, %p28
    %p30 = scmp.ne.s32.totalorder %s19, %s22
    %p31 = scmp.eq.s32.totalorder %s14, 1
    %p32 = por %p30, %p31
    %p33 = scmp.ne.s32.totalorder %s22, %s23
    %p34 = scmp.eq.s32.totalorder %s14, 0
    %p35 = por %p33, %p34
    %p36 = scmp.ne.s32.totalorder %s22, %s23
    %p37 = scmp.eq.s32.totalorder %s15, 1
    %p38 = por %p36, %p37
    %p40 = scmp.ne.s32.totalorder %s23, %s39
    %p41 = scmp.eq.s32.totalorder %s15, 0
    %p42 = por %p40, %p41
    %s43 = ssub.s32 %s9, %s16
    %p44 = scmp.eq.s32.totalorder %s43, 0
    %s46 = sadd.s32 %s45, 1
    %s47 = scalar_select %p44, %s45, %s46
    %p50 = pneg %p44
    %p51 = scmp.eq.s32.totalorder %s9, 1
    %p52 = por %p50, %p51
    %p53 = scmp.ne.s32.totalorder %s45, %s48
    %p54 = scmp.eq.s32.totalorder %s9, 0
    %p55 = por %p53, %p54
    %p56 = scmp.ne.s32.totalorder %s45, %s48
    %p57 = scmp.eq.s32.totalorder %s14, 1
    %p58 = por %p56, %p57
    %p59 = scmp.ne.s32.totalorder %s48, %s49
    %p60 = scmp.eq.s32.totalorder %s14, 0
    %p61 = por %p59, %p60
    %p62 = scmp.ne.s32.totalorder %s48, %s49
    %p63 = scmp.eq.s32.totalorder %s15, 1
    %p64 = por %p62, %p63
    %p66 = scmp.ne.s32.totalorder %s49, %s65
    %p67 = scmp.eq.s32.totalorder %s15, 0
    %p68 = por %p66, %p67
    %s69 = ssub.s32 %s9, %s16
    %p70 = scmp.eq.s32.totalorder %s69, 0
    %s72 = sadd.s32 %s71, 1
    %s73 = scalar_select %p70, %s71, %s72
    %p76 = pneg %p70
    %p77 = scmp.eq.s32.totalorder %s9, 1
    %p78 = por %p76, %p77
    %p79 = scmp.ne.s32.totalorder %s71, %s74
    %p80 = scmp.eq.s32.totalorder %s9, 0
    %p81 = por %p79, %p80
    %p82 = scmp.ne.s32.totalorder %s71, %s74
    %p83 = scmp.eq.s32.totalorder %s14, 1
    %p84 = por %p82, %p83
    %p85 = scmp.ne.s32.totalorder %s74, %s75
    %p86 = scmp.eq.s32.totalorder %s14, 0
    %p87 = por %p85, %p86
    %p88 = scmp.ne.s32.totalorder %s74, %s75
    %p89 = scmp.eq.s32.totalorder %s15, 1
    %p90 = por %p88, %p89
    %p92 = scmp.ne.s32.totalorder %s75, %s91
    %p93 = scmp.eq.s32.totalorder %s15, 0
    %p94 = por %p92, %p93
    %s95 = ssub.s32 %s9, %s16
    %p96 = scmp.eq.s32.totalorder %s95, 0
    %s98 = sadd.s32 %s97, 1
    %s99 = scalar_select %p96, %s97, %s98
    %p102 = pneg %p96
    %p103 = scmp.eq.s32.totalorder %s9, 1
    %p104 = por %p102, %p103
    %p105 = scmp.ne.s32.totalorder %s97, %s100
    %p106 = scmp.eq.s32.totalorder %s9, 0
    %p107 = por %p105, %p106
    %p108 = scmp.ne.s32.totalorder %s97, %s100
    %p109 = scmp.eq.s32.totalorder %s14, 1
    %p110 = por %p108, %p109
    %p111 = scmp.ne.s32.totalorder %s100, %s101
    %p112 = scmp.eq.s32.totalorder %s14, 0
    %p113 = por %p111, %p112
    %p114 = scmp.ne.s32.totalorder %s100, %s101
    %p115 = scmp.eq.s32.totalorder %s15, 1
    %p116 = por %p114, %p115
    %p118 = scmp.ne.s32.totalorder %s101, %s117
    %p119 = scmp.eq.s32.totalorder %s15, 0
    %p120 = por %p118, %p119
    %p121 = scmp.le.s32.totalorder 1, %s9
    %p122 = scmp.lt.s32.totalorder %s9, 3
    %p123 = pnand %p121, %p122
    %p124 = pneg %p123
    // Predicated region
    $region9: #{bidecoder_forward.34} parent=5 // pred_check
      _
    $region10: #{bidecoder_forward.34} parent=5 // pred_check_branch
      %126 = sbr.rel (%p123) target = $region12
    $region11: #{bidecoder_forward.34} parent=5 // pred_region
      %s127 = ssub.s32 %s9, 1
    $region12: #{bidecoder_forward.34} parent=5 // pred_fallthru
      _
    %p128 = scmp.lt.s32.totalorder %s9, 2
    // Predicated region
    $region13: #{bidecoder_forward.34} parent=5 // pred_check
      %p129 = pneg %p128
    $region14: #{bidecoder_forward.34} parent=5 // pred_check_branch
      %131 = sbr.rel (%p129) target = $region16
    $region15: #{bidecoder_forward.34} parent=5 // pred_region
      // Predicated region
      $region17: #{bidecoder_forward.34} parent=15 // pred_check
        %p132 = pneg %p29
      $region18: #{bidecoder_forward.34} parent=15 // pred_check_branch
        %134 = sbr.rel (%p132) target = $region20
      $region19: #{bidecoder_forward.34} parent=15 // pred_region
        %p135 = scmp.lt.s32.totalorder %s9, 1
        %s136 = scalar_select %p135, %s9, 1
        %s137 = smul.addr %s136, 4
        %s138 = scalar_lea.vmem %s0, %s137
      $region20: #{bidecoder_forward.34} parent=15 // pred_fallthru
        _
      // Predicated region
      $region21: #{bidecoder_forward.34} parent=15 // pred_check
        %p139 = pneg %p55
      $region22: #{bidecoder_forward.34} parent=15 // pred_check_branch
        %141 = sbr.rel (%p139) target = $region24
      $region23: #{bidecoder_forward.34} parent=15 // pred_region
        %p142 = scmp.lt.s32.totalorder %s9, 1
        %s143 = scalar_select %p142, %s9, 1
        %s144 = smul.addr %s143, 2
        %s145 = smul.addr %s144, 4
        %s146 = scalar_lea.vmem %s1, %s145
      $region24: #{bidecoder_forward.34} parent=15 // pred_fallthru
        _
      // Predicated region
      $region25: #{bidecoder_forward.34} parent=15 // pred_check
        %p147 = pneg %p81
      $region26: #{bidecoder_forward.34} parent=15 // pred_check_branch
        %149 = sbr.rel (%p147) target = $region28
      $region27: #{bidecoder_forward.34} parent=15 // pred_region
        %p150 = scmp.lt.s32.totalorder %s9, 1
        %s151 = scalar_select %p150, %s9, 1
        %s152 = scalar_lea.vmem %s2, %s151
      $region28: #{bidecoder_forward.34} parent=15 // pred_fallthru
        _
    $region16: #{bidecoder_forward.34} parent=5 // pred_fallthru
      _
    %p153 = scmp.le.s32.totalorder 1, %s9
    %p154 = scmp.lt.s32.totalorder %s9, 3
    %p155 = pnand %p153, %p154
    %p156 = pneg %p155
    // Predicated region
    $region29: #{bidecoder_forward.34} parent=5 // pred_check
      _
    $region30: #{bidecoder_forward.34} parent=5 // pred_check_branch
      %158 = sbr.rel (%p155) target = $region32
    $region31: #{bidecoder_forward.34} parent=5 // pred_region
      %s159 = ssub.s32 %s9, 1
      %p160 = scmp.lt.s32.totalorder %s14, 1
      %s161 = scalar_select %p160, %s14, 1
      %s162 = smul.addr %s161, 4
      %s163 = scalar_lea.vmem %s0, %s162
      %p164 = pneg %p35
      %p165 = pneg %p32
      %p166 = scmp.lt.s32.totalorder %s14, 1
      %s167 = scalar_select %p166, %s14, 1
      %s168 = smul.addr %s167, 2
      %s169 = smul.addr %s168, 4
      %s170 = scalar_lea.vmem %s1, %s169
      %p171 = pneg %p61
      %p172 = pneg %p58
      %p173 = scmp.lt.s32.totalorder %s14, 1
      %s174 = scalar_select %p173, %s14, 1
      %s175 = scalar_lea.vmem %s2, %s174
      %p176 = pneg %p87
      %p177 = pneg %p84
      %p178 = pneg %p113
      %p179 = pneg %p110
      %p180 = scmp.lt.s32.totalorder %s14, 1
      %s181 = scalar_select %p180, %s14, 1
      %s182 = smul.addr %s181, 4
      %s183 = scalar_lea.vmem %s3, %s182
      %p184 = scmp.lt.s32.totalorder %s14, 1
      %s185 = scalar_select %p184, %s14, 1
      %s186 = smul.addr %s185, 4
      %s187 = scalar_lea.vmem %s0, %s186
      %p188 = scmp.lt.s32.totalorder %s14, 1
      %s189 = scalar_select %p188, %s14, 1
      %s190 = smul.addr %s189, 2
      %s191 = smul.addr %s190, 4
      %s192 = scalar_lea.vmem %s1, %s191
      %p193 = scmp.lt.s32.totalorder %s14, 1
      %s194 = scalar_select %p193, %s14, 1
      %s195 = scalar_lea.vmem %s2, %s194
      %p196 = scmp.lt.s32.totalorder %s14, 1
      %s197 = scalar_select %p196, %s14, 1
      %s198 = smul.addr %s197, 4
      %s199 = scalar_lea.vmem %s3, %s198
      %v201 = vld [vmem:[%s187] sm:$0xf]
      %v202 = vld [vmem:[%s192] sm:$0xf]
      %v203 = vld [vmem:[%s192 + $0x4] sm:$0xf]
      %v204 = vld [vmem:[%s195] sm:$0x1]
      %vm205 = vcmp.gt.s32.totalorder %v204, 0
      %v206 = vsel %vm205, 0.0, -1e+30
      %v207 = vsel %vm205, 1, 0
      %v208 = vcvt.s32.f32 %v207
      %vm209 = vcmask 122880
      %v210 = vsel %vm209, %v208, 0.0
      %211 = vadd.xlane.f32.xlu0 %v210
      %v212 = vpop.xlane.xlu0 %211
      %vm213 = vcmp.gt.f32.partialorder %v212, 0.0
      %v214 = vsel %vm213, 1.0, 0.0
      %v216 = vlaneseq
      %v217 = vshrl.u32 %v216, 7
      %v218 = vsub.s32 0, %v217
      %v219 = vrot.slane %v206, %v218
      %v223 = vunpack.c.l.b16 %v202
      %v224 = vunpack.c.l.b16 %v203
      %v225 = vpack.c.b16 %v224, %v223
      %vm226 = vcmask 64512
      %v228 = vsel %vm226, %v201, 0
      %v231 = vsel %vm226, %v225, 0
      %233 = vmatprep.subr.bf16.mxu0 0
      %234 = vmatpush1.bf16.xpose.msra.mxu0 0
      %235 = vmatprep.subr.bf16.mxu0 0
      %236 = vmatpush1.bf16.xpose.msra.mxu0 0
      %237 = vmatprep.subr.bf16.mxu0 0
      %238 = vmatpush1.bf16.xpose.msra.mxu0 0
      %239 = vmatprep.subr.bf16.mxu0 0
      %240 = vmatpush1.bf16.xpose.msra.mxu0 0
      %241 = vmatprep.subr.bf16.mxu0 0
      %242 = vmatpush1.bf16.xpose.msra.mxu0 0
      %243 = vmatprep.subr.bf16.mxu0 0
      %244 = vmatpush1.bf16.xpose.msra.mxu0 0
      %245 = vmatprep.subr.bf16.mxu0 0
      %246 = vmatpush1.bf16.xpose.msra.mxu0 0
      %247 = vmatprep.subr.bf16.mxu0 0
      %248 = vmatpush1.bf16.xpose.msra.mxu0 %v231
      %249 = vmatprep.subr.bf16.mxu0 0
      %250 = vmatpush2.bf16.xpose.msra.mxu0 0
      %251 = vmatprep.subr.bf16.mxu0 0
      %252 = vmatpush2.bf16.xpose.msra.mxu0 0
      %253 = vmatprep.subr.bf16.mxu0 0
      %254 = vmatpush2.bf16.xpose.msra.mxu0 0
      %255 = vmatprep.subr.bf16.mxu0 0
      %256 = vmatpush2.bf16.xpose.msra.mxu0 0
      %257 = vmatprep.subr.bf16.mxu0 0
      %258 = vmatpush2.bf16.xpose.msra.mxu0 0
      %259 = vmatprep.subr.bf16.mxu0 0
      %260 = vmatpush2.bf16.xpose.msra.mxu0 0
      %261 = vmatprep.subr.bf16.mxu0 0
      %262 = vmatpush2.bf16.xpose.msra.mxu0 0
      %263 = vmatprep.subr.bf16.mxu0 0
      %264 = vmatpush2.bf16.xpose.msra.mxu0 0
      %265 = vmatprep.mubr.bf16.mxu0 0
      %266 = vmatmul.mubr.bf16.gmra.mxu0 %v228
      %v267 = vpop.f32.mrf.mxu0
      %v268 = vadd.f32 %v219, %v267
      %v269 = vpop.f32.mrf.mxu0
      %v270 = vpop.f32.mrf.mxu0
      %v271 = vpop.f32.mrf.mxu0
      %272 = vdwg.mxu0
      %vm273 = vcmask 130048
      %v274 = vsel %vm273, %v268, -inf
      %275 = vmax.xlane.f32.xlu0 %v274
      %v276 = vpop.xlane.xlu0 %275
      %v277 = vsub.f32 %v268, %v276
      %v278 = vmul.f32 %v277, 1.442695
      %v279 = vpow.pop %v278
      %v280 = vsel %vm273, %v279, 0.0
      %281 = vadd.xlane.f32.xlu0 %v280
      %v282 = vpop.xlane.xlu0 %281
      %v283 = vrcp.pop %v282
      %v284 = vmul.f32 %v279, %v283
      %v285 = vpack.c.bf16 %v284, %v284
      %286 = vrot.lane.b32.xlu0 %v225, 96
      %v287 = vpop.permute.xlu0 %286
      %v290 = vsel %vm273, %v285, 0
      %292 = vmatprep.subr.bf16.mxu0 0
      %293 = vmatpush1.bf16.msra.mxu0 0
      %294 = vmatprep.subr.bf16.mxu0 0
      %295 = vmatpush1.bf16.msra.mxu0 0
      %296 = vmatprep.subr.bf16.mxu0 0
      %297 = vmatpush1.bf16.msra.mxu0 0
      %298 = vmatprep.subr.bf16.mxu0 0
      %299 = vmatpush1.bf16.msra.mxu0 0
      %300 = vmatprep.subr.bf16.mxu0 0
      %301 = vmatpush1.bf16.msra.mxu0 0
      %302 = vmatprep.subr.bf16.mxu0 0
      %303 = vmatpush1.bf16.msra.mxu0 0
      %304 = vmatprep.subr.bf16.mxu0 0
      %305 = vmatpush1.bf16.msra.mxu0 0
      %306 = vmatprep.subr.bf16.mxu0 0
      %307 = vmatpush1.bf16.msra.mxu0 %v287
      %308 = vmatprep.subr.bf16.mxu0 0
      %309 = vmatpush2.bf16.msra.mxu0 0
      %310 = vmatprep.subr.bf16.mxu0 0
      %311 = vmatpush2.bf16.msra.mxu0 0
      %312 = vmatprep.subr.bf16.mxu0 0
      %313 = vmatpush2.bf16.msra.mxu0 0
      %314 = vmatprep.subr.bf16.mxu0 0
      %315 = vmatpush2.bf16.msra.mxu0 0
      %316 = vmatprep.subr.bf16.mxu0 0
      %317 = vmatpush2.bf16.msra.mxu0 0
      %318 = vmatprep.subr.bf16.mxu0 0
      %319 = vmatpush2.bf16.msra.mxu0 0
      %320 = vmatprep.subr.bf16.mxu0 0
      %321 = vmatpush2.bf16.msra.mxu0 0
      %322 = vmatprep.subr.bf16.mxu0 0
      %323 = vmatpush2.bf16.msra.mxu0 0
      %324 = vmatprep.mubr.bf16.mxu0 0
      %325 = vmatmul.mubr.bf16.gmra.mxu0 %v290
      %v326 = vpop.f32.mrf.mxu0
      %v327 = vadd.f32 0.0, %v326
      %v328 = vpop.f32.mrf.mxu0
      %v329 = vpop.f32.mrf.mxu0
      %v330 = vpop.f32.mrf.mxu0
      %331 = vdwg.mxu0
      %v332 = vlaneseq
      %v333 = vshrl.u32 %v332, 7
      %v334 = vsub.s32 0, %v333
      %v335 = vrot.slane %v214, %v334
      %v336 = vmul.f32 %v327, %v335
      %v338 = vunpack.c.l.b16 %v201
      %v339 = vpack.c.b16 %v338, %v338
      %340 = vrot.lane.b32.xlu0 %v339, 120
      %v341 = vpop.permute.xlu0 %340
      %342 = vrot.lane.b32.xlu0 %v225, 120
      %v343 = vpop.permute.xlu0 %342
      %v345 = vsel %vm226, %v341, 0
      %v348 = vsel %vm226, %v343, 0
      %350 = vmatprep.subr.bf16.mxu0 0
      %351 = vmatpush1.bf16.xpose.msra.mxu0 0
      %352 = vmatprep.subr.bf16.mxu0 0
      %353 = vmatpush1.bf16.xpose.msra.mxu0 0
      %354 = vmatprep.subr.bf16.mxu0 0
      %355 = vmatpush1.bf16.xpose.msra.mxu0 0
      %356 = vmatprep.subr.bf16.mxu0 0
      %357 = vmatpush1.bf16.xpose.msra.mxu0 0
      %358 = vmatprep.subr.bf16.mxu0 0
      %359 = vmatpush1.bf16.xpose.msra.mxu0 0
      %360 = vmatprep.subr.bf16.mxu0 0
      %361 = vmatpush1.bf16.xpose.msra.mxu0 0
      %362 = vmatprep.subr.bf16.mxu0 0
      %363 = vmatpush1.bf16.xpose.msra.mxu0 0
      %364 = vmatprep.subr.bf16.mxu0 0
      %365 = vmatpush1.bf16.xpose.msra.mxu0 %v348
      %366 = vmatprep.subr.bf16.mxu0 0
      %367 = vmatpush2.bf16.xpose.msra.mxu0 0
      %368 = vmatprep.subr.bf16.mxu0 0
      %369 = vmatpush2.bf16.xpose.msra.mxu0 0
      %370 = vmatprep.subr.bf16.mxu0 0
      %371 = vmatpush2.bf16.xpose.msra.mxu0 0
      %372 = vmatprep.subr.bf16.mxu0 0
      %373 = vmatpush2.bf16.xpose.msra.mxu0 0
      %374 = vmatprep.subr.bf16.mxu0 0
      %375 = vmatpush2.bf16.xpose.msra.mxu0 0
      %376 = vmatprep.subr.bf16.mxu0 0
      %377 = vmatpush2.bf16.xpose.msra.mxu0 0
      %378 = vmatprep.subr.bf16.mxu0 0
      %379 = vmatpush2.bf16.xpose.msra.mxu0 0
      %380 = vmatprep.subr.bf16.mxu0 0
      %381 = vmatpush2.bf16.xpose.msra.mxu0 0
      %382 = vmatprep.mubr.bf16.mxu0 0
      %383 = vmatmul.mubr.bf16.gmra.mxu0 %v345
      %v384 = vpop.f32.mrf.mxu0
      %v385 = vadd.f32 %v219, %v384
      %v386 = vpop.f32.mrf.mxu0
      %v387 = vpop.f32.mrf.mxu0
      %v388 = vpop.f32.mrf.mxu0
      %389 = vdwg.mxu0
      %v390 = vsel %vm273, %v385, -inf
      %391 = vmax.xlane.f32.xlu0 %v390
      %v392 = vpop.xlane.xlu0 %391
      %v393 = vsub.f32 %v385, %v392
      %v394 = vmul.f32 %v393, 1.442695
      %v395 = vpow.pop %v394
      %v396 = vsel %vm273, %v395, 0.0
      %397 = vadd.xlane.f32.xlu0 %v396
      %v398 = vpop.xlane.xlu0 %397
      %v399 = vrcp.pop %v398
      %v400 = vmul.f32 %v395, %v399
      %v401 = vpack.c.bf16 %v400, %v400
      %402 = vrot.lane.b32.xlu0 %v225, 88
      %v403 = vpop.permute.xlu0 %402
      %v406 = vsel %vm273, %v401, 0
      %408 = vmatprep.subr.bf16.mxu0 0
      %409 = vmatpush1.bf16.msra.mxu0 0
      %410 = vmatprep.subr.bf16.mxu0 0
      %411 = vmatpush1.bf16.msra.mxu0 0
      %412 = vmatprep.subr.bf16.mxu0 0
      %413 = vmatpush1.bf16.msra.mxu0 0
      %414 = vmatprep.subr.bf16.mxu0 0
      %415 = vmatpush1.bf16.msra.mxu0 0
      %416 = vmatprep.subr.bf16.mxu0 0
      %417 = vmatpush1.bf16.msra.mxu0 0
      %418 = vmatprep.subr.bf16.mxu0 0
      %419 = vmatpush1.bf16.msra.mxu0 0
      %420 = vmatprep.subr.bf16.mxu0 0
      %421 = vmatpush1.bf16.msra.mxu0 0
      %422 = vmatprep.subr.bf16.mxu0 0
      %423 = vmatpush1.bf16.msra.mxu0 %v403
      %424 = vmatprep.subr.bf16.mxu0 0
      %425 = vmatpush2.bf16.msra.mxu0 0
      %426 = vmatprep.subr.bf16.mxu0 0
      %427 = vmatpush2.bf16.msra.mxu0 0
      %428 = vmatprep.subr.bf16.mxu0 0
      %429 = vmatpush2.bf16.msra.mxu0 0
      %430 = vmatprep.subr.bf16.mxu0 0
      %431 = vmatpush2.bf16.msra.mxu0 0
      %432 = vmatprep.subr.bf16.mxu0 0
      %433 = vmatpush2.bf16.msra.mxu0 0
      %434 = vmatprep.subr.bf16.mxu0 0
      %435 = vmatpush2.bf16.msra.mxu0 0
      %436 = vmatprep.subr.bf16.mxu0 0
      %437 = vmatpush2.bf16.msra.mxu0 0
      %438 = vmatprep.subr.bf16.mxu0 0
      %439 = vmatpush2.bf16.msra.mxu0 0
      %440 = vmatprep.mubr.bf16.mxu0 0
      %441 = vmatmul.mubr.bf16.gmra.mxu0 %v406
      %v442 = vpop.f32.mrf.mxu0
      %v443 = vadd.f32 0.0, %v442
      %v444 = vpop.f32.mrf.mxu0
      %v445 = vpop.f32.mrf.mxu0
      %v446 = vpop.f32.mrf.mxu0
      %447 = vdwg.mxu0
      %v448 = vmul.f32 %v443, %v335
      %449 = vrot.lane.b32.xlu0 %v339, 112
      %v450 = vpop.permute.xlu0 %449
      %451 = vrot.lane.b32.xlu0 %v225, 112
      %v452 = vpop.permute.xlu0 %451
      %v454 = vsel %vm226, %v450, 0
      %v457 = vsel %vm226, %v452, 0
      %459 = vmatprep.subr.bf16.mxu0 0
      %460 = vmatpush1.bf16.xpose.msra.mxu0 0
      %461 = vmatprep.subr.bf16.mxu0 0
      %462 = vmatpush1.bf16.xpose.msra.mxu0 0
      %463 = vmatprep.subr.bf16.mxu0 0
      %464 = vmatpush1.bf16.xpose.msra.mxu0 0
      %465 = vmatprep.subr.bf16.mxu0 0
      %466 = vmatpush1.bf16.xpose.msra.mxu0 0
      %467 = vmatprep.subr.bf16.mxu0 0
      %468 = vmatpush1.bf16.xpose.msra.mxu0 0
      %469 = vmatprep.subr.bf16.mxu0 0
      %470 = vmatpush1.bf16.xpose.msra.mxu0 0
      %471 = vmatprep.subr.bf16.mxu0 0
      %472 = vmatpush1.bf16.xpose.msra.mxu0 0
      %473 = vmatprep.subr.bf16.mxu0 0
      %474 = vmatpush1.bf16.xpose.msra.mxu0 %v457
      %475 = vmatprep.subr.bf16.mxu0 0
      %476 = vmatpush2.bf16.xpose.msra.mxu0 0
      %477 = vmatprep.subr.bf16.mxu0 0
      %478 = vmatpush2.bf16.xpose.msra.mxu0 0
      %479 = vmatprep.subr.bf16.mxu0 0
      %480 = vmatpush2.bf16.xpose.msra.mxu0 0
      %481 = vmatprep.subr.bf16.mxu0 0
      %482 = vmatpush2.bf16.xpose.msra.mxu0 0
      %483 = vmatprep.subr.bf16.mxu0 0
      %484 = vmatpush2.bf16.xpose.msra.mxu0 0
      %485 = vmatprep.subr.bf16.mxu0 0
      %486 = vmatpush2.bf16.xpose.msra.mxu0 0
      %487 = vmatprep.subr.bf16.mxu0 0
      %488 = vmatpush2.bf16.xpose.msra.mxu0 0
      %489 = vmatprep.subr.bf16.mxu0 0
      %490 = vmatpush2.bf16.xpose.msra.mxu0 0
      %491 = vmatprep.mubr.bf16.mxu0 0
      %492 = vmatmul.mubr.bf16.gmra.mxu0 %v454
      %v493 = vpop.f32.mrf.mxu0
      %v494 = vadd.f32 %v219, %v493
      %v495 = vpop.f32.mrf.mxu0
      %v496 = vpop.f32.mrf.mxu0
      %v497 = vpop.f32.mrf.mxu0
      %498 = vdwg.mxu0
      %v499 = vsel %vm273, %v494, -inf
      %500 = vmax.xlane.f32.xlu0 %v499
      %v501 = vpop.xlane.xlu0 %500
      %v502 = vsub.f32 %v494, %v501
      %v503 = vmul.f32 %v502, 1.442695
      %v504 = vpow.pop %v503
      %v505 = vsel %vm273, %v504, 0.0
      %506 = vadd.xlane.f32.xlu0 %v505
      %v507 = vpop.xlane.xlu0 %506
      %v508 = vrcp.pop %v507
      %v509 = vmul.f32 %v504, %v508
      %v510 = vpack.c.bf16 %v509, %v509
      %511 = vrot.lane.b32.xlu0 %v225, 80
      %v512 = vpop.permute.xlu0 %511
      %v515 = vsel %vm273, %v510, 0
      %517 = vmatprep.subr.bf16.mxu0 0
      %518 = vmatpush1.bf16.msra.mxu0 0
      %519 = vmatprep.subr.bf16.mxu0 0
      %520 = vmatpush1.bf16.msra.mxu0 0
      %521 = vmatprep.subr.bf16.mxu0 0
      %522 = vmatpush1.bf16.msra.mxu0 0
      %523 = vmatprep.subr.bf16.mxu0 0
      %524 = vmatpush1.bf16.msra.mxu0 0
      %525 = vmatprep.subr.bf16.mxu0 0
      %526 = vmatpush1.bf16.msra.mxu0 0
      %527 = vmatprep.subr.bf16.mxu0 0
      %528 = vmatpush1.bf16.msra.mxu0 0
      %529 = vmatprep.subr.bf16.mxu0 0
      %530 = vmatpush1.bf16.msra.mxu0 0
      %531 = vmatprep.subr.bf16.mxu0 0
      %532 = vmatpush1.bf16.msra.mxu0 %v512
      %533 = vmatprep.subr.bf16.mxu0 0
      %534 = vmatpush2.bf16.msra.mxu0 0
      %535 = vmatprep.subr.bf16.mxu0 0
      %536 = vmatpush2.bf16.msra.mxu0 0
      %537 = vmatprep.subr.bf16.mxu0 0
      %538 = vmatpush2.bf16.msra.mxu0 0
      %539 = vmatprep.subr.bf16.mxu0 0
      %540 = vmatpush2.bf16.msra.mxu0 0
      %541 = vmatprep.subr.bf16.mxu0 0
      %542 = vmatpush2.bf16.msra.mxu0 0
      %543 = vmatprep.subr.bf16.mxu0 0
      %544 = vmatpush2.bf16.msra.mxu0 0
      %545 = vmatprep.subr.bf16.mxu0 0
      %546 = vmatpush2.bf16.msra.mxu0 0
      %547 = vmatprep.subr.bf16.mxu0 0
      %548 = vmatpush2.bf16.msra.mxu0 0
      %549 = vmatprep.mubr.bf16.mxu0 0
      %550 = vmatmul.mubr.bf16.gmra.mxu0 %v515
      %v551 = vpop.f32.mrf.mxu0
      %v552 = vadd.f32 0.0, %v551
      %v553 = vpop.f32.mrf.mxu0
      %v554 = vpop.f32.mrf.mxu0
      %v555 = vpop.f32.mrf.mxu0
      %556 = vdwg.mxu0
      %v557 = vmul.f32 %v552, %v335
      %558 = vrot.lane.b32.xlu0 %v339, 104
      %v559 = vpop.permute.xlu0 %558
      %560 = vrot.lane.b32.xlu0 %v225, 104
      %v561 = vpop.permute.xlu0 %560
      %v563 = vsel %vm226, %v559, 0
      %v566 = vsel %vm226, %v561, 0
      %568 = vmatprep.subr.bf16.mxu0 0
      %569 = vmatpush1.bf16.xpose.msra.mxu0 0
      %570 = vmatprep.subr.bf16.mxu0 0
      %571 = vmatpush1.bf16.xpose.msra.mxu0 0
      %572 = vmatprep.subr.bf16.mxu0 0
      %573 = vmatpush1.bf16.xpose.msra.mxu0 0
      %574 = vmatprep.subr.bf16.mxu0 0
      %575 = vmatpush1.bf16.xpose.msra.mxu0 0
      %576 = vmatprep.subr.bf16.mxu0 0
      %577 = vmatpush1.bf16.xpose.msra.mxu0 0
      %578 = vmatprep.subr.bf16.mxu0 0
      %579 = vmatpush1.bf16.xpose.msra.mxu0 0
      %580 = vmatprep.subr.bf16.mxu0 0
      %581 = vmatpush1.bf16.xpose.msra.mxu0 0
      %582 = vmatprep.subr.bf16.mxu0 0
      %583 = vmatpush1.bf16.xpose.msra.mxu0 %v566
      %584 = vmatprep.subr.bf16.mxu0 0
      %585 = vmatpush2.bf16.xpose.msra.mxu0 0
      %586 = vmatprep.subr.bf16.mxu0 0
      %587 = vmatpush2.bf16.xpose.msra.mxu0 0
      %588 = vmatprep.subr.bf16.mxu0 0
      %589 = vmatpush2.bf16.xpose.msra.mxu0 0
      %590 = vmatprep.subr.bf16.mxu0 0
      %591 = vmatpush2.bf16.xpose.msra.mxu0 0
      %592 = vmatprep.subr.bf16.mxu0 0
      %593 = vmatpush2.bf16.xpose.msra.mxu0 0
      %594 = vmatprep.subr.bf16.mxu0 0
      %595 = vmatpush2.bf16.xpose.msra.mxu0 0
      %596 = vmatprep.subr.bf16.mxu0 0
      %597 = vmatpush2.bf16.xpose.msra.mxu0 0
      %598 = vmatprep.subr.bf16.mxu0 0
      %599 = vmatpush2.bf16.xpose.msra.mxu0 0
      %600 = vmatprep.mubr.bf16.mxu0 0
      %601 = vmatmul.mubr.bf16.gmra.mxu0 %v563
      %v602 = vpop.f32.mrf.mxu0
      %v603 = vadd.f32 %v219, %v602
      %v604 = vpop.f32.mrf.mxu0
      %v605 = vpop.f32.mrf.mxu0
      %v606 = vpop.f32.mrf.mxu0
      %607 = vdwg.mxu0
      %v608 = vsel %vm273, %v603, -inf
      %609 = vmax.xlane.f32.xlu0 %v608
      %v610 = vpop.xlane.xlu0 %609
      %v611 = vsub.f32 %v603, %v610
      %v612 = vmul.f32 %v611, 1.442695
      %v613 = vpow.pop %v612
      %v614 = vsel %vm273, %v613, 0.0
      %615 = vadd.xlane.f32.xlu0 %v614
      %v616 = vpop.xlane.xlu0 %615
      %v617 = vrcp.pop %v616
      %v618 = vmul.f32 %v613, %v617
      %v619 = vpack.c.bf16 %v618, %v618
      %620 = vrot.lane.b32.xlu0 %v225, 72
      %v621 = vpop.permute.xlu0 %620
      %v624 = vsel %vm273, %v619, 0
      %626 = vmatprep.subr.bf16.mxu0 0
      %627 = vmatpush1.bf16.msra.mxu0 0
      %628 = vmatprep.subr.bf16.mxu0 0
      %629 = vmatpush1.bf16.msra.mxu0 0
      %630 = vmatprep.subr.bf16.mxu0 0
      %631 = vmatpush1.bf16.msra.mxu0 0
      %632 = vmatprep.subr.bf16.mxu0 0
      %633 = vmatpush1.bf16.msra.mxu0 0
      %634 = vmatprep.subr.bf16.mxu0 0
      %635 = vmatpush1.bf16.msra.mxu0 0
      %636 = vmatprep.subr.bf16.mxu0 0
      %637 = vmatpush1.bf16.msra.mxu0 0
      %638 = vmatprep.subr.bf16.mxu0 0
      %639 = vmatpush1.bf16.msra.mxu0 0
      %640 = vmatprep.subr.bf16.mxu0 0
      %641 = vmatpush1.bf16.msra.mxu0 %v621
      %642 = vmatprep.subr.bf16.mxu0 0
      %643 = vmatpush2.bf16.msra.mxu0 0
      %644 = vmatprep.subr.bf16.mxu0 0
      %645 = vmatpush2.bf16.msra.mxu0 0
      %646 = vmatprep.subr.bf16.mxu0 0
      %647 = vmatpush2.bf16.msra.mxu0 0
      %648 = vmatprep.subr.bf16.mxu0 0
      %649 = vmatpush2.bf16.msra.mxu0 0
      %650 = vmatprep.subr.bf16.mxu0 0
      %651 = vmatpush2.bf16.msra.mxu0 0
      %652 = vmatprep.subr.bf16.mxu0 0
      %653 = vmatpush2.bf16.msra.mxu0 0
      %654 = vmatprep.subr.bf16.mxu0 0
      %655 = vmatpush2.bf16.msra.mxu0 0
      %656 = vmatprep.subr.bf16.mxu0 0
      %657 = vmatpush2.bf16.msra.mxu0 0
      %658 = vmatprep.mubr.bf16.mxu0 0
      %659 = vmatmul.mubr.bf16.gmra.mxu0 %v624
      %v660 = vpop.f32.mrf.mxu0
      %v661 = vadd.f32 0.0, %v660
      %v662 = vpop.f32.mrf.mxu0
      %v663 = vpop.f32.mrf.mxu0
      %v664 = vpop.f32.mrf.mxu0
      %665 = vdwg.mxu0
      %v666 = vmul.f32 %v661, %v335
      %668 = vrot.lane.b32.xlu0 %v448, 8
      %v669 = vpop.permute.xlu0 %668
      %672 = vrot.lane.b32.xlu0 %v557, 16
      %v673 = vpop.permute.xlu0 %672
      %676 = vrot.lane.b32.xlu0 %v666, 24
      %v677 = vpop.permute.xlu0 %676
      %v679 = vsel %vm226, %v336, %v669
      %v680 = vsel %vm273, %v679, %v673
      %vm681 = vcmask 195584
      %v682 = vsel %vm681, %v680, %v677
      %v683 = vpack.c.bf16 %v682, %v682
      %vm684 = vcmask 257024
      %685 = vst.msk [vmem:[%s199] sm:$0xf] %vm684, %v683
      %p686 = scmp.lt.s32.totalorder %s14, 1
      %s687 = scalar_select %p686, %s14, 1
      %s688 = smul.addr %s687, 4
      %s689 = scalar_lea.vmem %s3, %s688
      // Predicated region
      $region33: #{bidecoder_forward.34} parent=31 // pred_check
        %p690 = pneg %p110
      $region34: #{bidecoder_forward.34} parent=31 // pred_check_branch
        %692 = sbr.rel (%p690) target = $region36
      $region35: #{bidecoder_forward.34} parent=31 // pred_region
        _
      $region36: #{bidecoder_forward.34} parent=31 // pred_fallthru
        _
    $region32: #{bidecoder_forward.34} parent=5 // pred_fallthru
      _
    %p693 = scmp.le.s32.totalorder 2, %s9
    // Predicated region
    $region37: #{bidecoder_forward.34} parent=5 // pred_check
      %p694 = pneg %p693
    $region38: #{bidecoder_forward.34} parent=5 // pred_check_branch
      %696 = sbr.rel (%p694) target = $region40
    $region39: #{bidecoder_forward.34} parent=5 // pred_region
      %s697 = ssub.s32 %s9, 2
      // Predicated region
      $region41: #{bidecoder_forward.34} parent=39 // pred_check
        %p698 = pneg %p116
      $region42: #{bidecoder_forward.34} parent=39 // pred_check_branch
        %700 = sbr.rel (%p698) target = $region44
      $region43: #{bidecoder_forward.34} parent=39 // pred_region
        %p701 = scmp.lt.s32.totalorder %s15, 1
        %s702 = scalar_select %p701, %s15, 1
        %s703 = smul.addr %s702, 4
        %s704 = scalar_lea.vmem %s3, %s703
      $region44: #{bidecoder_forward.34} parent=39 // pred_fallthru
        _
    $region40: #{bidecoder_forward.34} parent=5 // pred_fallthru
      _
  $region6: #{bidecoder_forward.34} parent=0 // loop_footer
    %s13 = sadd.s32 1, %s9
  $region7: #{bidecoder_forward.34} parent=0 // loop_footer_branch
    %8 = sbr.rel target = $region3
  $region8: #{bidecoder_forward.34} parent=0 // loop_exit
    _

// kernel: bidecoder_forward.37
$region0: #{bidecoder_forward.37}
  #allocation0 [shape = 'u32[]', space=smem, size = 0x4, offset = 0x4, fixed_abs, tag = 'smem constant byte address 0x4 - core index']
  #allocation1 [shape = 'u32[144,128]{1,0:T(1,128)}', space=vmem, size = 0x12000, scoped, tag = 'internal scratch']
  %s0 = inlined_call_operand.vmem [shape: bf16[16,64], index: 0, kind: input, shape index: {}]
  %s1 = inlined_call_operand.vmem [shape: bf16[64,32], index: 1, kind: input, shape index: {}]
  %s2 = inlined_call_operand.vmem [shape: f32[1,32], index: 2, kind: input, shape index: {}]
  %s3 = inlined_call_operand.vmem [shape: f32[16,32], index: 3, kind: input, shape index: {}]
  %s4 = inlined_call_operand.vmem [shape: f32[16,32], index: 4, kind: output, shape index: {}]
  %s5 = sld [smem:[#allocation0]]
  $region26: #{bidecoder_forward.37} parent=0
    _
  %s7 = ssub.s32 1, %s5
  %s8 = scalar_select 0, %s7, %s5
  // Predicated region
  $region2: #{bidecoder_forward.37} parent=0 // pred_check
    _
  $region3: #{bidecoder_forward.37} parent=0 // pred_check_branch
    %10 = sbr.rel (0) target = $region5
  $region4: #{bidecoder_forward.37} parent=0 // pred_region
    _
  $region5: #{bidecoder_forward.37} parent=0 // pred_fallthru
    _
  // Predicated region
  $region6: #{bidecoder_forward.37} parent=0 // pred_check
    _
  $region7: #{bidecoder_forward.37} parent=0 // pred_check_branch
    %12 = sbr.rel (0) target = $region9
  $region8: #{bidecoder_forward.37} parent=0 // pred_region
    _
  $region9: #{bidecoder_forward.37} parent=0 // pred_fallthru
    _
  // Predicated region
  $region10: #{bidecoder_forward.37} parent=0 // pred_check
    _
  $region11: #{bidecoder_forward.37} parent=0 // pred_check_branch
    %14 = sbr.rel (0) target = $region13
  $region12: #{bidecoder_forward.37} parent=0 // pred_region
    _
  $region13: #{bidecoder_forward.37} parent=0 // pred_fallthru
    _
  // Predicated region
  $region14: #{bidecoder_forward.37} parent=0 // pred_check
    _
  $region15: #{bidecoder_forward.37} parent=0 // pred_check_branch
    %16 = sbr.rel (0) target = $region17
  $region16: #{bidecoder_forward.37} parent=0 // pred_region
    _
  $region17: #{bidecoder_forward.37} parent=0 // pred_fallthru
    _
  %v18 = vld [vmem:[%s0] sm:$0xf]
  %v19 = vld [vmem:[%s0 + $0x4] sm:$0xf]
  %v20 = vld [vmem:[%s1] sm:$0xf]
  %v21 = vld [vmem:[%s1 + $0x4] sm:$0xf]
  %v22 = vld [vmem:[%s1 + $0x8] sm:$0xf]
  %v23 = vld [vmem:[%s1 + $0xc] sm:$0xf]
  %v24 = vld [vmem:[%s1 + $0x10] sm:$0xf]
  %v25 = vld [vmem:[%s1 + $0x14] sm:$0xf]
  %v26 = vld [vmem:[%s1 + $0x18] sm:$0xf]
  %v27 = vld [vmem:[%s1 + $0x1c] sm:$0xf]
  %v28 = vld [vmem:[%s2] sm:$0x1]
  %v30 = vlaneseq
  %v31 = vshrl.u32 %v30, 7
  %v32 = vsub.s32 0, %v31
  %v33 = vrot.slane %v28, %v32
  %v37 = vunpack.c.l.b16 %v18
  %v38 = vunpack.c.l.b16 %v19
  %v39 = vpack.c.b16 %v38, %v37
  %v48 = vunpack.c.l.b16 %v20
  %v49 = vunpack.c.l.b16 %v21
  %v50 = vunpack.c.l.b16 %v22
  %v51 = vunpack.c.l.b16 %v23
  %v52 = vunpack.c.l.b16 %v24
  %v53 = vunpack.c.l.b16 %v25
  %v54 = vunpack.c.l.b16 %v26
  %v55 = vunpack.c.l.b16 %v27
  %v56 = vpack.c.b16 %v49, %v48
  %v57 = vpack.c.b16 %v51, %v50
  %v58 = vpack.c.b16 %v53, %v52
  %v59 = vpack.c.b16 %v55, %v54
  %vm64 = vcmask 523264
  %v66 = vsel %vm64, %v39, 0
  %68 = vmatprep.subr.bf16.mxu0 0
  %69 = vmatpush1.bf16.msra.mxu0 0
  %70 = vmatprep.subr.bf16.mxu0 0
  %71 = vmatpush1.bf16.msra.mxu0 0
  %72 = vmatprep.subr.bf16.mxu0 0
  %73 = vmatpush1.bf16.msra.mxu0 0
  %74 = vmatprep.subr.bf16.mxu0 0
  %75 = vmatpush1.bf16.msra.mxu0 0
  %76 = vmatprep.subr.bf16.mxu0 0
  %77 = vmatpush1.bf16.msra.mxu0 %v59
  %78 = vmatprep.subr.bf16.mxu0 0
  %79 = vmatpush1.bf16.msra.mxu0 %v58
  %80 = vmatprep.subr.bf16.mxu0 0
  %81 = vmatpush1.bf16.msra.mxu0 %v57
  %82 = vmatprep.subr.bf16.mxu0 0
  %83 = vmatpush1.bf16.msra.mxu0 %v56
  %84 = vmatprep.subr.bf16.mxu0 0
  %85 = vmatpush2.bf16.msra.mxu0 0
  %86 = vmatprep.subr.bf16.mxu0 0
  %87 = vmatpush2.bf16.msra.mxu0 0
  %88 = vmatprep.subr.bf16.mxu0 0
  %89 = vmatpush2.bf16.msra.mxu0 0
  %90 = vmatprep.subr.bf16.mxu0 0
  %91 = vmatpush2.bf16.msra.mxu0 0
  %92 = vmatprep.subr.bf16.mxu0 0
  %93 = vmatpush2.bf16.msra.mxu0 0
  %94 = vmatprep.subr.bf16.mxu0 0
  %95 = vmatpush2.bf16.msra.mxu0 0
  %96 = vmatprep.subr.bf16.mxu0 0
  %97 = vmatpush2.bf16.msra.mxu0 0
  %98 = vmatprep.subr.bf16.mxu0 0
  %99 = vmatpush2.bf16.msra.mxu0 0
  %100 = vmatprep.mubr.bf16.mxu0 0
  %101 = vmatmul.mubr.bf16.gmra.mxu0 %v66
  %v102 = vpop.f32.mrf.mxu0
  %v103 = vadd.f32 %v33, %v102
  %v104 = vpop.f32.mrf.mxu0
  %v105 = vpop.f32.mrf.mxu0
  %v106 = vadd.f32 %v33, %v105
  %v107 = vpop.f32.mrf.mxu0
  %108 = vdwg.mxu0
  %v109 = vld [vmem:[%s3] sm:$0xff]
  %v110 = vld [vmem:[%s3 + $0x8] sm:$0xff]
  %v111 = vadd.f32 %v103, %v109
  %v112 = vadd.f32 %v106, %v110
  %vm113 = vcmask 261120
  %114 = vst.msk [vmem:[%s4] sm:$0xff] %vm113, %v111
  %115 = vst.msk [vmem:[%s4 + $0x8] sm:$0xff] %vm113, %v112
  // Predicated region
  $region18: #{bidecoder_forward.37} parent=0 // pred_check
    _
  $region19: #{bidecoder_forward.37} parent=0 // pred_check_branch
    %117 = sbr.rel (0) target = $region21
  $region20: #{bidecoder_forward.37} parent=0 // pred_region
    _
  $region21: #{bidecoder_forward.37} parent=0 // pred_fallthru
    _
  // Predicated region
  $region22: #{bidecoder_forward.37} parent=0 // pred_check
    _
  $region23: #{bidecoder_forward.37} parent=0 // pred_check_branch
    %119 = sbr.rel (0) target = $region25
  $region24: #{bidecoder_forward.37} parent=0 // pred_region
    _
  $region25: #{bidecoder_forward.37} parent=0 // pred_fallthru
    _

// kernel: bidecoder_forward.36
$region0: #{bidecoder_forward.36}
  #allocation0 [shape = 'u32[]', space=smem, size = 0x4, offset = 0x4, fixed_abs, tag = 'smem constant byte address 0x4 - core index']
  #allocation1 [shape = 'u32[144,128]{1,0:T(1,128)}', space=vmem, size = 0x12000, scoped, tag = 'internal scratch']
  %s0 = inlined_call_operand.vmem [shape: f32[16,32], index: 0, kind: input, shape index: {}]
  %s1 = inlined_call_operand.vmem [shape: bf16[32,64], index: 1, kind: input, shape index: {}]
  %s2 = inlined_call_operand.vmem [shape: f32[1,64], index: 2, kind: input, shape index: {}]
  %s3 = inlined_call_operand.vmem [shape: f32[1,32], index: 3, kind: input, shape index: {}]
  %s4 = inlined_call_operand.vmem [shape: f32[1,32], index: 4, kind: input, shape index: {}]
  %s5 = inlined_call_operand.vmem [shape: bf16[16,64], index: 5, kind: output, shape index: {}]
  %s6 = sld [smem:[#allocation0]]
  $region30: #{bidecoder_forward.36} parent=0
    _
  %s8 = ssub.s32 1, %s6
  %s9 = scalar_select 0, %s8, %s6
  // Predicated region
  $region2: #{bidecoder_forward.36} parent=0 // pred_check
    _
  $region3: #{bidecoder_forward.36} parent=0 // pred_check_branch
    %11 = sbr.rel (0) target = $region5
  $region4: #{bidecoder_forward.36} parent=0 // pred_region
    _
  $region5: #{bidecoder_forward.36} parent=0 // pred_fallthru
    _
  // Predicated region
  $region6: #{bidecoder_forward.36} parent=0 // pred_check
    _
  $region7: #{bidecoder_forward.36} parent=0 // pred_check_branch
    %13 = sbr.rel (0) target = $region9
  $region8: #{bidecoder_forward.36} parent=0 // pred_region
    _
  $region9: #{bidecoder_forward.36} parent=0 // pred_fallthru
    _
  // Predicated region
  $region10: #{bidecoder_forward.36} parent=0 // pred_check
    _
  $region11: #{bidecoder_forward.36} parent=0 // pred_check_branch
    %15 = sbr.rel (0) target = $region13
  $region12: #{bidecoder_forward.36} parent=0 // pred_region
    _
  $region13: #{bidecoder_forward.36} parent=0 // pred_fallthru
    _
  // Predicated region
  $region14: #{bidecoder_forward.36} parent=0 // pred_check
    _
  $region15: #{bidecoder_forward.36} parent=0 // pred_check_branch
    %17 = sbr.rel (0) target = $region17
  $region16: #{bidecoder_forward.36} parent=0 // pred_region
    _
  $region17: #{bidecoder_forward.36} parent=0 // pred_fallthru
    _
  // Predicated region
  $region18: #{bidecoder_forward.36} parent=0 // pred_check
    _
  $region19: #{bidecoder_forward.36} parent=0 // pred_check_branch
    %19 = sbr.rel (0) target = $region21
  $region20: #{bidecoder_forward.36} parent=0 // pred_region
    _
  $region21: #{bidecoder_forward.36} parent=0 // pred_fallthru
    _
  %v21 = vld [vmem:[%s0] sm:$0xff]
  %v22 = vld [vmem:[%s0 + $0x8] sm:$0xff]
  %vm23 = vcmask 261120
  %v24 = vsel %vm23, %v21, 0.0
  %25 = vadd.xlane.f32.xlu0 %v24
  %v26 = vpop.xlane.xlu0 %25
  %v27 = vsel %vm23, %v22, 0.0
  %28 = vadd.xlane.f32.xlu0 %v27
  %v29 = vpop.xlane.xlu0 %28
  %v30 = vrcp.pop 32.0
  %v31 = vmul.f32 %v26, %v30
  %v32 = vmul.f32 %v29, %v30
  %v33 = vsub.f32 %v21, %v31
  %v34 = vsub.f32 %v22, %v32
  %v35 = vmul.f32 %v33, %v33
  %v36 = vmul.f32 %v34, %v34
  %v37 = vsel %vm23, %v35, 0.0
  %38 = vadd.xlane.f32.xlu0 %v37
  %v39 = vpop.xlane.xlu0 %38
  %v40 = vsel %vm23, %v36, 0.0
  %41 = vadd.xlane.f32.xlu0 %v40
  %v42 = vpop.xlane.xlu0 %41
  %v43 = vmul.f32 %v39, %v30
  %v44 = vmul.f32 %v42, %v30
  %v45 = vadd.f32 %v43, 1e-05
  %v46 = vadd.f32 %v44, 1e-05
  %v47 = vrsqrt.pop %v45
  %v48 = vrsqrt.pop %v46
  %v49 = vmul.f32 %v33, %v47
  %v50 = vmul.f32 %v34, %v48
  %v51 = vld [vmem:[%s3] sm:$0x1]
  %v53 = vlaneseq
  %v54 = vshrl.u32 %v53, 7
  %v55 = vsub.s32 0, %v54
  %v56 = vrot.slane %v51, %v55
  %v58 = vmul.f32 %v49, %v56
  %v59 = vmul.f32 %v50, %v56
  %v60 = vld [vmem:[%s4] sm:$0x1]
  %v62 = vlaneseq
  %v63 = vshrl.u32 %v62, 7
  %v64 = vsub.s32 0, %v63
  %v65 = vrot.slane %v60, %v64
  %v67 = vadd.f32 %v58, %v65
  %v68 = vadd.f32 %v59, %v65
  %v69 = vpack.c.bf16 %v68, %v67
  %v70 = vld [vmem:[%s1] sm:$0xf]
  %v71 = vld [vmem:[%s1 + $0x4] sm:$0xf]
  %v72 = vld [vmem:[%s1 + $0x8] sm:$0xf]
  %v73 = vld [vmem:[%s1 + $0xc] sm:$0xf]
  %v74 = vld [vmem:[%s2] sm:$0x1]
  %v76 = vlaneseq
  %v77 = vshrl.u32 %v76, 7
  %v78 = vsub.s32 0, %v77
  %v79 = vrot.slane %v74, %v78
  %v85 = vunpack.c.l.b16 %v70
  %v86 = vunpack.c.l.b16 %v71
  %v87 = vunpack.c.l.b16 %v72
  %v88 = vunpack.c.l.b16 %v73
  %v89 = vpack.c.b16 %v86, %v85
  %v90 = vpack.c.b16 %v88, %v87
  %v94 = vsel %vm23, %v69, 0
  %96 = vmatprep.subr.bf16.mxu0 0
  %97 = vmatpush1.bf16.msra.mxu0 0
  %98 = vmatprep.subr.bf16.mxu0 0
  %99 = vmatpush1.bf16.msra.mxu0 0
  %100 = vmatprep.subr.bf16.mxu0 0
  %101 = vmatpush1.bf16.msra.mxu0 0
  %102 = vmatprep.subr.bf16.mxu0 0
  %103 = vmatpush1.bf16.msra.mxu0 0
  %104 = vmatprep.subr.bf16.mxu0 0
  %105 = vmatpush1.bf16.msra.mxu0 0
  %106 = vmatprep.subr.bf16.mxu0 0
  %107 = vmatpush1.bf16.msra.mxu0 0
  %108 = vmatprep.subr.bf16.mxu0 0
  %109 = vmatpush1.bf16.msra.mxu0 %v90
  %110 = vmatprep.subr.bf16.mxu0 0
  %111 = vmatpush1.bf16.msra.mxu0 %v89
  %112 = vmatprep.subr.bf16.mxu0 0
  %113 = vmatpush2.bf16.msra.mxu0 0
  %114 = vmatprep.subr.bf16.mxu0 0
  %115 = vmatpush2.bf16.msra.mxu0 0
  %116 = vmatprep.subr.bf16.mxu0 0
  %117 = vmatpush2.bf16.msra.mxu0 0
  %118 = vmatprep.subr.bf16.mxu0 0
  %119 = vmatpush2.bf16.msra.mxu0 0
  %120 = vmatprep.subr.bf16.mxu0 0
  %121 = vmatpush2.bf16.msra.mxu0 0
  %122 = vmatprep.subr.bf16.mxu0 0
  %123 = vmatpush2.bf16.msra.mxu0 0
  %124 = vmatprep.subr.bf16.mxu0 0
  %125 = vmatpush2.bf16.msra.mxu0 0
  %126 = vmatprep.subr.bf16.mxu0 0
  %127 = vmatpush2.bf16.msra.mxu0 0
  %128 = vmatprep.mubr.bf16.mxu0 0
  %129 = vmatmul.mubr.bf16.gmra.mxu0 %v94
  %v130 = vpop.f32.mrf.mxu0
  %v131 = vadd.f32 %v79, %v130
  %v132 = vpop.f32.mrf.mxu0
  %v133 = vpop.f32.mrf.mxu0
  %v134 = vadd.f32 %v79, %v133
  %v135 = vpop.f32.mrf.mxu0
  %136 = vdwg.mxu0
  %v137 = vmax.f32 %v131, 0.0
  %v138 = vmax.f32 %v134, 0.0
  %v139 = vpack.c.bf16 %v138, %v137
  %v141 = vunpack.c.l.b16 %v139
  %v142 = vunpack.c.h.b16 %v139
  %v143 = vpack.c.b16 %v141, %v141
  %v144 = vpack.c.b16 %v142, %v142
  %vm147 = vcmask 519168
  %148 = vst.msk [vmem:[%s5] sm:$0xf] %vm147, %v143
  %149 = vst.msk [vmem:[%s5 + $0x4] sm:$0xf] %vm147, %v144
  // Predicated region
  $region22: #{bidecoder_forward.36} parent=0 // pred_check
    _
  $region23: #{bidecoder_forward.36} parent=0 // pred_check_branch
    %151 = sbr.rel (0) target = $region25
  $region24: #{bidecoder_forward.36} parent=0 // pred_region
    _
  $region25: #{bidecoder_forward.36} parent=0 // pred_fallthru
    _
  // Predicated region
  $region26: #{bidecoder_forward.36} parent=0 // pred_check
    _
  $region27: #{bidecoder_forward.36} parent=0 // pred_check_branch
    %153 = sbr.rel (0) target = $region29
  $region28: #{bidecoder_forward.36} parent=0 // pred_region
    _
  $region29: #{bidecoder_forward.36} parent=0 // pred_fallthru
    _

// kernel: bidecoder_forward.47
$region0: #{bidecoder_forward.47}
  #allocation0 [shape = 'u32[]', space=smem, size = 0x4, offset = 0x4, fixed_abs, tag = 'smem constant byte address 0x4 - core index']
  #allocation1 [shape = 'u32[144,128]{1,0:T(1,128)}', space=vmem, size = 0x12000, scoped, tag = 'internal scratch']
  %s0 = inlined_call_operand.vmem [shape: f32[16,32], index: 0, kind: input, shape index: {}]
  %s1 = inlined_call_operand.vmem [shape: bf16[32,50], index: 1, kind: input, shape index: {}]
  %s2 = inlined_call_operand.vmem [shape: f32[1,50], index: 2, kind: input, shape index: {}]
  %s3 = inlined_call_operand.vmem [shape: f32[1,32], index: 3, kind: input, shape index: {}]
  %s4 = inlined_call_operand.vmem [shape: f32[1,32], index: 4, kind: input, shape index: {}]
  %s5 = inlined_call_operand.hbm [shape: f32[16,50], index: 5, kind: output, shape index: {}]
  %s6 = sld [smem:[#allocation0]]
  $region30: #{bidecoder_forward.47} parent=0
    _
  %s8 = ssub.s32 1, %s6
  %s9 = scalar_select 0, %s8, %s6
  $region1: #{bidecoder_forward.47} parent=0
    #allocation2 [shape = 'u8[8192]{0}', space=vmem, size = 0x2000, scoped, tag = 'output window, operand 0, single buffered']
    #allocation3 [shape = 's32[1]{0}', space=sflag, size = 0x4, scoped, tag = 'scoped memory for bidecoder_forward.47']
    %10 = vsyncpa [#allocation3], 0
    // Predicated region
    $region2: #{bidecoder_forward.47} parent=1 // pred_check
      _
    $region3: #{bidecoder_forward.47} parent=1 // pred_check_branch
      %12 = sbr.rel (0) target = $region5
    $region4: #{bidecoder_forward.47} parent=1 // pred_region
      _
    $region5: #{bidecoder_forward.47} parent=1 // pred_fallthru
      _
    // Predicated region
    $region6: #{bidecoder_forward.47} parent=1 // pred_check
      _
    $region7: #{bidecoder_forward.47} parent=1 // pred_check_branch
      %14 = sbr.rel (0) target = $region9
    $region8: #{bidecoder_forward.47} parent=1 // pred_region
      _
    $region9: #{bidecoder_forward.47} parent=1 // pred_fallthru
      _
    // Predicated region
    $region10: #{bidecoder_forward.47} parent=1 // pred_check
      _
    $region11: #{bidecoder_forward.47} parent=1 // pred_check_branch
      %16 = sbr.rel (0) target = $region13
    $region12: #{bidecoder_forward.47} parent=1 // pred_region
      _
    $region13: #{bidecoder_forward.47} parent=1 // pred_fallthru
      _
    // Predicated region
    $region14: #{bidecoder_forward.47} parent=1 // pred_check
      _
    $region15: #{bidecoder_forward.47} parent=1 // pred_check_branch
      %18 = sbr.rel (0) target = $region17
    $region16: #{bidecoder_forward.47} parent=1 // pred_region
      _
    $region17: #{bidecoder_forward.47} parent=1 // pred_fallthru
      _
    // Predicated region
    $region18: #{bidecoder_forward.47} parent=1 // pred_check
      _
    $region19: #{bidecoder_forward.47} parent=1 // pred_check_branch
      %20 = sbr.rel (0) target = $region21
    $region20: #{bidecoder_forward.47} parent=1 // pred_region
      _
    $region21: #{bidecoder_forward.47} parent=1 // pred_fallthru
      _
    %v22 = vld [vmem:[%s0] sm:$0xff]
    %v23 = vld [vmem:[%s0 + $0x8] sm:$0xff]
    %vm24 = vcmask 261120
    %v25 = vsel %vm24, %v22, 0.0
    %26 = vadd.xlane.f32.xlu0 %v25
    %v27 = vpop.xlane.xlu0 %26
    %v28 = vsel %vm24, %v23, 0.0
    %29 = vadd.xlane.f32.xlu0 %v28
    %v30 = vpop.xlane.xlu0 %29
    %v31 = vrcp.pop 32.0
    %v32 = vmul.f32 %v27, %v31
    %v33 = vmul.f32 %v30, %v31
    %v34 = vsub.f32 %v22, %v32
    %v35 = vsub.f32 %v23, %v33
    %v36 = vmul.f32 %v34, %v34
    %v37 = vmul.f32 %v35, %v35
    %v38 = vsel %vm24, %v36, 0.0
    %39 = vadd.xlane.f32.xlu0 %v38
    %v40 = vpop.xlane.xlu0 %39
    %v41 = vsel %vm24, %v37, 0.0
    %42 = vadd.xlane.f32.xlu0 %v41
    %v43 = vpop.xlane.xlu0 %42
    %v44 = vmul.f32 %v40, %v31
    %v45 = vmul.f32 %v43, %v31
    %v46 = vadd.f32 %v44, 1e-12
    %v47 = vadd.f32 %v45, 1e-12
    %v48 = vrsqrt.pop %v46
    %v49 = vrsqrt.pop %v47
    %v50 = vmul.f32 %v34, %v48
    %v51 = vmul.f32 %v35, %v49
    %v52 = vld [vmem:[%s3] sm:$0x1]
    %v54 = vlaneseq
    %v55 = vshrl.u32 %v54, 7
    %v56 = vsub.s32 0, %v55
    %v57 = vrot.slane %v52, %v56
    %v59 = vmul.f32 %v50, %v57
    %v60 = vmul.f32 %v51, %v57
    %v61 = vld [vmem:[%s4] sm:$0x1]
    %v63 = vlaneseq
    %v64 = vshrl.u32 %v63, 7
    %v65 = vsub.s32 0, %v64
    %v66 = vrot.slane %v61, %v65
    %v68 = vadd.f32 %v59, %v66
    %v69 = vadd.f32 %v60, %v66
    %v70 = vpack.c.bf16 %v69, %v68
    %v71 = vld [vmem:[%s1] sm:$0xf]
    %v72 = vld [vmem:[%s1 + $0x4] sm:$0xf]
    %v73 = vld [vmem:[%s1 + $0x8] sm:$0xf]
    %v74 = vld [vmem:[%s1 + $0xc] sm:$0xf]
    %v75 = vld [vmem:[%s2] sm:$0x1]
    %v77 = vlaneseq
    %v78 = vshrl.u32 %v77, 7
    %v79 = vsub.s32 0, %v78
    %v80 = vrot.slane %v75, %v79
    %v86 = vunpack.c.l.b16 %v71
    %v87 = vunpack.c.l.b16 %v72
    %v88 = vunpack.c.l.b16 %v73
    %v89 = vunpack.c.l.b16 %v74
    %v90 = vpack.c.b16 %v87, %v86
    %v91 = vpack.c.b16 %v89, %v88
    %v95 = vsel %vm24, %v70, 0
    %97 = vmatprep.subr.bf16.mxu0 0
    %98 = vmatpush1.bf16.msra.mxu0 0
    %99 = vmatprep.subr.bf16.mxu0 0
    %100 = vmatpush1.bf16.msra.mxu0 0
    %101 = vmatprep.subr.bf16.mxu0 0
    %102 = vmatpush1.bf16.msra.mxu0 0
    %103 = vmatprep.subr.bf16.mxu0 0
    %104 = vmatpush1.bf16.msra.mxu0 0
    %105 = vmatprep.subr.bf16.mxu0 0
    %106 = vmatpush1.bf16.msra.mxu0 0
    %107 = vmatprep.subr.bf16.mxu0 0
    %108 = vmatpush1.bf16.msra.mxu0 0
    %109 = vmatprep.subr.bf16.mxu0 0
    %110 = vmatpush1.bf16.msra.mxu0 %v91
    %111 = vmatprep.subr.bf16.mxu0 0
    %112 = vmatpush1.bf16.msra.mxu0 %v90
    %113 = vmatprep.subr.bf16.mxu0 0
    %114 = vmatpush2.bf16.msra.mxu0 0
    %115 = vmatprep.subr.bf16.mxu0 0
    %116 = vmatpush2.bf16.msra.mxu0 0
    %117 = vmatprep.subr.bf16.mxu0 0
    %118 = vmatpush2.bf16.msra.mxu0 0
    %119 = vmatprep.subr.bf16.mxu0 0
    %120 = vmatpush2.bf16.msra.mxu0 0
    %121 = vmatprep.subr.bf16.mxu0 0
    %122 = vmatpush2.bf16.msra.mxu0 0
    %123 = vmatprep.subr.bf16.mxu0 0
    %124 = vmatpush2.bf16.msra.mxu0 0
    %125 = vmatprep.subr.bf16.mxu0 0
    %126 = vmatpush2.bf16.msra.mxu0 0
    %127 = vmatprep.subr.bf16.mxu0 0
    %128 = vmatpush2.bf16.msra.mxu0 0
    %129 = vmatprep.mubr.bf16.mxu0 0
    %130 = vmatmul.mubr.bf16.gmra.mxu0 %v95
    %v131 = vpop.f32.mrf.mxu0
    %v132 = vadd.f32 %v80, %v131
    %v133 = vpop.f32.mrf.mxu0
    %v134 = vpop.f32.mrf.mxu0
    %v135 = vadd.f32 %v80, %v134
    %v136 = vpop.f32.mrf.mxu0
    %137 = vdwg.mxu0
    %vm138 = vcmask 408576
    %139 = vst.msk [vmem:[#allocation2] sm:$0xff] %vm138, %v132
    %140 = vst.msk [vmem:[#allocation2 + $0x8] sm:$0xff] %vm138, %v135
    // Predicated region
    $region22: #{bidecoder_forward.47} parent=1 // pred_check
      _
    $region23: #{bidecoder_forward.47} parent=1 // pred_check_branch
      %142 = sbr.rel (0) target = $region25
    $region24: #{bidecoder_forward.47} parent=1 // pred_region
      %s144 = ssub.s32 256, 256
      %145 = vsyncadd [#allocation3], %s144
      %s146 = sshll.u32 [#allocation2], 4
      %s147 = int_to_ptr.vmem [resolvable:$true] %s146
      %152 = dma.vmem_to_hbm [thread:$0]  %s147, 256, %s5, [#allocation3], 128, 128, 8
    $region25: #{bidecoder_forward.47} parent=1 // pred_fallthru
      _
    // Predicated region
    $region26: #{bidecoder_forward.47} parent=1 // pred_check
      _
    $region27: #{bidecoder_forward.47} parent=1 // pred_check_branch
      %154 = sbr.rel (0) target = $region29
    $region28: #{bidecoder_forward.47} parent=1 // pred_region
      %155 = dma.done [#allocation3], 256
    $region29: #{bidecoder_forward.47} parent=1 // pred_fallthru
      _
    %156 = vsyncpa [#allocation3], 1

</llo_original>
